<compile_context>
chip_gen: v5e
topology: v5e:2x2
jax: 0.10.0
libtpu: 0.0.40
codegen_flags: <defaults>
</compile_context>

<pallas_src>
import functools
import math

import jax
import jax.numpy as jnp
from jax.experimental import pallas as pl
from jax.experimental.pallas import tpu as pltpu


_LN_EPS = 1e-5  # PyTorch nn.LayerNorm default


def _ln_normalize(z):
    """LayerNorm statistics over the last axis (no affine)."""
    mu = jnp.mean(z, axis=-1, keepdims=True)
    var = jnp.mean(jnp.square(z - mu), axis=-1, keepdims=True)
    return (z - mu) * jax.lax.rsqrt(var + _LN_EPS)


def _fused_lstm_kernel(*refs, num_layers, hidden_size, t_blk):
    """One grid step = T_BLK timesteps of the whole num_layers stack.

    refs = (x_ref,
            [w_ih_T, w_hh_T, vec4h, vech] * num_layers,   # inputs
            hy_ref, cy_ref)                               # resident outputs = carries
    vec4h rows: [b_ih, b_hh, ln_ih_g, ln_ih_b, ln_hh_g, ln_hh_b]  (6, 4H)
    vech  rows: [ln_ho_g, ln_ho_b]                                (2, H)
    """
    L, H = num_layers, hidden_size
    x_ref = refs[0]
    p_refs = refs[1:1 + 4 * L]
    hy_ref, cy_ref = refs[1 + 4 * L:]

    tb = pl.program_id(0)

    # Zero initial state (hidden=None in the reference).  Outputs are resident
    # across the whole sequential grid axis, so they double as the carries.
    @pl.when(tb == 0)
    def _init():
        hy_ref[...] = jnp.zeros_like(hy_ref)
        cy_ref[...] = jnp.zeros_like(cy_ref)

    # Hoist all parameters / LN affine slices out of the unrolled time loop.
    wihT = [p_refs[4 * l + 0][...] for l in range(L)]          # (D_l, 4H)
    whhT = [p_refs[4 * l + 1][...] for l in range(L)]          # (H,   4H)
    b_ih = [p_refs[4 * l + 2][0:1, :] for l in range(L)]       # (1, 4H)
    b_hh = [p_refs[4 * l + 2][1:2, :] for l in range(L)]       # (1, 4H)
    g_ih = [p_refs[4 * l + 2][2:3, :] for l in range(L)]       # (1, 4H)
    g_hh = [p_refs[4 * l + 2][4:5, :] for l in range(L)]       # (1, 4H)
    beta = [p_refs[4 * l + 2][3:4, :] + p_refs[4 * l + 2][5:6, :]
            for l in range(L)]                                 # (1, 4H) pre-summed
    g_ho = [p_refs[4 * l + 3][0:1, :] for l in range(L)]       # (1, H)
    b_ho = [p_refs[4 * l + 3][1:2, :] for l in range(L)]       # (1, H)

    def cell(l, xt, h_l, c_l):
        gi = jnp.dot(xt, wihT[l], preferred_element_type=jnp.float32) + b_ih[l]
        gh = jnp.dot(h_l, whhT[l], preferred_element_type=jnp.float32) + b_hh[l]
        gates = _ln_normalize(gi) * g_ih[l] + _ln_normalize(gh) * g_hh[l] + beta[l]
        # One sigmoid over [i|f|o], one tanh over g (2 EUP pushes per step).
        sig = jax.nn.sigmoid(gates[:, :3 * H])
        g = jnp.tanh(gates[:, 3 * H:])
        i = sig[:, 0 * H:1 * H]
        f = sig[:, 1 * H:2 * H]
        o = sig[:, 2 * H:3 * H]
        cy = f * c_l + i * g
        hy = o * jnp.tanh(_ln_normalize(cy) * g_ho[l] + b_ho[l])
        return hy, cy

    def step(tt, carry):
        hs, cs = carry
        inp = x_ref[tt]                     # (B, D_in); static index after unroll
        new_h, new_c = [], []
        for l in range(L):                  # static layer unroll
            hy_l, cy_l = cell(l, inp, hs[l], cs[l])
            new_h.append(hy_l)
            new_c.append(cy_l)
            inp = hy_l
        return tuple(new_h), tuple(new_c)

    hs0 = tuple(hy_ref[l] for l in range(L))
    cs0 = tuple(cy_ref[l] for l in range(L))
    hs_f, cs_f = jax.lax.fori_loop(0, t_blk, step, (hs0, cs0), unroll=True)

    # Persist carries in the resident output refs for the next time block; the
    # HBM writeback happens only once, after the final grid step.
    for l in range(L):
        hy_ref[l] = hs_f[l]
        cy_ref[l] = cs_f[l]


def _pick_time_block(seq_len, max_blk=16):
    """Largest divisor of seq_len not exceeding max_blk (keeps grid exact)."""
    for t in range(min(seq_len, max_blk), 0, -1):
        if seq_len % t == 0:
            return t
    return 1


def layer_norm_lstm_forward(x, layer_params, hidden_size, t_blk=None):
    """Full LayerNormLSTM stack. x: (seq_len, batch, input_size), zero init state."""
    seq_len, B, D_in = x.shape
    L = len(layer_params)
    H = hidden_size
    if t_blk is None:
        t_blk = _pick_time_block(seq_len)
    assert seq_len % t_blk == 0
    n_blocks = seq_len // t_blk

    const2 = lambda t: (0, 0)
    in_specs = [pl.BlockSpec((t_blk, B, D_in), lambda t: (t, 0, 0))]
    flat_params = []
    for l, p in enumerate(layer_params):
        D_l = D_in if l == 0 else H
        flat_params += [p["w_ih_T"], p["w_hh_T"], p["vec4h"], p["vech"]]
        in_specs += [
            pl.BlockSpec((D_l, 4 * H), const2),
            pl.BlockSpec((H, 4 * H), const2),
            pl.BlockSpec((6, 4 * H), const2),
            pl.BlockSpec((2, H), const2),
        ]

    kern = functools.partial(_fused_lstm_kernel,
                             num_layers=L, hidden_size=H, t_blk=t_blk)

    hy, cy = pl.pallas_call(
        kern,
        out_shape=(jax.ShapeDtypeStruct((L, B, H), jnp.float32),
                   jax.ShapeDtypeStruct((L, B, H), jnp.float32)),
        grid_spec=pltpu.PrefetchScalarGridSpec(
            num_scalar_prefetch=0,
            grid=(n_blocks,),
            in_specs=in_specs,
            out_specs=[pl.BlockSpec((L, B, H), lambda t: (0, 0, 0)),
                       pl.BlockSpec((L, B, H), lambda t: (0, 0, 0))],
        ),
        compiler_params=pltpu.CompilerParams(
            dimension_semantics=("arbitrary",),       # sequential recurrence
            vmem_limit_bytes=32 * 1024 * 1024),       # > v5e's 16 MiB scoped default
    )(x, *flat_params)

    # Reference list-aliasing semantics: y[t] == final last-layer hidden, all t.
    y = jnp.broadcast_to(hy[-1], (seq_len, B, H))
    return y, (hy, cy)


def init_layer_params(key, input_size, hidden_size):
    """PyTorch LSTMCell init: U(-1/sqrt(H), 1/sqrt(H)); LayerNorm: gamma=1, beta=0."""
    k = 1.0 / math.sqrt(hidden_size)
    H4 = 4 * hidden_size
    k_wih, k_whh, k_bih, k_bhh = jax.random.split(key, 4)
    w_ih = jax.random.uniform(k_wih, (H4, input_size), jnp.float32, -k, k)
    w_hh = jax.random.uniform(k_whh, (H4, hidden_size), jnp.float32, -k, k)
    b_ih = jax.random.uniform(k_bih, (H4,), jnp.float32, -k, k)
    b_hh = jax.random.uniform(k_bhh, (H4,), jnp.float32, -k, k)
    vec4h = jnp.stack([b_ih, b_hh,
                       jnp.ones((H4,), jnp.float32), jnp.zeros((H4,), jnp.float32),
                       jnp.ones((H4,), jnp.float32), jnp.zeros((H4,), jnp.float32)])
    vech = jnp.stack([jnp.ones((hidden_size,), jnp.float32),
                      jnp.zeros((hidden_size,), jnp.float32)])
    return {"w_ih_T": w_ih.T,          # (D_in, 4H)
            "w_hh_T": w_hh.T,          # (H, 4H)
            "vec4h": vec4h,            # (6, 4H): b_ih,b_hh,g_ih,b_ih_ln,g_hh,b_hh_ln
            "vech": vech}              # (2, H):  g_ho,b_ho


# -------------------- pure-JAX reference (correctness check) --------------------
def _ref_ln(z, g, b):
    mu = jnp.mean(z, axis=-1, keepdims=True)
    var = jnp.mean(jnp.square(z - mu), axis=-1, keepdims=True)
    return (z - mu) * jax.lax.rsqrt(var + _LN_EPS) * g + b


def _ref_cell_step(x, hx, cx, p, H):
    v4, vh = p["vec4h"], p["vech"]
    gi = x @ p["w_ih_T"] + v4[0]
    gh = hx @ p["w_hh_T"] + v4[1]
    gates = _ref_ln(gi, v4[2], v4[3]) + _ref_ln(gh, v4[4], v4[5])
    i = jax.nn.sigmoid(gates[:, :H])
    f = jax.nn.sigmoid(gates[:, H:2 * H])
    o = jax.nn.sigmoid(gates[:, 2 * H:3 * H])
    g = jnp.tanh(gates[:, 3 * H:])
    cy = f * cx + i * g
    hy = o * jnp.tanh(_ref_ln(cy, vh[0], vh[1]))
    return hy, cy


def _ref_forward(x, layer_params, H):
    seq_len, B, _ = x.shape
    h = [jnp.zeros((B, H), jnp.float32) for _ in layer_params]
    c = [jnp.zeros((B, H), jnp.float32) for _ in layer_params]
    for t in range(seq_len):
        xt = x[t]
        for l, p in enumerate(layer_params):
            h[l], c[l] = _ref_cell_step(xt, h[l], c[l], p, H)
            xt = h[l]
    hy = jnp.stack(h)
    cy = jnp.stack(c)
    y = jnp.broadcast_to(h[-1], (seq_len, B, H))
    return y, (hy, cy)


if __name__ == "__main__":
    seq_len, batch, input_size, hidden_size, num_layers = 8, 2, 16, 32, 2

    key = jax.random.PRNGKey(0)
    key_x, *layer_keys = jax.random.split(key, num_layers + 1)

    x = jax.random.normal(key_x, (seq_len, batch, input_size), jnp.float32)
    layer_params = [
        init_layer_params(layer_keys[l],
                          input_size if l == 0 else hidden_size,
                          hidden_size)
        for l in range(num_layers)
    ]

    fwd = jax.jit(functools.partial(layer_norm_lstm_forward,
                                    hidden_size=hidden_size))
    y, (hy, cy) = fwd(x, layer_params)
    jax.block_until_ready((y, hy, cy))

    y_ref, (hy_ref, cy_ref) = _ref_forward(x, layer_params, hidden_size)
    assert jnp.allclose(y, y_ref, atol=1e-5, rtol=1e-5)
    assert jnp.allclose(hy, hy_ref, atol=1e-5, rtol=1e-5)
    assert jnp.allclose(cy, cy_ref, atol=1e-5, rtol=1e-5)

    print("KERNEL_OK")
</pallas_src>

<mosaic_0001>
module attributes {stable_mosaic.version = 11 : i64} {
  func.func @_fused_lstm_kernel(%arg0: i32, %arg1: memref<8x2x16xf32, #tpu.memory_space<vmem>>, %arg2: memref<16x128xf32, #tpu.memory_space<vmem>>, %arg3: memref<32x128xf32, #tpu.memory_space<vmem>>, %arg4: memref<6x128xf32, #tpu.memory_space<vmem>>, %arg5: memref<2x32xf32, #tpu.memory_space<vmem>>, %arg6: memref<32x128xf32, #tpu.memory_space<vmem>>, %arg7: memref<32x128xf32, #tpu.memory_space<vmem>>, %arg8: memref<6x128xf32, #tpu.memory_space<vmem>>, %arg9: memref<2x32xf32, #tpu.memory_space<vmem>>, %arg10: memref<2x2x32xf32, #tpu.memory_space<vmem>>, %arg11: memref<2x2x32xf32, #tpu.memory_space<vmem>>) attributes {dimension_semantics = [#tpu.dimension_semantics<arbitrary>], iteration_bounds = array<i64: 1>, scalar_prefetch = 0 : i64, scratch_operands = 0 : i64, tpu.core_type = #tpu.core_type<tc>, window_params = [{transform_indices = @transform_0, window_bounds = array<i64: 8, 2, 16>}, {pipeline_mode = #tpu.pipeline_mode<synchronous>, transform_indices = @transform_1, window_bounds = array<i64: 16, 128>}, {pipeline_mode = #tpu.pipeline_mode<synchronous>, transform_indices = @transform_2, window_bounds = array<i64: 32, 128>}, {pipeline_mode = #tpu.pipeline_mode<synchronous>, transform_indices = @transform_3, window_bounds = array<i64: 6, 128>}, {pipeline_mode = #tpu.pipeline_mode<synchronous>, transform_indices = @transform_4, window_bounds = array<i64: 2, 32>}, {pipeline_mode = #tpu.pipeline_mode<synchronous>, transform_indices = @transform_5, window_bounds = array<i64: 32, 128>}, {pipeline_mode = #tpu.pipeline_mode<synchronous>, transform_indices = @transform_6, window_bounds = array<i64: 32, 128>}, {pipeline_mode = #tpu.pipeline_mode<synchronous>, transform_indices = @transform_7, window_bounds = array<i64: 6, 128>}, {pipeline_mode = #tpu.pipeline_mode<synchronous>, transform_indices = @transform_8, window_bounds = array<i64: 2, 32>}, {pipeline_mode = #tpu.pipeline_mode<synchronous>, transform_indices = @transform_9, window_bounds = array<i64: 2, 2, 32>}, {pipeline_mode = #tpu.pipeline_mode<synchronous>, transform_indices = @transform_10, window_bounds = array<i64: 2, 2, 32>}]} {
    %c0_i32 = arith.constant 0 : i32
    %0 = arith.cmpi eq, %arg0, %c0_i32 : i32
    %1 = arith.extui %0 : i1 to i32
    %c0_i32_0 = arith.constant 0 : i32
    %2 = arith.cmpi ne, %1, %c0_i32_0 : i32
    scf.if %2 {
      %cst_363 = arith.constant 0.000000e+00 : f32
      %1461 = vector.broadcast %cst_363 : f32 to vector<2x2x32xf32>
      %c0_364 = arith.constant 0 : index
      %c0_365 = arith.constant 0 : index
      %c0_366 = arith.constant 0 : index
      %1462 = vector.load %arg10[%c0_364, %c0_365, %c0_366] : memref<2x2x32xf32, #tpu.memory_space<vmem>>, vector<2x2x32xf32>
      tpu.vector_store %arg10[%c0_364, %c0_365, %c0_366], %1461 {strides = array<i32>} : memref<2x2x32xf32, #tpu.memory_space<vmem>>, vector<2x2x32xf32>,
      %cst_367 = arith.constant 0.000000e+00 : f32
      %1463 = vector.broadcast %cst_367 : f32 to vector<2x2x32xf32>
      %c0_368 = arith.constant 0 : index
      %c0_369 = arith.constant 0 : index
      %c0_370 = arith.constant 0 : index
      %1464 = vector.load %arg11[%c0_368, %c0_369, %c0_370] : memref<2x2x32xf32, #tpu.memory_space<vmem>>, vector<2x2x32xf32>
      tpu.vector_store %arg11[%c0_368, %c0_369, %c0_370], %1463 {strides = array<i32>} : memref<2x2x32xf32, #tpu.memory_space<vmem>>, vector<2x2x32xf32>,
    } else {
    }
    %c0 = arith.constant 0 : index
    %c0_1 = arith.constant 0 : index
    %3 = vector.load %arg2[%c0, %c0_1] : memref<16x128xf32, #tpu.memory_space<vmem>>, vector<16x128xf32>
    %c0_2 = arith.constant 0 : index
    %c0_3 = arith.constant 0 : index
    %4 = vector.load %arg6[%c0_2, %c0_3] : memref<32x128xf32, #tpu.memory_space<vmem>>, vector<32x128xf32>
    %c0_4 = arith.constant 0 : index
    %c0_5 = arith.constant 0 : index
    %5 = vector.load %arg3[%c0_4, %c0_5] : memref<32x128xf32, #tpu.memory_space<vmem>>, vector<32x128xf32>
    %c0_6 = arith.constant 0 : index
    %c0_7 = arith.constant 0 : index
    %6 = vector.load %arg7[%c0_6, %c0_7] : memref<32x128xf32, #tpu.memory_space<vmem>>, vector<32x128xf32>
    %c0_8 = arith.constant 0 : index
    %c0_9 = arith.constant 0 : index
    %7 = vector.load %arg4[%c0_8, %c0_9] : memref<6x128xf32, #tpu.memory_space<vmem>>, vector<1x128xf32>
    %c0_10 = arith.constant 0 : index
    %c0_11 = arith.constant 0 : index
    %8 = vector.load %arg8[%c0_10, %c0_11] : memref<6x128xf32, #tpu.memory_space<vmem>>, vector<1x128xf32>
    %c1 = arith.constant 1 : index
    %c0_12 = arith.constant 0 : index
    %9 = vector.load %arg4[%c1, %c0_12] : memref<6x128xf32, #tpu.memory_space<vmem>>, vector<1x128xf32>
    %c1_13 = arith.constant 1 : index
    %c0_14 = arith.constant 0 : index
    %10 = vector.load %arg8[%c1_13, %c0_14] : memref<6x128xf32, #tpu.memory_space<vmem>>, vector<1x128xf32>
    %c2 = arith.constant 2 : index
    %c0_15 = arith.constant 0 : index
    %11 = vector.load %arg4[%c2, %c0_15] : memref<6x128xf32, #tpu.memory_space<vmem>>, vector<1x128xf32>
    %c2_16 = arith.constant 2 : index
    %c0_17 = arith.constant 0 : index
    %12 = vector.load %arg8[%c2_16, %c0_17] : memref<6x128xf32, #tpu.memory_space<vmem>>, vector<1x128xf32>
    %c4 = arith.constant 4 : index
    %c0_18 = arith.constant 0 : index
    %13 = vector.load %arg4[%c4, %c0_18] : memref<6x128xf32, #tpu.memory_space<vmem>>, vector<1x128xf32>
    %c4_19 = arith.constant 4 : index
    %c0_20 = arith.constant 0 : index
    %14 = vector.load %arg8[%c4_19, %c0_20] : memref<6x128xf32, #tpu.memory_space<vmem>>, vector<1x128xf32>
    %c3 = arith.constant 3 : index
    %c0_21 = arith.constant 0 : index
    %15 = vector.load %arg4[%c3, %c0_21] : memref<6x128xf32, #tpu.memory_space<vmem>>, vector<1x128xf32>
    %c5 = arith.constant 5 : index
    %c0_22 = arith.constant 0 : index
    %16 = vector.load %arg4[%c5, %c0_22] : memref<6x128xf32, #tpu.memory_space<vmem>>, vector<1x128xf32>
    %17 = arith.addf %15, %16 : vector<1x128xf32>
    %c3_23 = arith.constant 3 : index
    %c0_24 = arith.constant 0 : index
    %18 = vector.load %arg8[%c3_23, %c0_24] : memref<6x128xf32, #tpu.memory_space<vmem>>, vector<1x128xf32>
    %c5_25 = arith.constant 5 : index
    %c0_26 = arith.constant 0 : index
    %19 = vector.load %arg8[%c5_25, %c0_26] : memref<6x128xf32, #tpu.memory_space<vmem>>, vector<1x128xf32>
    %20 = arith.addf %18, %19 : vector<1x128xf32>
    %c0_27 = arith.constant 0 : index
    %c0_28 = arith.constant 0 : index
    %21 = vector.load %arg5[%c0_27, %c0_28] : memref<2x32xf32, #tpu.memory_space<vmem>>, vector<1x32xf32>
    %c0_29 = arith.constant 0 : index
    %c0_30 = arith.constant 0 : index
    %22 = vector.load %arg9[%c0_29, %c0_30] : memref<2x32xf32, #tpu.memory_space<vmem>>, vector<1x32xf32>
    %c1_31 = arith.constant 1 : index
    %c0_32 = arith.constant 0 : index
    %23 = vector.load %arg5[%c1_31, %c0_32] : memref<2x32xf32, #tpu.memory_space<vmem>>, vector<1x32xf32>
    %c1_33 = arith.constant 1 : index
    %c0_34 = arith.constant 0 : index
    %24 = vector.load %arg9[%c1_33, %c0_34] : memref<2x32xf32, #tpu.memory_space<vmem>>, vector<1x32xf32>
    %c0_35 = arith.constant 0 : index
    %c0_36 = arith.constant 0 : index
    %c0_37 = arith.constant 0 : index
    %25 = vector.load %arg10[%c0_35, %c0_36, %c0_37] : memref<2x2x32xf32, #tpu.memory_space<vmem>>, vector<1x2x32xf32>
    %26 = vector.shape_cast %25 : vector<1x2x32xf32> to vector<2x32xf32>
    %c1_38 = arith.constant 1 : index
    %c0_39 = arith.constant 0 : index
    %c0_40 = arith.constant 0 : index
    %27 = vector.load %arg10[%c1_38, %c0_39, %c0_40] : memref<2x2x32xf32, #tpu.memory_space<vmem>>, vector<1x2x32xf32>
    %28 = vector.shape_cast %27 : vector<1x2x32xf32> to vector<2x32xf32>
    %c0_41 = arith.constant 0 : index
    %c0_42 = arith.constant 0 : index
    %c0_43 = arith.constant 0 : index
    %29 = vector.load %arg11[%c0_41, %c0_42, %c0_43] : memref<2x2x32xf32, #tpu.memory_space<vmem>>, vector<1x2x32xf32>
    %30 = vector.shape_cast %29 : vector<1x2x32xf32> to vector<2x32xf32>
    %c1_44 = arith.constant 1 : index
    %c0_45 = arith.constant 0 : index
    %c0_46 = arith.constant 0 : index
    %31 = vector.load %arg11[%c1_44, %c0_45, %c0_46] : memref<2x2x32xf32, #tpu.memory_space<vmem>>, vector<1x2x32xf32>
    %32 = vector.shape_cast %31 : vector<1x2x32xf32> to vector<2x32xf32>
    %c0_i32_47 = arith.constant 0 : i32
    %33 = arith.index_cast %c0_i32_47 : i32 to index
    %c0_48 = arith.constant 0 : index
    %c0_49 = arith.constant 0 : index
    %34 = vector.load %arg1[%33, %c0_48, %c0_49] : memref<8x2x16xf32, #tpu.memory_space<vmem>>, vector<1x2x16xf32>
    %35 = vector.shape_cast %34 : vector<1x2x16xf32> to vector<2x16xf32>
    %cst = arith.constant dense<0.000000e+00> : vector<2x128xf32>
    %36 = tpu.matmul %35, %3, %cst {dimension_numbers = #tpu.dot_dimension_numbers<[1], [0], [0], [1], [0, 0, 1, 1], [], []>} : vector<2x16xf32>, vector<16x128xf32>, vector<2x128xf32> -> vector<2x128xf32>
    %37 = vector.broadcast %7 : vector<1x128xf32> to vector<2x128xf32>
    %38 = arith.addf %36, %37 : vector<2x128xf32>
    %cst_50 = arith.constant dense<0.000000e+00> : vector<2x128xf32>
    %39 = tpu.matmul %26, %5, %cst_50 {dimension_numbers = #tpu.dot_dimension_numbers<[1], [0], [0], [1], [0, 0, 1, 1], [], []>} : vector<2x32xf32>, vector<32x128xf32>, vector<2x128xf32> -> vector<2x128xf32>
    %40 = vector.broadcast %9 : vector<1x128xf32> to vector<2x128xf32>
    %41 = arith.addf %39, %40 : vector<2x128xf32>
    %cst_51 = arith.constant dense<0.000000e+00> : vector<2xf32>
    %42 = vector.multi_reduction <add>, %38, %cst_51 [1] : vector<2x128xf32> to vector<2xf32>
    %43 = vector.shape_cast %42 : vector<2xf32> to vector<2x1xf32>
    %cst_52 = arith.constant 1.280000e+02 : f32
    %44 = vector.broadcast %cst_52 : f32 to vector<2x1xf32>
    %45 = arith.divf %43, %44 : vector<2x1xf32>
    %46 = vector.broadcast %45 : vector<2x1xf32> to vector<2x128xf32>
    %47 = arith.subf %38, %46 : vector<2x128xf32>
    %48 = arith.mulf %47, %47 : vector<2x128xf32>
    %cst_53 = arith.constant dense<0.000000e+00> : vector<2xf32>
    %49 = vector.multi_reduction <add>, %48, %cst_53 [1] : vector<2x128xf32> to vector<2xf32>
    %50 = vector.shape_cast %49 : vector<2xf32> to vector<2x1xf32>
    %cst_54 = arith.constant 1.280000e+02 : f32
    %51 = vector.broadcast %cst_54 : f32 to vector<2x1xf32>
    %52 = arith.divf %50, %51 : vector<2x1xf32>
    %53 = vector.broadcast %45 : vector<2x1xf32> to vector<2x128xf32>
    %54 = arith.subf %38, %53 : vector<2x128xf32>
    %cst_55 = arith.constant 9.99999974E-6 : f32
    %55 = vector.broadcast %cst_55 : f32 to vector<2x1xf32>
    %56 = arith.addf %52, %55 : vector<2x1xf32>
    %57 = math.rsqrt %56 : vector<2x1xf32>
    %58 = vector.broadcast %57 : vector<2x1xf32> to vector<2x128xf32>
    %59 = arith.mulf %54, %58 : vector<2x128xf32>
    %60 = vector.broadcast %11 : vector<1x128xf32> to vector<2x128xf32>
    %61 = arith.mulf %59, %60 : vector<2x128xf32>
    %cst_56 = arith.constant dense<0.000000e+00> : vector<2xf32>
    %62 = vector.multi_reduction <add>, %41, %cst_56 [1] : vector<2x128xf32> to vector<2xf32>
    %63 = vector.shape_cast %62 : vector<2xf32> to vector<2x1xf32>
    %cst_57 = arith.constant 1.280000e+02 : f32
    %64 = vector.broadcast %cst_57 : f32 to vector<2x1xf32>
    %65 = arith.divf %63, %64 : vector<2x1xf32>
    %66 = vector.broadcast %65 : vector<2x1xf32> to vector<2x128xf32>
    %67 = arith.subf %41, %66 : vector<2x128xf32>
    %68 = arith.mulf %67, %67 : vector<2x128xf32>
    %cst_58 = arith.constant dense<0.000000e+00> : vector<2xf32>
    %69 = vector.multi_reduction <add>, %68, %cst_58 [1] : vector<2x128xf32> to vector<2xf32>
    %70 = vector.shape_cast %69 : vector<2xf32> to vector<2x1xf32>
    %cst_59 = arith.constant 1.280000e+02 : f32
    %71 = vector.broadcast %cst_59 : f32 to vector<2x1xf32>
    %72 = arith.divf %70, %71 : vector<2x1xf32>
    %73 = vector.broadcast %65 : vector<2x1xf32> to vector<2x128xf32>
    %74 = arith.subf %41, %73 : vector<2x128xf32>
    %cst_60 = arith.constant 9.99999974E-6 : f32
    %75 = vector.broadcast %cst_60 : f32 to vector<2x1xf32>
    %76 = arith.addf %72, %75 : vector<2x1xf32>
    %77 = math.rsqrt %76 : vector<2x1xf32>
    %78 = vector.broadcast %77 : vector<2x1xf32> to vector<2x128xf32>
    %79 = arith.mulf %74, %78 : vector<2x128xf32>
    %80 = vector.broadcast %13 : vector<1x128xf32> to vector<2x128xf32>
    %81 = arith.mulf %79, %80 : vector<2x128xf32>
    %82 = arith.addf %61, %81 : vector<2x128xf32>
    %83 = vector.broadcast %17 : vector<1x128xf32> to vector<2x128xf32>
    %84 = arith.addf %82, %83 : vector<2x128xf32>
    %85 = vector.extract_strided_slice %84 {offsets = [0, 0], sizes = [2, 96], strides = [1, 1]} : vector<2x128xf32> to vector<2x96xf32>
    %86 = arith.negf %85 : vector<2x96xf32>
    %87 = math.exp %86 : vector<2x96xf32>
    %cst_61 = arith.constant 1.000000e+00 : f32
    %88 = vector.broadcast %cst_61 : f32 to vector<2x96xf32>
    %89 = arith.addf %88, %87 : vector<2x96xf32>
    %90 = arith.divf %88, %89 : vector<2x96xf32>
    %91 = vector.extract_strided_slice %84 {offsets = [0, 96], sizes = [2, 32], strides = [1, 1]} : vector<2x128xf32> to vector<2x32xf32>
    %92 = math.tanh %91 : vector<2x32xf32>
    %93 = vector.extract_strided_slice %90 {offsets = [0, 0], sizes = [2, 32], strides = [1, 1]} : vector<2x96xf32> to vector<2x32xf32>
    %94 = vector.extract_strided_slice %90 {offsets = [0, 32], sizes = [2, 32], strides = [1, 1]} : vector<2x96xf32> to vector<2x32xf32>
    %95 = vector.extract_strided_slice %90 {offsets = [0, 64], sizes = [2, 32], strides = [1, 1]} : vector<2x96xf32> to vector<2x32xf32>
    %96 = arith.mulf %94, %30 : vector<2x32xf32>
    %97 = arith.mulf %93, %92 : vector<2x32xf32>
    %98 = arith.addf %96, %97 : vector<2x32xf32>
    %cst_62 = arith.constant dense<0.000000e+00> : vector<2xf32>
    %99 = vector.multi_reduction <add>, %98, %cst_62 [1] : vector<2x32xf32> to vector<2xf32>
    %100 = vector.shape_cast %99 : vector<2xf32> to vector<2x1xf32>
    %cst_63 = arith.constant 3.200000e+01 : f32
    %101 = vector.broadcast %cst_63 : f32 to vector<2x1xf32>
    %102 = arith.divf %100, %101 : vector<2x1xf32>
    %103 = vector.broadcast %102 : vector<2x1xf32> to vector<2x32xf32>
    %104 = arith.subf %98, %103 : vector<2x32xf32>
    %105 = arith.mulf %104, %104 : vector<2x32xf32>
    %cst_64 = arith.constant dense<0.000000e+00> : vector<2xf32>
    %106 = vector.multi_reduction <add>, %105, %cst_64 [1] : vector<2x32xf32> to vector<2xf32>
    %107 = vector.shape_cast %106 : vector<2xf32> to vector<2x1xf32>
    %cst_65 = arith.constant 3.200000e+01 : f32
    %108 = vector.broadcast %cst_65 : f32 to vector<2x1xf32>
    %109 = arith.divf %107, %108 : vector<2x1xf32>
    %110 = vector.broadcast %102 : vector<2x1xf32> to vector<2x32xf32>
    %111 = arith.subf %98, %110 : vector<2x32xf32>
    %cst_66 = arith.constant 9.99999974E-6 : f32
    %112 = vector.broadcast %cst_66 : f32 to vector<2x1xf32>
    %113 = arith.addf %109, %112 : vector<2x1xf32>
    %114 = math.rsqrt %113 : vector<2x1xf32>
    %115 = vector.broadcast %114 : vector<2x1xf32> to vector<2x32xf32>
    %116 = arith.mulf %111, %115 : vector<2x32xf32>
    %117 = vector.broadcast %21 : vector<1x32xf32> to vector<2x32xf32>
    %118 = arith.mulf %116, %117 : vector<2x32xf32>
    %119 = vector.broadcast %23 : vector<1x32xf32> to vector<2x32xf32>
    %120 = arith.addf %118, %119 : vector<2x32xf32>
    %121 = math.tanh %120 : vector<2x32xf32>
    %122 = arith.mulf %95, %121 : vector<2x32xf32>
    %cst_67 = arith.constant dense<0.000000e+00> : vector<2x128xf32>
    %123 = tpu.matmul %122, %4, %cst_67 {dimension_numbers = #tpu.dot_dimension_numbers<[1], [0], [0], [1], [0, 0, 1, 1], [], []>} : vector<2x32xf32>, vector<32x128xf32>, vector<2x128xf32> -> vector<2x128xf32>
    %124 = vector.broadcast %8 : vector<1x128xf32> to vector<2x128xf32>
    %125 = arith.addf %123, %124 : vector<2x128xf32>
    %cst_68 = arith.constant dense<0.000000e+00> : vector<2x128xf32>
    %126 = tpu.matmul %28, %6, %cst_68 {dimension_numbers = #tpu.dot_dimension_numbers<[1], [0], [0], [1], [0, 0, 1, 1], [], []>} : vector<2x32xf32>, vector<32x128xf32>, vector<2x128xf32> -> vector<2x128xf32>
    %127 = vector.broadcast %10 : vector<1x128xf32> to vector<2x128xf32>
    %128 = arith.addf %126, %127 : vector<2x128xf32>
    %cst_69 = arith.constant dense<0.000000e+00> : vector<2xf32>
    %129 = vector.multi_reduction <add>, %125, %cst_69 [1] : vector<2x128xf32> to vector<2xf32>
    %130 = vector.shape_cast %129 : vector<2xf32> to vector<2x1xf32>
    %cst_70 = arith.constant 1.280000e+02 : f32
    %131 = vector.broadcast %cst_70 : f32 to vector<2x1xf32>
    %132 = arith.divf %130, %131 : vector<2x1xf32>
    %133 = vector.broadcast %132 : vector<2x1xf32> to vector<2x128xf32>
    %134 = arith.subf %125, %133 : vector<2x128xf32>
    %135 = arith.mulf %134, %134 : vector<2x128xf32>
    %cst_71 = arith.constant dense<0.000000e+00> : vector<2xf32>
    %136 = vector.multi_reduction <add>, %135, %cst_71 [1] : vector<2x128xf32> to vector<2xf32>
    %137 = vector.shape_cast %136 : vector<2xf32> to vector<2x1xf32>
    %cst_72 = arith.constant 1.280000e+02 : f32
    %138 = vector.broadcast %cst_72 : f32 to vector<2x1xf32>
    %139 = arith.divf %137, %138 : vector<2x1xf32>
    %140 = vector.broadcast %132 : vector<2x1xf32> to vector<2x128xf32>
    %141 = arith.subf %125, %140 : vector<2x128xf32>
    %cst_73 = arith.constant 9.99999974E-6 : f32
    %142 = vector.broadcast %cst_73 : f32 to vector<2x1xf32>
    %143 = arith.addf %139, %142 : vector<2x1xf32>
    %144 = math.rsqrt %143 : vector<2x1xf32>
    %145 = vector.broadcast %144 : vector<2x1xf32> to vector<2x128xf32>
    %146 = arith.mulf %141, %145 : vector<2x128xf32>
    %147 = vector.broadcast %12 : vector<1x128xf32> to vector<2x128xf32>
    %148 = arith.mulf %146, %147 : vector<2x128xf32>
    %cst_74 = arith.constant dense<0.000000e+00> : vector<2xf32>
    %149 = vector.multi_reduction <add>, %128, %cst_74 [1] : vector<2x128xf32> to vector<2xf32>
    %150 = vector.shape_cast %149 : vector<2xf32> to vector<2x1xf32>
    %cst_75 = arith.constant 1.280000e+02 : f32
    %151 = vector.broadcast %cst_75 : f32 to vector<2x1xf32>
    %152 = arith.divf %150, %151 : vector<2x1xf32>
    %153 = vector.broadcast %152 : vector<2x1xf32> to vector<2x128xf32>
    %154 = arith.subf %128, %153 : vector<2x128xf32>
    %155 = arith.mulf %154, %154 : vector<2x128xf32>
    %cst_76 = arith.constant dense<0.000000e+00> : vector<2xf32>
    %156 = vector.multi_reduction <add>, %155, %cst_76 [1] : vector<2x128xf32> to vector<2xf32>
    %157 = vector.shape_cast %156 : vector<2xf32> to vector<2x1xf32>
    %cst_77 = arith.constant 1.280000e+02 : f32
    %158 = vector.broadcast %cst_77 : f32 to vector<2x1xf32>
    %159 = arith.divf %157, %158 : vector<2x1xf32>
    %160 = vector.broadcast %152 : vector<2x1xf32> to vector<2x128xf32>
    %161 = arith.subf %128, %160 : vector<2x128xf32>
    %cst_78 = arith.constant 9.99999974E-6 : f32
    %162 = vector.broadcast %cst_78 : f32 to vector<2x1xf32>
    %163 = arith.addf %159, %162 : vector<2x1xf32>
    %164 = math.rsqrt %163 : vector<2x1xf32>
    %165 = vector.broadcast %164 : vector<2x1xf32> to vector<2x128xf32>
    %166 = arith.mulf %161, %165 : vector<2x128xf32>
    %167 = vector.broadcast %14 : vector<1x128xf32> to vector<2x128xf32>
    %168 = arith.mulf %166, %167 : vector<2x128xf32>
    %169 = arith.addf %148, %168 : vector<2x128xf32>
    %170 = vector.broadcast %20 : vector<1x128xf32> to vector<2x128xf32>
    %171 = arith.addf %169, %170 : vector<2x128xf32>
    %172 = vector.extract_strided_slice %171 {offsets = [0, 0], sizes = [2, 96], strides = [1, 1]} : vector<2x128xf32> to vector<2x96xf32>
    %173 = arith.negf %172 : vector<2x96xf32>
    %174 = math.exp %173 : vector<2x96xf32>
    %cst_79 = arith.constant 1.000000e+00 : f32
    %175 = vector.broadcast %cst_79 : f32 to vector<2x96xf32>
    %176 = arith.addf %175, %174 : vector<2x96xf32>
    %177 = arith.divf %175, %176 : vector<2x96xf32>
    %178 = vector.extract_strided_slice %171 {offsets = [0, 96], sizes = [2, 32], strides = [1, 1]} : vector<2x128xf32> to vector<2x32xf32>
    %179 = math.tanh %178 : vector<2x32xf32>
    %180 = vector.extract_strided_slice %177 {offsets = [0, 0], sizes = [2, 32], strides = [1, 1]} : vector<2x96xf32> to vector<2x32xf32>
    %181 = vector.extract_strided_slice %177 {offsets = [0, 32], sizes = [2, 32], strides = [1, 1]} : vector<2x96xf32> to vector<2x32xf32>
    %182 = vector.extract_strided_slice %177 {offsets = [0, 64], sizes = [2, 32], strides = [1, 1]} : vector<2x96xf32> to vector<2x32xf32>
    %183 = arith.mulf %181, %32 : vector<2x32xf32>
    %184 = arith.mulf %180, %179 : vector<2x32xf32>
    %185 = arith.addf %183, %184 : vector<2x32xf32>
    %cst_80 = arith.constant dense<0.000000e+00> : vector<2xf32>
    %186 = vector.multi_reduction <add>, %185, %cst_80 [1] : vector<2x32xf32> to vector<2xf32>
    %187 = vector.shape_cast %186 : vector<2xf32> to vector<2x1xf32>
    %cst_81 = arith.constant 3.200000e+01 : f32
    %188 = vector.broadcast %cst_81 : f32 to vector<2x1xf32>
    %189 = arith.divf %187, %188 : vector<2x1xf32>
    %190 = vector.broadcast %189 : vector<2x1xf32> to vector<2x32xf32>
    %191 = arith.subf %185, %190 : vector<2x32xf32>
    %192 = arith.mulf %191, %191 : vector<2x32xf32>
    %cst_82 = arith.constant dense<0.000000e+00> : vector<2xf32>
    %193 = vector.multi_reduction <add>, %192, %cst_82 [1] : vector<2x32xf32> to vector<2xf32>
    %194 = vector.shape_cast %193 : vector<2xf32> to vector<2x1xf32>
    %cst_83 = arith.constant 3.200000e+01 : f32
    %195 = vector.broadcast %cst_83 : f32 to vector<2x1xf32>
    %196 = arith.divf %194, %195 : vector<2x1xf32>
    %197 = vector.broadcast %189 : vector<2x1xf32> to vector<2x32xf32>
    %198 = arith.subf %185, %197 : vector<2x32xf32>
    %cst_84 = arith.constant 9.99999974E-6 : f32
    %199 = vector.broadcast %cst_84 : f32 to vector<2x1xf32>
    %200 = arith.addf %196, %199 : vector<2x1xf32>
    %201 = math.rsqrt %200 : vector<2x1xf32>
    %202 = vector.broadcast %201 : vector<2x1xf32> to vector<2x32xf32>
    %203 = arith.mulf %198, %202 : vector<2x32xf32>
    %204 = vector.broadcast %22 : vector<1x32xf32> to vector<2x32xf32>
    %205 = arith.mulf %203, %204 : vector<2x32xf32>
    %206 = vector.broadcast %24 : vector<1x32xf32> to vector<2x32xf32>
    %207 = arith.addf %205, %206 : vector<2x32xf32>
    %208 = math.tanh %207 : vector<2x32xf32>
    %209 = arith.mulf %182, %208 : vector<2x32xf32>
    %c1_i32 = arith.constant 1 : i32
    %210 = arith.index_cast %c1_i32 : i32 to index
    %c0_85 = arith.constant 0 : index
    %c0_86 = arith.constant 0 : index
    %211 = vector.load %arg1[%210, %c0_85, %c0_86] : memref<8x2x16xf32, #tpu.memory_space<vmem>>, vector<1x2x16xf32>
    %212 = vector.shape_cast %211 : vector<1x2x16xf32> to vector<2x16xf32>
    %cst_87 = arith.constant dense<0.000000e+00> : vector<2x128xf32>
    %213 = tpu.matmul %212, %3, %cst_87 {dimension_numbers = #tpu.dot_dimension_numbers<[1], [0], [0], [1], [0, 0, 1, 1], [], []>} : vector<2x16xf32>, vector<16x128xf32>, vector<2x128xf32> -> vector<2x128xf32>
    %214 = vector.broadcast %7 : vector<1x128xf32> to vector<2x128xf32>
    %215 = arith.addf %213, %214 : vector<2x128xf32>
    %cst_88 = arith.constant dense<0.000000e+00> : vector<2x128xf32>
    %216 = tpu.matmul %122, %5, %cst_88 {dimension_numbers = #tpu.dot_dimension_numbers<[1], [0], [0], [1], [0, 0, 1, 1], [], []>} : vector<2x32xf32>, vector<32x128xf32>, vector<2x128xf32> -> vector<2x128xf32>
    %217 = vector.broadcast %9 : vector<1x128xf32> to vector<2x128xf32>
    %218 = arith.addf %216, %217 : vector<2x128xf32>
    %cst_89 = arith.constant dense<0.000000e+00> : vector<2xf32>
    %219 = vector.multi_reduction <add>, %215, %cst_89 [1] : vector<2x128xf32> to vector<2xf32>
    %220 = vector.shape_cast %219 : vector<2xf32> to vector<2x1xf32>
    %cst_90 = arith.constant 1.280000e+02 : f32
    %221 = vector.broadcast %cst_90 : f32 to vector<2x1xf32>
    %222 = arith.divf %220, %221 : vector<2x1xf32>
    %223 = vector.broadcast %222 : vector<2x1xf32> to vector<2x128xf32>
    %224 = arith.subf %215, %223 : vector<2x128xf32>
    %225 = arith.mulf %224, %224 : vector<2x128xf32>
    %cst_91 = arith.constant dense<0.000000e+00> : vector<2xf32>
    %226 = vector.multi_reduction <add>, %225, %cst_91 [1] : vector<2x128xf32> to vector<2xf32>
    %227 = vector.shape_cast %226 : vector<2xf32> to vector<2x1xf32>
    %cst_92 = arith.constant 1.280000e+02 : f32
    %228 = vector.broadcast %cst_92 : f32 to vector<2x1xf32>
    %229 = arith.divf %227, %228 : vector<2x1xf32>
    %230 = vector.broadcast %222 : vector<2x1xf32> to vector<2x128xf32>
    %231 = arith.subf %215, %230 : vector<2x128xf32>
    %cst_93 = arith.constant 9.99999974E-6 : f32
    %232 = vector.broadcast %cst_93 : f32 to vector<2x1xf32>
    %233 = arith.addf %229, %232 : vector<2x1xf32>
    %234 = math.rsqrt %233 : vector<2x1xf32>
    %235 = vector.broadcast %234 : vector<2x1xf32> to vector<2x128xf32>
    %236 = arith.mulf %231, %235 : vector<2x128xf32>
    %237 = vector.broadcast %11 : vector<1x128xf32> to vector<2x128xf32>
    %238 = arith.mulf %236, %237 : vector<2x128xf32>
    %cst_94 = arith.constant dense<0.000000e+00> : vector<2xf32>
    %239 = vector.multi_reduction <add>, %218, %cst_94 [1] : vector<2x128xf32> to vector<2xf32>
    %240 = vector.shape_cast %239 : vector<2xf32> to vector<2x1xf32>
    %cst_95 = arith.constant 1.280000e+02 : f32
    %241 = vector.broadcast %cst_95 : f32 to vector<2x1xf32>
    %242 = arith.divf %240, %241 : vector<2x1xf32>
    %243 = vector.broadcast %242 : vector<2x1xf32> to vector<2x128xf32>
    %244 = arith.subf %218, %243 : vector<2x128xf32>
    %245 = arith.mulf %244, %244 : vector<2x128xf32>
    %cst_96 = arith.constant dense<0.000000e+00> : vector<2xf32>
    %246 = vector.multi_reduction <add>, %245, %cst_96 [1] : vector<2x128xf32> to vector<2xf32>
    %247 = vector.shape_cast %246 : vector<2xf32> to vector<2x1xf32>
    %cst_97 = arith.constant 1.280000e+02 : f32
    %248 = vector.broadcast %cst_97 : f32 to vector<2x1xf32>
    %249 = arith.divf %247, %248 : vector<2x1xf32>
    %250 = vector.broadcast %242 : vector<2x1xf32> to vector<2x128xf32>
    %251 = arith.subf %218, %250 : vector<2x128xf32>
    %cst_98 = arith.constant 9.99999974E-6 : f32
    %252 = vector.broadcast %cst_98 : f32 to vector<2x1xf32>
    %253 = arith.addf %249, %252 : vector<2x1xf32>
    %254 = math.rsqrt %253 : vector<2x1xf32>
    %255 = vector.broadcast %254 : vector<2x1xf32> to vector<2x128xf32>
    %256 = arith.mulf %251, %255 : vector<2x128xf32>
    %257 = vector.broadcast %13 : vector<1x128xf32> to vector<2x128xf32>
    %258 = arith.mulf %256, %257 : vector<2x128xf32>
    %259 = arith.addf %238, %258 : vector<2x128xf32>
    %260 = vector.broadcast %17 : vector<1x128xf32> to vector<2x128xf32>
    %261 = arith.addf %259, %260 : vector<2x128xf32>
    %262 = vector.extract_strided_slice %261 {offsets = [0, 0], sizes = [2, 96], strides = [1, 1]} : vector<2x128xf32> to vector<2x96xf32>
    %263 = arith.negf %262 : vector<2x96xf32>
    %264 = math.exp %263 : vector<2x96xf32>
    %cst_99 = arith.constant 1.000000e+00 : f32
    %265 = vector.broadcast %cst_99 : f32 to vector<2x96xf32>
    %266 = arith.addf %265, %264 : vector<2x96xf32>
    %267 = arith.divf %265, %266 : vector<2x96xf32>
    %268 = vector.extract_strided_slice %261 {offsets = [0, 96], sizes = [2, 32], strides = [1, 1]} : vector<2x128xf32> to vector<2x32xf32>
    %269 = math.tanh %268 : vector<2x32xf32>
    %270 = vector.extract_strided_slice %267 {offsets = [0, 0], sizes = [2, 32], strides = [1, 1]} : vector<2x96xf32> to vector<2x32xf32>
    %271 = vector.extract_strided_slice %267 {offsets = [0, 32], sizes = [2, 32], strides = [1, 1]} : vector<2x96xf32> to vector<2x32xf32>
    %272 = vector.extract_strided_slice %267 {offsets = [0, 64], sizes = [2, 32], strides = [1, 1]} : vector<2x96xf32> to vector<2x32xf32>
    %273 = arith.mulf %271, %98 : vector<2x32xf32>
    %274 = arith.mulf %270, %269 : vector<2x32xf32>
    %275 = arith.addf %273, %274 : vector<2x32xf32>
    %cst_100 = arith.constant dense<0.000000e+00> : vector<2xf32>
    %276 = vector.multi_reduction <add>, %275, %cst_100 [1] : vector<2x32xf32> to vector<2xf32>
    %277 = vector.shape_cast %276 : vector<2xf32> to vector<2x1xf32>
    %cst_101 = arith.constant 3.200000e+01 : f32
    %278 = vector.broadcast %cst_101 : f32 to vector<2x1xf32>
    %279 = arith.divf %277, %278 : vector<2x1xf32>
    %280 = vector.broadcast %279 : vector<2x1xf32> to vector<2x32xf32>
    %281 = arith.subf %275, %280 : vector<2x32xf32>
    %282 = arith.mulf %281, %281 : vector<2x32xf32>
    %cst_102 = arith.constant dense<0.000000e+00> : vector<2xf32>
    %283 = vector.multi_reduction <add>, %282, %cst_102 [1] : vector<2x32xf32> to vector<2xf32>
    %284 = vector.shape_cast %283 : vector<2xf32> to vector<2x1xf32>
    %cst_103 = arith.constant 3.200000e+01 : f32
    %285 = vector.broadcast %cst_103 : f32 to vector<2x1xf32>
    %286 = arith.divf %284, %285 : vector<2x1xf32>
    %287 = vector.broadcast %279 : vector<2x1xf32> to vector<2x32xf32>
    %288 = arith.subf %275, %287 : vector<2x32xf32>
    %cst_104 = arith.constant 9.99999974E-6 : f32
    %289 = vector.broadcast %cst_104 : f32 to vector<2x1xf32>
    %290 = arith.addf %286, %289 : vector<2x1xf32>
    %291 = math.rsqrt %290 : vector<2x1xf32>
    %292 = vector.broadcast %291 : vector<2x1xf32> to vector<2x32xf32>
    %293 = arith.mulf %288, %292 : vector<2x32xf32>
    %294 = vector.broadcast %21 : vector<1x32xf32> to vector<2x32xf32>
    %295 = arith.mulf %293, %294 : vector<2x32xf32>
    %296 = vector.broadcast %23 : vector<1x32xf32> to vector<2x32xf32>
    %297 = arith.addf %295, %296 : vector<2x32xf32>
    %298 = math.tanh %297 : vector<2x32xf32>
    %299 = arith.mulf %272, %298 : vector<2x32xf32>
    %cst_105 = arith.constant dense<0.000000e+00> : vector<2x128xf32>
    %300 = tpu.matmul %299, %4, %cst_105 {dimension_numbers = #tpu.dot_dimension_numbers<[1], [0], [0], [1], [0, 0, 1, 1], [], []>} : vector<2x32xf32>, vector<32x128xf32>, vector<2x128xf32> -> vector<2x128xf32>
    %301 = vector.broadcast %8 : vector<1x128xf32> to vector<2x128xf32>
    %302 = arith.addf %300, %301 : vector<2x128xf32>
    %cst_106 = arith.constant dense<0.000000e+00> : vector<2x128xf32>
    %303 = tpu.matmul %209, %6, %cst_106 {dimension_numbers = #tpu.dot_dimension_numbers<[1], [0], [0], [1], [0, 0, 1, 1], [], []>} : vector<2x32xf32>, vector<32x128xf32>, vector<2x128xf32> -> vector<2x128xf32>
    %304 = vector.broadcast %10 : vector<1x128xf32> to vector<2x128xf32>
    %305 = arith.addf %303, %304 : vector<2x128xf32>
    %cst_107 = arith.constant dense<0.000000e+00> : vector<2xf32>
    %306 = vector.multi_reduction <add>, %302, %cst_107 [1] : vector<2x128xf32> to vector<2xf32>
    %307 = vector.shape_cast %306 : vector<2xf32> to vector<2x1xf32>
    %cst_108 = arith.constant 1.280000e+02 : f32
    %308 = vector.broadcast %cst_108 : f32 to vector<2x1xf32>
    %309 = arith.divf %307, %308 : vector<2x1xf32>
    %310 = vector.broadcast %309 : vector<2x1xf32> to vector<2x128xf32>
    %311 = arith.subf %302, %310 : vector<2x128xf32>
    %312 = arith.mulf %311, %311 : vector<2x128xf32>
    %cst_109 = arith.constant dense<0.000000e+00> : vector<2xf32>
    %313 = vector.multi_reduction <add>, %312, %cst_109 [1] : vector<2x128xf32> to vector<2xf32>
    %314 = vector.shape_cast %313 : vector<2xf32> to vector<2x1xf32>
    %cst_110 = arith.constant 1.280000e+02 : f32
    %315 = vector.broadcast %cst_110 : f32 to vector<2x1xf32>
    %316 = arith.divf %314, %315 : vector<2x1xf32>
    %317 = vector.broadcast %309 : vector<2x1xf32> to vector<2x128xf32>
    %318 = arith.subf %302, %317 : vector<2x128xf32>
    %cst_111 = arith.constant 9.99999974E-6 : f32
    %319 = vector.broadcast %cst_111 : f32 to vector<2x1xf32>
    %320 = arith.addf %316, %319 : vector<2x1xf32>
    %321 = math.rsqrt %320 : vector<2x1xf32>
    %322 = vector.broadcast %321 : vector<2x1xf32> to vector<2x128xf32>
    %323 = arith.mulf %318, %322 : vector<2x128xf32>
    %324 = vector.broadcast %12 : vector<1x128xf32> to vector<2x128xf32>
    %325 = arith.mulf %323, %324 : vector<2x128xf32>
    %cst_112 = arith.constant dense<0.000000e+00> : vector<2xf32>
    %326 = vector.multi_reduction <add>, %305, %cst_112 [1] : vector<2x128xf32> to vector<2xf32>
    %327 = vector.shape_cast %326 : vector<2xf32> to vector<2x1xf32>
    %cst_113 = arith.constant 1.280000e+02 : f32
    %328 = vector.broadcast %cst_113 : f32 to vector<2x1xf32>
    %329 = arith.divf %327, %328 : vector<2x1xf32>
    %330 = vector.broadcast %329 : vector<2x1xf32> to vector<2x128xf32>
    %331 = arith.subf %305, %330 : vector<2x128xf32>
    %332 = arith.mulf %331, %331 : vector<2x128xf32>
    %cst_114 = arith.constant dense<0.000000e+00> : vector<2xf32>
    %333 = vector.multi_reduction <add>, %332, %cst_114 [1] : vector<2x128xf32> to vector<2xf32>
    %334 = vector.shape_cast %333 : vector<2xf32> to vector<2x1xf32>
    %cst_115 = arith.constant 1.280000e+02 : f32
    %335 = vector.broadcast %cst_115 : f32 to vector<2x1xf32>
    %336 = arith.divf %334, %335 : vector<2x1xf32>
    %337 = vector.broadcast %329 : vector<2x1xf32> to vector<2x128xf32>
    %338 = arith.subf %305, %337 : vector<2x128xf32>
    %cst_116 = arith.constant 9.99999974E-6 : f32
    %339 = vector.broadcast %cst_116 : f32 to vector<2x1xf32>
    %340 = arith.addf %336, %339 : vector<2x1xf32>
    %341 = math.rsqrt %340 : vector<2x1xf32>
    %342 = vector.broadcast %341 : vector<2x1xf32> to vector<2x128xf32>
    %343 = arith.mulf %338, %342 : vector<2x128xf32>
    %344 = vector.broadcast %14 : vector<1x128xf32> to vector<2x128xf32>
    %345 = arith.mulf %343, %344 : vector<2x128xf32>
    %346 = arith.addf %325, %345 : vector<2x128xf32>
    %347 = vector.broadcast %20 : vector<1x128xf32> to vector<2x128xf32>
    %348 = arith.addf %346, %347 : vector<2x128xf32>
    %349 = vector.extract_strided_slice %348 {offsets = [0, 0], sizes = [2, 96], strides = [1, 1]} : vector<2x128xf32> to vector<2x96xf32>
    %350 = arith.negf %349 : vector<2x96xf32>
    %351 = math.exp %350 : vector<2x96xf32>
    %cst_117 = arith.constant 1.000000e+00 : f32
    %352 = vector.broadcast %cst_117 : f32 to vector<2x96xf32>
    %353 = arith.addf %352, %351 : vector<2x96xf32>
    %354 = arith.divf %352, %353 : vector<2x96xf32>
    %355 = vector.extract_strided_slice %348 {offsets = [0, 96], sizes = [2, 32], strides = [1, 1]} : vector<2x128xf32> to vector<2x32xf32>
    %356 = math.tanh %355 : vector<2x32xf32>
    %357 = vector.extract_strided_slice %354 {offsets = [0, 0], sizes = [2, 32], strides = [1, 1]} : vector<2x96xf32> to vector<2x32xf32>
    %358 = vector.extract_strided_slice %354 {offsets = [0, 32], sizes = [2, 32], strides = [1, 1]} : vector<2x96xf32> to vector<2x32xf32>
    %359 = vector.extract_strided_slice %354 {offsets = [0, 64], sizes = [2, 32], strides = [1, 1]} : vector<2x96xf32> to vector<2x32xf32>
    %360 = arith.mulf %358, %185 : vector<2x32xf32>
    %361 = arith.mulf %357, %356 : vector<2x32xf32>
    %362 = arith.addf %360, %361 : vector<2x32xf32>
    %cst_118 = arith.constant dense<0.000000e+00> : vector<2xf32>
    %363 = vector.multi_reduction <add>, %362, %cst_118 [1] : vector<2x32xf32> to vector<2xf32>
    %364 = vector.shape_cast %363 : vector<2xf32> to vector<2x1xf32>
    %cst_119 = arith.constant 3.200000e+01 : f32
    %365 = vector.broadcast %cst_119 : f32 to vector<2x1xf32>
    %366 = arith.divf %364, %365 : vector<2x1xf32>
    %367 = vector.broadcast %366 : vector<2x1xf32> to vector<2x32xf32>
    %368 = arith.subf %362, %367 : vector<2x32xf32>
    %369 = arith.mulf %368, %368 : vector<2x32xf32>
    %cst_120 = arith.constant dense<0.000000e+00> : vector<2xf32>
    %370 = vector.multi_reduction <add>, %369, %cst_120 [1] : vector<2x32xf32> to vector<2xf32>
    %371 = vector.shape_cast %370 : vector<2xf32> to vector<2x1xf32>
    %cst_121 = arith.constant 3.200000e+01 : f32
    %372 = vector.broadcast %cst_121 : f32 to vector<2x1xf32>
    %373 = arith.divf %371, %372 : vector<2x1xf32>
    %374 = vector.broadcast %366 : vector<2x1xf32> to vector<2x32xf32>
    %375 = arith.subf %362, %374 : vector<2x32xf32>
    %cst_122 = arith.constant 9.99999974E-6 : f32
    %376 = vector.broadcast %cst_122 : f32 to vector<2x1xf32>
    %377 = arith.addf %373, %376 : vector<2x1xf32>
    %378 = math.rsqrt %377 : vector<2x1xf32>
    %379 = vector.broadcast %378 : vector<2x1xf32> to vector<2x32xf32>
    %380 = arith.mulf %375, %379 : vector<2x32xf32>
    %381 = vector.broadcast %22 : vector<1x32xf32> to vector<2x32xf32>
    %382 = arith.mulf %380, %381 : vector<2x32xf32>
    %383 = vector.broadcast %24 : vector<1x32xf32> to vector<2x32xf32>
    %384 = arith.addf %382, %383 : vector<2x32xf32>
    %385 = math.tanh %384 : vector<2x32xf32>
    %386 = arith.mulf %359, %385 : vector<2x32xf32>
    %c2_i32 = arith.constant 2 : i32
    %387 = arith.index_cast %c2_i32 : i32 to index
    %c0_123 = arith.constant 0 : index
    %c0_124 = arith.constant 0 : index
    %388 = vector.load %arg1[%387, %c0_123, %c0_124] : memref<8x2x16xf32, #tpu.memory_space<vmem>>, vector<1x2x16xf32>
    %389 = vector.shape_cast %388 : vector<1x2x16xf32> to vector<2x16xf32>
    %cst_125 = arith.constant dense<0.000000e+00> : vector<2x128xf32>
    %390 = tpu.matmul %389, %3, %cst_125 {dimension_numbers = #tpu.dot_dimension_numbers<[1], [0], [0], [1], [0, 0, 1, 1], [], []>} : vector<2x16xf32>, vector<16x128xf32>, vector<2x128xf32> -> vector<2x128xf32>
    %391 = vector.broadcast %7 : vector<1x128xf32> to vector<2x128xf32>
    %392 = arith.addf %390, %391 : vector<2x128xf32>
    %cst_126 = arith.constant dense<0.000000e+00> : vector<2x128xf32>
    %393 = tpu.matmul %299, %5, %cst_126 {dimension_numbers = #tpu.dot_dimension_numbers<[1], [0], [0], [1], [0, 0, 1, 1], [], []>} : vector<2x32xf32>, vector<32x128xf32>, vector<2x128xf32> -> vector<2x128xf32>
    %394 = vector.broadcast %9 : vector<1x128xf32> to vector<2x128xf32>
    %395 = arith.addf %393, %394 : vector<2x128xf32>
    %cst_127 = arith.constant dense<0.000000e+00> : vector<2xf32>
    %396 = vector.multi_reduction <add>, %392, %cst_127 [1] : vector<2x128xf32> to vector<2xf32>
    %397 = vector.shape_cast %396 : vector<2xf32> to vector<2x1xf32>
    %cst_128 = arith.constant 1.280000e+02 : f32
    %398 = vector.broadcast %cst_128 : f32 to vector<2x1xf32>
    %399 = arith.divf %397, %398 : vector<2x1xf32>
    %400 = vector.broadcast %399 : vector<2x1xf32> to vector<2x128xf32>
    %401 = arith.subf %392, %400 : vector<2x128xf32>
    %402 = arith.mulf %401, %401 : vector<2x128xf32>
    %cst_129 = arith.constant dense<0.000000e+00> : vector<2xf32>
    %403 = vector.multi_reduction <add>, %402, %cst_129 [1] : vector<2x128xf32> to vector<2xf32>
    %404 = vector.shape_cast %403 : vector<2xf32> to vector<2x1xf32>
    %cst_130 = arith.constant 1.280000e+02 : f32
    %405 = vector.broadcast %cst_130 : f32 to vector<2x1xf32>
    %406 = arith.divf %404, %405 : vector<2x1xf32>
    %407 = vector.broadcast %399 : vector<2x1xf32> to vector<2x128xf32>
    %408 = arith.subf %392, %407 : vector<2x128xf32>
    %cst_131 = arith.constant 9.99999974E-6 : f32
    %409 = vector.broadcast %cst_131 : f32 to vector<2x1xf32>
    %410 = arith.addf %406, %409 : vector<2x1xf32>
    %411 = math.rsqrt %410 : vector<2x1xf32>
    %412 = vector.broadcast %411 : vector<2x1xf32> to vector<2x128xf32>
    %413 = arith.mulf %408, %412 : vector<2x128xf32>
    %414 = vector.broadcast %11 : vector<1x128xf32> to vector<2x128xf32>
    %415 = arith.mulf %413, %414 : vector<2x128xf32>
    %cst_132 = arith.constant dense<0.000000e+00> : vector<2xf32>
    %416 = vector.multi_reduction <add>, %395, %cst_132 [1] : vector<2x128xf32> to vector<2xf32>
    %417 = vector.shape_cast %416 : vector<2xf32> to vector<2x1xf32>
    %cst_133 = arith.constant 1.280000e+02 : f32
    %418 = vector.broadcast %cst_133 : f32 to vector<2x1xf32>
    %419 = arith.divf %417, %418 : vector<2x1xf32>
    %420 = vector.broadcast %419 : vector<2x1xf32> to vector<2x128xf32>
    %421 = arith.subf %395, %420 : vector<2x128xf32>
    %422 = arith.mulf %421, %421 : vector<2x128xf32>
    %cst_134 = arith.constant dense<0.000000e+00> : vector<2xf32>
    %423 = vector.multi_reduction <add>, %422, %cst_134 [1] : vector<2x128xf32> to vector<2xf32>
    %424 = vector.shape_cast %423 : vector<2xf32> to vector<2x1xf32>
    %cst_135 = arith.constant 1.280000e+02 : f32
    %425 = vector.broadcast %cst_135 : f32 to vector<2x1xf32>
    %426 = arith.divf %424, %425 : vector<2x1xf32>
    %427 = vector.broadcast %419 : vector<2x1xf32> to vector<2x128xf32>
    %428 = arith.subf %395, %427 : vector<2x128xf32>
    %cst_136 = arith.constant 9.99999974E-6 : f32
    %429 = vector.broadcast %cst_136 : f32 to vector<2x1xf32>
    %430 = arith.addf %426, %429 : vector<2x1xf32>
    %431 = math.rsqrt %430 : vector<2x1xf32>
    %432 = vector.broadcast %431 : vector<2x1xf32> to vector<2x128xf32>
    %433 = arith.mulf %428, %432 : vector<2x128xf32>
    %434 = vector.broadcast %13 : vector<1x128xf32> to vector<2x128xf32>
    %435 = arith.mulf %433, %434 : vector<2x128xf32>
    %436 = arith.addf %415, %435 : vector<2x128xf32>
    %437 = vector.broadcast %17 : vector<1x128xf32> to vector<2x128xf32>
    %438 = arith.addf %436, %437 : vector<2x128xf32>
    %439 = vector.extract_strided_slice %438 {offsets = [0, 0], sizes = [2, 96], strides = [1, 1]} : vector<2x128xf32> to vector<2x96xf32>
    %440 = arith.negf %439 : vector<2x96xf32>
    %441 = math.exp %440 : vector<2x96xf32>
    %cst_137 = arith.constant 1.000000e+00 : f32
    %442 = vector.broadcast %cst_137 : f32 to vector<2x96xf32>
    %443 = arith.addf %442, %441 : vector<2x96xf32>
    %444 = arith.divf %442, %443 : vector<2x96xf32>
    %445 = vector.extract_strided_slice %438 {offsets = [0, 96], sizes = [2, 32], strides = [1, 1]} : vector<2x128xf32> to vector<2x32xf32>
    %446 = math.tanh %445 : vector<2x32xf32>
    %447 = vector.extract_strided_slice %444 {offsets = [0, 0], sizes = [2, 32], strides = [1, 1]} : vector<2x96xf32> to vector<2x32xf32>
    %448 = vector.extract_strided_slice %444 {offsets = [0, 32], sizes = [2, 32], strides = [1, 1]} : vector<2x96xf32> to vector<2x32xf32>
    %449 = vector.extract_strided_slice %444 {offsets = [0, 64], sizes = [2, 32], strides = [1, 1]} : vector<2x96xf32> to vector<2x32xf32>
    %450 = arith.mulf %448, %275 : vector<2x32xf32>
    %451 = arith.mulf %447, %446 : vector<2x32xf32>
    %452 = arith.addf %450, %451 : vector<2x32xf32>
    %cst_138 = arith.constant dense<0.000000e+00> : vector<2xf32>
    %453 = vector.multi_reduction <add>, %452, %cst_138 [1] : vector<2x32xf32> to vector<2xf32>
    %454 = vector.shape_cast %453 : vector<2xf32> to vector<2x1xf32>
    %cst_139 = arith.constant 3.200000e+01 : f32
    %455 = vector.broadcast %cst_139 : f32 to vector<2x1xf32>
    %456 = arith.divf %454, %455 : vector<2x1xf32>
    %457 = vector.broadcast %456 : vector<2x1xf32> to vector<2x32xf32>
    %458 = arith.subf %452, %457 : vector<2x32xf32>
    %459 = arith.mulf %458, %458 : vector<2x32xf32>
    %cst_140 = arith.constant dense<0.000000e+00> : vector<2xf32>
    %460 = vector.multi_reduction <add>, %459, %cst_140 [1] : vector<2x32xf32> to vector<2xf32>
    %461 = vector.shape_cast %460 : vector<2xf32> to vector<2x1xf32>
    %cst_141 = arith.constant 3.200000e+01 : f32
    %462 = vector.broadcast %cst_141 : f32 to vector<2x1xf32>
    %463 = arith.divf %461, %462 : vector<2x1xf32>
    %464 = vector.broadcast %456 : vector<2x1xf32> to vector<2x32xf32>
    %465 = arith.subf %452, %464 : vector<2x32xf32>
    %cst_142 = arith.constant 9.99999974E-6 : f32
    %466 = vector.broadcast %cst_142 : f32 to vector<2x1xf32>
    %467 = arith.addf %463, %466 : vector<2x1xf32>
    %468 = math.rsqrt %467 : vector<2x1xf32>
    %469 = vector.broadcast %468 : vector<2x1xf32> to vector<2x32xf32>
    %470 = arith.mulf %465, %469 : vector<2x32xf32>
    %471 = vector.broadcast %21 : vector<1x32xf32> to vector<2x32xf32>
    %472 = arith.mulf %470, %471 : vector<2x32xf32>
    %473 = vector.broadcast %23 : vector<1x32xf32> to vector<2x32xf32>
    %474 = arith.addf %472, %473 : vector<2x32xf32>
    %475 = math.tanh %474 : vector<2x32xf32>
    %476 = arith.mulf %449, %475 : vector<2x32xf32>
    %cst_143 = arith.constant dense<0.000000e+00> : vector<2x128xf32>
    %477 = tpu.matmul %476, %4, %cst_143 {dimension_numbers = #tpu.dot_dimension_numbers<[1], [0], [0], [1], [0, 0, 1, 1], [], []>} : vector<2x32xf32>, vector<32x128xf32>, vector<2x128xf32> -> vector<2x128xf32>
    %478 = vector.broadcast %8 : vector<1x128xf32> to vector<2x128xf32>
    %479 = arith.addf %477, %478 : vector<2x128xf32>
    %cst_144 = arith.constant dense<0.000000e+00> : vector<2x128xf32>
    %480 = tpu.matmul %386, %6, %cst_144 {dimension_numbers = #tpu.dot_dimension_numbers<[1], [0], [0], [1], [0, 0, 1, 1], [], []>} : vector<2x32xf32>, vector<32x128xf32>, vector<2x128xf32> -> vector<2x128xf32>
    %481 = vector.broadcast %10 : vector<1x128xf32> to vector<2x128xf32>
    %482 = arith.addf %480, %481 : vector<2x128xf32>
    %cst_145 = arith.constant dense<0.000000e+00> : vector<2xf32>
    %483 = vector.multi_reduction <add>, %479, %cst_145 [1] : vector<2x128xf32> to vector<2xf32>
    %484 = vector.shape_cast %483 : vector<2xf32> to vector<2x1xf32>
    %cst_146 = arith.constant 1.280000e+02 : f32
    %485 = vector.broadcast %cst_146 : f32 to vector<2x1xf32>
    %486 = arith.divf %484, %485 : vector<2x1xf32>
    %487 = vector.broadcast %486 : vector<2x1xf32> to vector<2x128xf32>
    %488 = arith.subf %479, %487 : vector<2x128xf32>
    %489 = arith.mulf %488, %488 : vector<2x128xf32>
    %cst_147 = arith.constant dense<0.000000e+00> : vector<2xf32>
    %490 = vector.multi_reduction <add>, %489, %cst_147 [1] : vector<2x128xf32> to vector<2xf32>
    %491 = vector.shape_cast %490 : vector<2xf32> to vector<2x1xf32>
    %cst_148 = arith.constant 1.280000e+02 : f32
    %492 = vector.broadcast %cst_148 : f32 to vector<2x1xf32>
    %493 = arith.divf %491, %492 : vector<2x1xf32>
    %494 = vector.broadcast %486 : vector<2x1xf32> to vector<2x128xf32>
    %495 = arith.subf %479, %494 : vector<2x128xf32>
    %cst_149 = arith.constant 9.99999974E-6 : f32
    %496 = vector.broadcast %cst_149 : f32 to vector<2x1xf32>
    %497 = arith.addf %493, %496 : vector<2x1xf32>
    %498 = math.rsqrt %497 : vector<2x1xf32>
    %499 = vector.broadcast %498 : vector<2x1xf32> to vector<2x128xf32>
    %500 = arith.mulf %495, %499 : vector<2x128xf32>
    %501 = vector.broadcast %12 : vector<1x128xf32> to vector<2x128xf32>
    %502 = arith.mulf %500, %501 : vector<2x128xf32>
    %cst_150 = arith.constant dense<0.000000e+00> : vector<2xf32>
    %503 = vector.multi_reduction <add>, %482, %cst_150 [1] : vector<2x128xf32> to vector<2xf32>
    %504 = vector.shape_cast %503 : vector<2xf32> to vector<2x1xf32>
    %cst_151 = arith.constant 1.280000e+02 : f32
    %505 = vector.broadcast %cst_151 : f32 to vector<2x1xf32>
    %506 = arith.divf %504, %505 : vector<2x1xf32>
    %507 = vector.broadcast %506 : vector<2x1xf32> to vector<2x128xf32>
    %508 = arith.subf %482, %507 : vector<2x128xf32>
    %509 = arith.mulf %508, %508 : vector<2x128xf32>
    %cst_152 = arith.constant dense<0.000000e+00> : vector<2xf32>
    %510 = vector.multi_reduction <add>, %509, %cst_152 [1] : vector<2x128xf32> to vector<2xf32>
    %511 = vector.shape_cast %510 : vector<2xf32> to vector<2x1xf32>
    %cst_153 = arith.constant 1.280000e+02 : f32
    %512 = vector.broadcast %cst_153 : f32 to vector<2x1xf32>
    %513 = arith.divf %511, %512 : vector<2x1xf32>
    %514 = vector.broadcast %506 : vector<2x1xf32> to vector<2x128xf32>
    %515 = arith.subf %482, %514 : vector<2x128xf32>
    %cst_154 = arith.constant 9.99999974E-6 : f32
    %516 = vector.broadcast %cst_154 : f32 to vector<2x1xf32>
    %517 = arith.addf %513, %516 : vector<2x1xf32>
    %518 = math.rsqrt %517 : vector<2x1xf32>
    %519 = vector.broadcast %518 : vector<2x1xf32> to vector<2x128xf32>
    %520 = arith.mulf %515, %519 : vector<2x128xf32>
    %521 = vector.broadcast %14 : vector<1x128xf32> to vector<2x128xf32>
    %522 = arith.mulf %520, %521 : vector<2x128xf32>
    %523 = arith.addf %502, %522 : vector<2x128xf32>
    %524 = vector.broadcast %20 : vector<1x128xf32> to vector<2x128xf32>
    %525 = arith.addf %523, %524 : vector<2x128xf32>
    %526 = vector.extract_strided_slice %525 {offsets = [0, 0], sizes = [2, 96], strides = [1, 1]} : vector<2x128xf32> to vector<2x96xf32>
    %527 = arith.negf %526 : vector<2x96xf32>
    %528 = math.exp %527 : vector<2x96xf32>
    %cst_155 = arith.constant 1.000000e+00 : f32
    %529 = vector.broadcast %cst_155 : f32 to vector<2x96xf32>
    %530 = arith.addf %529, %528 : vector<2x96xf32>
    %531 = arith.divf %529, %530 : vector<2x96xf32>
    %532 = vector.extract_strided_slice %525 {offsets = [0, 96], sizes = [2, 32], strides = [1, 1]} : vector<2x128xf32> to vector<2x32xf32>
    %533 = math.tanh %532 : vector<2x32xf32>
    %534 = vector.extract_strided_slice %531 {offsets = [0, 0], sizes = [2, 32], strides = [1, 1]} : vector<2x96xf32> to vector<2x32xf32>
    %535 = vector.extract_strided_slice %531 {offsets = [0, 32], sizes = [2, 32], strides = [1, 1]} : vector<2x96xf32> to vector<2x32xf32>
    %536 = vector.extract_strided_slice %531 {offsets = [0, 64], sizes = [2, 32], strides = [1, 1]} : vector<2x96xf32> to vector<2x32xf32>
    %537 = arith.mulf %535, %362 : vector<2x32xf32>
    %538 = arith.mulf %534, %533 : vector<2x32xf32>
    %539 = arith.addf %537, %538 : vector<2x32xf32>
    %cst_156 = arith.constant dense<0.000000e+00> : vector<2xf32>
    %540 = vector.multi_reduction <add>, %539, %cst_156 [1] : vector<2x32xf32> to vector<2xf32>
    %541 = vector.shape_cast %540 : vector<2xf32> to vector<2x1xf32>
    %cst_157 = arith.constant 3.200000e+01 : f32
    %542 = vector.broadcast %cst_157 : f32 to vector<2x1xf32>
    %543 = arith.divf %541, %542 : vector<2x1xf32>
    %544 = vector.broadcast %543 : vector<2x1xf32> to vector<2x32xf32>
    %545 = arith.subf %539, %544 : vector<2x32xf32>
    %546 = arith.mulf %545, %545 : vector<2x32xf32>
    %cst_158 = arith.constant dense<0.000000e+00> : vector<2xf32>
    %547 = vector.multi_reduction <add>, %546, %cst_158 [1] : vector<2x32xf32> to vector<2xf32>
    %548 = vector.shape_cast %547 : vector<2xf32> to vector<2x1xf32>
    %cst_159 = arith.constant 3.200000e+01 : f32
    %549 = vector.broadcast %cst_159 : f32 to vector<2x1xf32>
    %550 = arith.divf %548, %549 : vector<2x1xf32>
    %551 = vector.broadcast %543 : vector<2x1xf32> to vector<2x32xf32>
    %552 = arith.subf %539, %551 : vector<2x32xf32>
    %cst_160 = arith.constant 9.99999974E-6 : f32
    %553 = vector.broadcast %cst_160 : f32 to vector<2x1xf32>
    %554 = arith.addf %550, %553 : vector<2x1xf32>
    %555 = math.rsqrt %554 : vector<2x1xf32>
    %556 = vector.broadcast %555 : vector<2x1xf32> to vector<2x32xf32>
    %557 = arith.mulf %552, %556 : vector<2x32xf32>
    %558 = vector.broadcast %22 : vector<1x32xf32> to vector<2x32xf32>
    %559 = arith.mulf %557, %558 : vector<2x32xf32>
    %560 = vector.broadcast %24 : vector<1x32xf32> to vector<2x32xf32>
    %561 = arith.addf %559, %560 : vector<2x32xf32>
    %562 = math.tanh %561 : vector<2x32xf32>
    %563 = arith.mulf %536, %562 : vector<2x32xf32>
    %c3_i32 = arith.constant 3 : i32
    %564 = arith.index_cast %c3_i32 : i32 to index
    %c0_161 = arith.constant 0 : index
    %c0_162 = arith.constant 0 : index
    %565 = vector.load %arg1[%564, %c0_161, %c0_162] : memref<8x2x16xf32, #tpu.memory_space<vmem>>, vector<1x2x16xf32>
    %566 = vector.shape_cast %565 : vector<1x2x16xf32> to vector<2x16xf32>
    %cst_163 = arith.constant dense<0.000000e+00> : vector<2x128xf32>
    %567 = tpu.matmul %566, %3, %cst_163 {dimension_numbers = #tpu.dot_dimension_numbers<[1], [0], [0], [1], [0, 0, 1, 1], [], []>} : vector<2x16xf32>, vector<16x128xf32>, vector<2x128xf32> -> vector<2x128xf32>
    %568 = vector.broadcast %7 : vector<1x128xf32> to vector<2x128xf32>
    %569 = arith.addf %567, %568 : vector<2x128xf32>
    %cst_164 = arith.constant dense<0.000000e+00> : vector<2x128xf32>
    %570 = tpu.matmul %476, %5, %cst_164 {dimension_numbers = #tpu.dot_dimension_numbers<[1], [0], [0], [1], [0, 0, 1, 1], [], []>} : vector<2x32xf32>, vector<32x128xf32>, vector<2x128xf32> -> vector<2x128xf32>
    %571 = vector.broadcast %9 : vector<1x128xf32> to vector<2x128xf32>
    %572 = arith.addf %570, %571 : vector<2x128xf32>
    %cst_165 = arith.constant dense<0.000000e+00> : vector<2xf32>
    %573 = vector.multi_reduction <add>, %569, %cst_165 [1] : vector<2x128xf32> to vector<2xf32>
    %574 = vector.shape_cast %573 : vector<2xf32> to vector<2x1xf32>
    %cst_166 = arith.constant 1.280000e+02 : f32
    %575 = vector.broadcast %cst_166 : f32 to vector<2x1xf32>
    %576 = arith.divf %574, %575 : vector<2x1xf32>
    %577 = vector.broadcast %576 : vector<2x1xf32> to vector<2x128xf32>
    %578 = arith.subf %569, %577 : vector<2x128xf32>
    %579 = arith.mulf %578, %578 : vector<2x128xf32>
    %cst_167 = arith.constant dense<0.000000e+00> : vector<2xf32>
    %580 = vector.multi_reduction <add>, %579, %cst_167 [1] : vector<2x128xf32> to vector<2xf32>
    %581 = vector.shape_cast %580 : vector<2xf32> to vector<2x1xf32>
    %cst_168 = arith.constant 1.280000e+02 : f32
    %582 = vector.broadcast %cst_168 : f32 to vector<2x1xf32>
    %583 = arith.divf %581, %582 : vector<2x1xf32>
    %584 = vector.broadcast %576 : vector<2x1xf32> to vector<2x128xf32>
    %585 = arith.subf %569, %584 : vector<2x128xf32>
    %cst_169 = arith.constant 9.99999974E-6 : f32
    %586 = vector.broadcast %cst_169 : f32 to vector<2x1xf32>
    %587 = arith.addf %583, %586 : vector<2x1xf32>
    %588 = math.rsqrt %587 : vector<2x1xf32>
    %589 = vector.broadcast %588 : vector<2x1xf32> to vector<2x128xf32>
    %590 = arith.mulf %585, %589 : vector<2x128xf32>
    %591 = vector.broadcast %11 : vector<1x128xf32> to vector<2x128xf32>
    %592 = arith.mulf %590, %591 : vector<2x128xf32>
    %cst_170 = arith.constant dense<0.000000e+00> : vector<2xf32>
    %593 = vector.multi_reduction <add>, %572, %cst_170 [1] : vector<2x128xf32> to vector<2xf32>
    %594 = vector.shape_cast %593 : vector<2xf32> to vector<2x1xf32>
    %cst_171 = arith.constant 1.280000e+02 : f32
    %595 = vector.broadcast %cst_171 : f32 to vector<2x1xf32>
    %596 = arith.divf %594, %595 : vector<2x1xf32>
    %597 = vector.broadcast %596 : vector<2x1xf32> to vector<2x128xf32>
    %598 = arith.subf %572, %597 : vector<2x128xf32>
    %599 = arith.mulf %598, %598 : vector<2x128xf32>
    %cst_172 = arith.constant dense<0.000000e+00> : vector<2xf32>
    %600 = vector.multi_reduction <add>, %599, %cst_172 [1] : vector<2x128xf32> to vector<2xf32>
    %601 = vector.shape_cast %600 : vector<2xf32> to vector<2x1xf32>
    %cst_173 = arith.constant 1.280000e+02 : f32
    %602 = vector.broadcast %cst_173 : f32 to vector<2x1xf32>
    %603 = arith.divf %601, %602 : vector<2x1xf32>
    %604 = vector.broadcast %596 : vector<2x1xf32> to vector<2x128xf32>
    %605 = arith.subf %572, %604 : vector<2x128xf32>
    %cst_174 = arith.constant 9.99999974E-6 : f32
    %606 = vector.broadcast %cst_174 : f32 to vector<2x1xf32>
    %607 = arith.addf %603, %606 : vector<2x1xf32>
    %608 = math.rsqrt %607 : vector<2x1xf32>
    %609 = vector.broadcast %608 : vector<2x1xf32> to vector<2x128xf32>
    %610 = arith.mulf %605, %609 : vector<2x128xf32>
    %611 = vector.broadcast %13 : vector<1x128xf32> to vector<2x128xf32>
    %612 = arith.mulf %610, %611 : vector<2x128xf32>
    %613 = arith.addf %592, %612 : vector<2x128xf32>
    %614 = vector.broadcast %17 : vector<1x128xf32> to vector<2x128xf32>
    %615 = arith.addf %613, %614 : vector<2x128xf32>
    %616 = vector.extract_strided_slice %615 {offsets = [0, 0], sizes = [2, 96], strides = [1, 1]} : vector<2x128xf32> to vector<2x96xf32>
    %617 = arith.negf %616 : vector<2x96xf32>
    %618 = math.exp %617 : vector<2x96xf32>
    %cst_175 = arith.constant 1.000000e+00 : f32
    %619 = vector.broadcast %cst_175 : f32 to vector<2x96xf32>
    %620 = arith.addf %619, %618 : vector<2x96xf32>
    %621 = arith.divf %619, %620 : vector<2x96xf32>
    %622 = vector.extract_strided_slice %615 {offsets = [0, 96], sizes = [2, 32], strides = [1, 1]} : vector<2x128xf32> to vector<2x32xf32>
    %623 = math.tanh %622 : vector<2x32xf32>
    %624 = vector.extract_strided_slice %621 {offsets = [0, 0], sizes = [2, 32], strides = [1, 1]} : vector<2x96xf32> to vector<2x32xf32>
    %625 = vector.extract_strided_slice %621 {offsets = [0, 32], sizes = [2, 32], strides = [1, 1]} : vector<2x96xf32> to vector<2x32xf32>
    %626 = vector.extract_strided_slice %621 {offsets = [0, 64], sizes = [2, 32], strides = [1, 1]} : vector<2x96xf32> to vector<2x32xf32>
    %627 = arith.mulf %625, %452 : vector<2x32xf32>
    %628 = arith.mulf %624, %623 : vector<2x32xf32>
    %629 = arith.addf %627, %628 : vector<2x32xf32>
    %cst_176 = arith.constant dense<0.000000e+00> : vector<2xf32>
    %630 = vector.multi_reduction <add>, %629, %cst_176 [1] : vector<2x32xf32> to vector<2xf32>
    %631 = vector.shape_cast %630 : vector<2xf32> to vector<2x1xf32>
    %cst_177 = arith.constant 3.200000e+01 : f32
    %632 = vector.broadcast %cst_177 : f32 to vector<2x1xf32>
    %633 = arith.divf %631, %632 : vector<2x1xf32>
    %634 = vector.broadcast %633 : vector<2x1xf32> to vector<2x32xf32>
    %635 = arith.subf %629, %634 : vector<2x32xf32>
    %636 = arith.mulf %635, %635 : vector<2x32xf32>
    %cst_178 = arith.constant dense<0.000000e+00> : vector<2xf32>
    %637 = vector.multi_reduction <add>, %636, %cst_178 [1] : vector<2x32xf32> to vector<2xf32>
    %638 = vector.shape_cast %637 : vector<2xf32> to vector<2x1xf32>
    %cst_179 = arith.constant 3.200000e+01 : f32
    %639 = vector.broadcast %cst_179 : f32 to vector<2x1xf32>
    %640 = arith.divf %638, %639 : vector<2x1xf32>
    %641 = vector.broadcast %633 : vector<2x1xf32> to vector<2x32xf32>
    %642 = arith.subf %629, %641 : vector<2x32xf32>
    %cst_180 = arith.constant 9.99999974E-6 : f32
    %643 = vector.broadcast %cst_180 : f32 to vector<2x1xf32>
    %644 = arith.addf %640, %643 : vector<2x1xf32>
    %645 = math.rsqrt %644 : vector<2x1xf32>
    %646 = vector.broadcast %645 : vector<2x1xf32> to vector<2x32xf32>
    %647 = arith.mulf %642, %646 : vector<2x32xf32>
    %648 = vector.broadcast %21 : vector<1x32xf32> to vector<2x32xf32>
    %649 = arith.mulf %647, %648 : vector<2x32xf32>
    %650 = vector.broadcast %23 : vector<1x32xf32> to vector<2x32xf32>
    %651 = arith.addf %649, %650 : vector<2x32xf32>
    %652 = math.tanh %651 : vector<2x32xf32>
    %653 = arith.mulf %626, %652 : vector<2x32xf32>
    %cst_181 = arith.constant dense<0.000000e+00> : vector<2x128xf32>
    %654 = tpu.matmul %653, %4, %cst_181 {dimension_numbers = #tpu.dot_dimension_numbers<[1], [0], [0], [1], [0, 0, 1, 1], [], []>} : vector<2x32xf32>, vector<32x128xf32>, vector<2x128xf32> -> vector<2x128xf32>
    %655 = vector.broadcast %8 : vector<1x128xf32> to vector<2x128xf32>
    %656 = arith.addf %654, %655 : vector<2x128xf32>
    %cst_182 = arith.constant dense<0.000000e+00> : vector<2x128xf32>
    %657 = tpu.matmul %563, %6, %cst_182 {dimension_numbers = #tpu.dot_dimension_numbers<[1], [0], [0], [1], [0, 0, 1, 1], [], []>} : vector<2x32xf32>, vector<32x128xf32>, vector<2x128xf32> -> vector<2x128xf32>
    %658 = vector.broadcast %10 : vector<1x128xf32> to vector<2x128xf32>
    %659 = arith.addf %657, %658 : vector<2x128xf32>
    %cst_183 = arith.constant dense<0.000000e+00> : vector<2xf32>
    %660 = vector.multi_reduction <add>, %656, %cst_183 [1] : vector<2x128xf32> to vector<2xf32>
    %661 = vector.shape_cast %660 : vector<2xf32> to vector<2x1xf32>
    %cst_184 = arith.constant 1.280000e+02 : f32
    %662 = vector.broadcast %cst_184 : f32 to vector<2x1xf32>
    %663 = arith.divf %661, %662 : vector<2x1xf32>
    %664 = vector.broadcast %663 : vector<2x1xf32> to vector<2x128xf32>
    %665 = arith.subf %656, %664 : vector<2x128xf32>
    %666 = arith.mulf %665, %665 : vector<2x128xf32>
    %cst_185 = arith.constant dense<0.000000e+00> : vector<2xf32>
    %667 = vector.multi_reduction <add>, %666, %cst_185 [1] : vector<2x128xf32> to vector<2xf32>
    %668 = vector.shape_cast %667 : vector<2xf32> to vector<2x1xf32>
    %cst_186 = arith.constant 1.280000e+02 : f32
    %669 = vector.broadcast %cst_186 : f32 to vector<2x1xf32>
    %670 = arith.divf %668, %669 : vector<2x1xf32>
    %671 = vector.broadcast %663 : vector<2x1xf32> to vector<2x128xf32>
    %672 = arith.subf %656, %671 : vector<2x128xf32>
    %cst_187 = arith.constant 9.99999974E-6 : f32
    %673 = vector.broadcast %cst_187 : f32 to vector<2x1xf32>
    %674 = arith.addf %670, %673 : vector<2x1xf32>
    %675 = math.rsqrt %674 : vector<2x1xf32>
    %676 = vector.broadcast %675 : vector<2x1xf32> to vector<2x128xf32>
    %677 = arith.mulf %672, %676 : vector<2x128xf32>
    %678 = vector.broadcast %12 : vector<1x128xf32> to vector<2x128xf32>
    %679 = arith.mulf %677, %678 : vector<2x128xf32>
    %cst_188 = arith.constant dense<0.000000e+00> : vector<2xf32>
    %680 = vector.multi_reduction <add>, %659, %cst_188 [1] : vector<2x128xf32> to vector<2xf32>
    %681 = vector.shape_cast %680 : vector<2xf32> to vector<2x1xf32>
    %cst_189 = arith.constant 1.280000e+02 : f32
    %682 = vector.broadcast %cst_189 : f32 to vector<2x1xf32>
    %683 = arith.divf %681, %682 : vector<2x1xf32>
    %684 = vector.broadcast %683 : vector<2x1xf32> to vector<2x128xf32>
    %685 = arith.subf %659, %684 : vector<2x128xf32>
    %686 = arith.mulf %685, %685 : vector<2x128xf32>
    %cst_190 = arith.constant dense<0.000000e+00> : vector<2xf32>
    %687 = vector.multi_reduction <add>, %686, %cst_190 [1] : vector<2x128xf32> to vector<2xf32>
    %688 = vector.shape_cast %687 : vector<2xf32> to vector<2x1xf32>
    %cst_191 = arith.constant 1.280000e+02 : f32
    %689 = vector.broadcast %cst_191 : f32 to vector<2x1xf32>
    %690 = arith.divf %688, %689 : vector<2x1xf32>
    %691 = vector.broadcast %683 : vector<2x1xf32> to vector<2x128xf32>
    %692 = arith.subf %659, %691 : vector<2x128xf32>
    %cst_192 = arith.constant 9.99999974E-6 : f32
    %693 = vector.broadcast %cst_192 : f32 to vector<2x1xf32>
    %694 = arith.addf %690, %693 : vector<2x1xf32>
    %695 = math.rsqrt %694 : vector<2x1xf32>
    %696 = vector.broadcast %695 : vector<2x1xf32> to vector<2x128xf32>
    %697 = arith.mulf %692, %696 : vector<2x128xf32>
    %698 = vector.broadcast %14 : vector<1x128xf32> to vector<2x128xf32>
    %699 = arith.mulf %697, %698 : vector<2x128xf32>
    %700 = arith.addf %679, %699 : vector<2x128xf32>
    %701 = vector.broadcast %20 : vector<1x128xf32> to vector<2x128xf32>
    %702 = arith.addf %700, %701 : vector<2x128xf32>
    %703 = vector.extract_strided_slice %702 {offsets = [0, 0], sizes = [2, 96], strides = [1, 1]} : vector<2x128xf32> to vector<2x96xf32>
    %704 = arith.negf %703 : vector<2x96xf32>
    %705 = math.exp %704 : vector<2x96xf32>
    %cst_193 = arith.constant 1.000000e+00 : f32
    %706 = vector.broadcast %cst_193 : f32 to vector<2x96xf32>
    %707 = arith.addf %706, %705 : vector<2x96xf32>
    %708 = arith.divf %706, %707 : vector<2x96xf32>
    %709 = vector.extract_strided_slice %702 {offsets = [0, 96], sizes = [2, 32], strides = [1, 1]} : vector<2x128xf32> to vector<2x32xf32>
    %710 = math.tanh %709 : vector<2x32xf32>
    %711 = vector.extract_strided_slice %708 {offsets = [0, 0], sizes = [2, 32], strides = [1, 1]} : vector<2x96xf32> to vector<2x32xf32>
    %712 = vector.extract_strided_slice %708 {offsets = [0, 32], sizes = [2, 32], strides = [1, 1]} : vector<2x96xf32> to vector<2x32xf32>
    %713 = vector.extract_strided_slice %708 {offsets = [0, 64], sizes = [2, 32], strides = [1, 1]} : vector<2x96xf32> to vector<2x32xf32>
    %714 = arith.mulf %712, %539 : vector<2x32xf32>
    %715 = arith.mulf %711, %710 : vector<2x32xf32>
    %716 = arith.addf %714, %715 : vector<2x32xf32>
    %cst_194 = arith.constant dense<0.000000e+00> : vector<2xf32>
    %717 = vector.multi_reduction <add>, %716, %cst_194 [1] : vector<2x32xf32> to vector<2xf32>
    %718 = vector.shape_cast %717 : vector<2xf32> to vector<2x1xf32>
    %cst_195 = arith.constant 3.200000e+01 : f32
    %719 = vector.broadcast %cst_195 : f32 to vector<2x1xf32>
    %720 = arith.divf %718, %719 : vector<2x1xf32>
    %721 = vector.broadcast %720 : vector<2x1xf32> to vector<2x32xf32>
    %722 = arith.subf %716, %721 : vector<2x32xf32>
    %723 = arith.mulf %722, %722 : vector<2x32xf32>
    %cst_196 = arith.constant dense<0.000000e+00> : vector<2xf32>
    %724 = vector.multi_reduction <add>, %723, %cst_196 [1] : vector<2x32xf32> to vector<2xf32>
    %725 = vector.shape_cast %724 : vector<2xf32> to vector<2x1xf32>
    %cst_197 = arith.constant 3.200000e+01 : f32
    %726 = vector.broadcast %cst_197 : f32 to vector<2x1xf32>
    %727 = arith.divf %725, %726 : vector<2x1xf32>
    %728 = vector.broadcast %720 : vector<2x1xf32> to vector<2x32xf32>
    %729 = arith.subf %716, %728 : vector<2x32xf32>
    %cst_198 = arith.constant 9.99999974E-6 : f32
    %730 = vector.broadcast %cst_198 : f32 to vector<2x1xf32>
    %731 = arith.addf %727, %730 : vector<2x1xf32>
    %732 = math.rsqrt %731 : vector<2x1xf32>
    %733 = vector.broadcast %732 : vector<2x1xf32> to vector<2x32xf32>
    %734 = arith.mulf %729, %733 : vector<2x32xf32>
    %735 = vector.broadcast %22 : vector<1x32xf32> to vector<2x32xf32>
    %736 = arith.mulf %734, %735 : vector<2x32xf32>
    %737 = vector.broadcast %24 : vector<1x32xf32> to vector<2x32xf32>
    %738 = arith.addf %736, %737 : vector<2x32xf32>
    %739 = math.tanh %738 : vector<2x32xf32>
    %740 = arith.mulf %713, %739 : vector<2x32xf32>
    %c4_i32 = arith.constant 4 : i32
    %741 = arith.index_cast %c4_i32 : i32 to index
    %c0_199 = arith.constant 0 : index
    %c0_200 = arith.constant 0 : index
    %742 = vector.load %arg1[%741, %c0_199, %c0_200] : memref<8x2x16xf32, #tpu.memory_space<vmem>>, vector<1x2x16xf32>
    %743 = vector.shape_cast %742 : vector<1x2x16xf32> to vector<2x16xf32>
    %cst_201 = arith.constant dense<0.000000e+00> : vector<2x128xf32>
    %744 = tpu.matmul %743, %3, %cst_201 {dimension_numbers = #tpu.dot_dimension_numbers<[1], [0], [0], [1], [0, 0, 1, 1], [], []>} : vector<2x16xf32>, vector<16x128xf32>, vector<2x128xf32> -> vector<2x128xf32>
    %745 = vector.broadcast %7 : vector<1x128xf32> to vector<2x128xf32>
    %746 = arith.addf %744, %745 : vector<2x128xf32>
    %cst_202 = arith.constant dense<0.000000e+00> : vector<2x128xf32>
    %747 = tpu.matmul %653, %5, %cst_202 {dimension_numbers = #tpu.dot_dimension_numbers<[1], [0], [0], [1], [0, 0, 1, 1], [], []>} : vector<2x32xf32>, vector<32x128xf32>, vector<2x128xf32> -> vector<2x128xf32>
    %748 = vector.broadcast %9 : vector<1x128xf32> to vector<2x128xf32>
    %749 = arith.addf %747, %748 : vector<2x128xf32>
    %cst_203 = arith.constant dense<0.000000e+00> : vector<2xf32>
    %750 = vector.multi_reduction <add>, %746, %cst_203 [1] : vector<2x128xf32> to vector<2xf32>
    %751 = vector.shape_cast %750 : vector<2xf32> to vector<2x1xf32>
    %cst_204 = arith.constant 1.280000e+02 : f32
    %752 = vector.broadcast %cst_204 : f32 to vector<2x1xf32>
    %753 = arith.divf %751, %752 : vector<2x1xf32>
    %754 = vector.broadcast %753 : vector<2x1xf32> to vector<2x128xf32>
    %755 = arith.subf %746, %754 : vector<2x128xf32>
    %756 = arith.mulf %755, %755 : vector<2x128xf32>
    %cst_205 = arith.constant dense<0.000000e+00> : vector<2xf32>
    %757 = vector.multi_reduction <add>, %756, %cst_205 [1] : vector<2x128xf32> to vector<2xf32>
    %758 = vector.shape_cast %757 : vector<2xf32> to vector<2x1xf32>
    %cst_206 = arith.constant 1.280000e+02 : f32
    %759 = vector.broadcast %cst_206 : f32 to vector<2x1xf32>
    %760 = arith.divf %758, %759 : vector<2x1xf32>
    %761 = vector.broadcast %753 : vector<2x1xf32> to vector<2x128xf32>
    %762 = arith.subf %746, %761 : vector<2x128xf32>
    %cst_207 = arith.constant 9.99999974E-6 : f32
    %763 = vector.broadcast %cst_207 : f32 to vector<2x1xf32>
    %764 = arith.addf %760, %763 : vector<2x1xf32>
    %765 = math.rsqrt %764 : vector<2x1xf32>
    %766 = vector.broadcast %765 : vector<2x1xf32> to vector<2x128xf32>
    %767 = arith.mulf %762, %766 : vector<2x128xf32>
    %768 = vector.broadcast %11 : vector<1x128xf32> to vector<2x128xf32>
    %769 = arith.mulf %767, %768 : vector<2x128xf32>
    %cst_208 = arith.constant dense<0.000000e+00> : vector<2xf32>
    %770 = vector.multi_reduction <add>, %749, %cst_208 [1] : vector<2x128xf32> to vector<2xf32>
    %771 = vector.shape_cast %770 : vector<2xf32> to vector<2x1xf32>
    %cst_209 = arith.constant 1.280000e+02 : f32
    %772 = vector.broadcast %cst_209 : f32 to vector<2x1xf32>
    %773 = arith.divf %771, %772 : vector<2x1xf32>
    %774 = vector.broadcast %773 : vector<2x1xf32> to vector<2x128xf32>
    %775 = arith.subf %749, %774 : vector<2x128xf32>
    %776 = arith.mulf %775, %775 : vector<2x128xf32>
    %cst_210 = arith.constant dense<0.000000e+00> : vector<2xf32>
    %777 = vector.multi_reduction <add>, %776, %cst_210 [1] : vector<2x128xf32> to vector<2xf32>
    %778 = vector.shape_cast %777 : vector<2xf32> to vector<2x1xf32>
    %cst_211 = arith.constant 1.280000e+02 : f32
    %779 = vector.broadcast %cst_211 : f32 to vector<2x1xf32>
    %780 = arith.divf %778, %779 : vector<2x1xf32>
    %781 = vector.broadcast %773 : vector<2x1xf32> to vector<2x128xf32>
    %782 = arith.subf %749, %781 : vector<2x128xf32>
    %cst_212 = arith.constant 9.99999974E-6 : f32
    %783 = vector.broadcast %cst_212 : f32 to vector<2x1xf32>
    %784 = arith.addf %780, %783 : vector<2x1xf32>
    %785 = math.rsqrt %784 : vector<2x1xf32>
    %786 = vector.broadcast %785 : vector<2x1xf32> to vector<2x128xf32>
    %787 = arith.mulf %782, %786 : vector<2x128xf32>
    %788 = vector.broadcast %13 : vector<1x128xf32> to vector<2x128xf32>
    %789 = arith.mulf %787, %788 : vector<2x128xf32>
    %790 = arith.addf %769, %789 : vector<2x128xf32>
    %791 = vector.broadcast %17 : vector<1x128xf32> to vector<2x128xf32>
    %792 = arith.addf %790, %791 : vector<2x128xf32>
    %793 = vector.extract_strided_slice %792 {offsets = [0, 0], sizes = [2, 96], strides = [1, 1]} : vector<2x128xf32> to vector<2x96xf32>
    %794 = arith.negf %793 : vector<2x96xf32>
    %795 = math.exp %794 : vector<2x96xf32>
    %cst_213 = arith.constant 1.000000e+00 : f32
    %796 = vector.broadcast %cst_213 : f32 to vector<2x96xf32>
    %797 = arith.addf %796, %795 : vector<2x96xf32>
    %798 = arith.divf %796, %797 : vector<2x96xf32>
    %799 = vector.extract_strided_slice %792 {offsets = [0, 96], sizes = [2, 32], strides = [1, 1]} : vector<2x128xf32> to vector<2x32xf32>
    %800 = math.tanh %799 : vector<2x32xf32>
    %801 = vector.extract_strided_slice %798 {offsets = [0, 0], sizes = [2, 32], strides = [1, 1]} : vector<2x96xf32> to vector<2x32xf32>
    %802 = vector.extract_strided_slice %798 {offsets = [0, 32], sizes = [2, 32], strides = [1, 1]} : vector<2x96xf32> to vector<2x32xf32>
    %803 = vector.extract_strided_slice %798 {offsets = [0, 64], sizes = [2, 32], strides = [1, 1]} : vector<2x96xf32> to vector<2x32xf32>
    %804 = arith.mulf %802, %629 : vector<2x32xf32>
    %805 = arith.mulf %801, %800 : vector<2x32xf32>
    %806 = arith.addf %804, %805 : vector<2x32xf32>
    %cst_214 = arith.constant dense<0.000000e+00> : vector<2xf32>
    %807 = vector.multi_reduction <add>, %806, %cst_214 [1] : vector<2x32xf32> to vector<2xf32>
    %808 = vector.shape_cast %807 : vector<2xf32> to vector<2x1xf32>
    %cst_215 = arith.constant 3.200000e+01 : f32
    %809 = vector.broadcast %cst_215 : f32 to vector<2x1xf32>
    %810 = arith.divf %808, %809 : vector<2x1xf32>
    %811 = vector.broadcast %810 : vector<2x1xf32> to vector<2x32xf32>
    %812 = arith.subf %806, %811 : vector<2x32xf32>
    %813 = arith.mulf %812, %812 : vector<2x32xf32>
    %cst_216 = arith.constant dense<0.000000e+00> : vector<2xf32>
    %814 = vector.multi_reduction <add>, %813, %cst_216 [1] : vector<2x32xf32> to vector<2xf32>
    %815 = vector.shape_cast %814 : vector<2xf32> to vector<2x1xf32>
    %cst_217 = arith.constant 3.200000e+01 : f32
    %816 = vector.broadcast %cst_217 : f32 to vector<2x1xf32>
    %817 = arith.divf %815, %816 : vector<2x1xf32>
    %818 = vector.broadcast %810 : vector<2x1xf32> to vector<2x32xf32>
    %819 = arith.subf %806, %818 : vector<2x32xf32>
    %cst_218 = arith.constant 9.99999974E-6 : f32
    %820 = vector.broadcast %cst_218 : f32 to vector<2x1xf32>
    %821 = arith.addf %817, %820 : vector<2x1xf32>
    %822 = math.rsqrt %821 : vector<2x1xf32>
    %823 = vector.broadcast %822 : vector<2x1xf32> to vector<2x32xf32>
    %824 = arith.mulf %819, %823 : vector<2x32xf32>
    %825 = vector.broadcast %21 : vector<1x32xf32> to vector<2x32xf32>
    %826 = arith.mulf %824, %825 : vector<2x32xf32>
    %827 = vector.broadcast %23 : vector<1x32xf32> to vector<2x32xf32>
    %828 = arith.addf %826, %827 : vector<2x32xf32>
    %829 = math.tanh %828 : vector<2x32xf32>
    %830 = arith.mulf %803, %829 : vector<2x32xf32>
    %cst_219 = arith.constant dense<0.000000e+00> : vector<2x128xf32>
    %831 = tpu.matmul %830, %4, %cst_219 {dimension_numbers = #tpu.dot_dimension_numbers<[1], [0], [0], [1], [0, 0, 1, 1], [], []>} : vector<2x32xf32>, vector<32x128xf32>, vector<2x128xf32> -> vector<2x128xf32>
    %832 = vector.broadcast %8 : vector<1x128xf32> to vector<2x128xf32>
    %833 = arith.addf %831, %832 : vector<2x128xf32>
    %cst_220 = arith.constant dense<0.000000e+00> : vector<2x128xf32>
    %834 = tpu.matmul %740, %6, %cst_220 {dimension_numbers = #tpu.dot_dimension_numbers<[1], [0], [0], [1], [0, 0, 1, 1], [], []>} : vector<2x32xf32>, vector<32x128xf32>, vector<2x128xf32> -> vector<2x128xf32>
    %835 = vector.broadcast %10 : vector<1x128xf32> to vector<2x128xf32>
    %836 = arith.addf %834, %835 : vector<2x128xf32>
    %cst_221 = arith.constant dense<0.000000e+00> : vector<2xf32>
    %837 = vector.multi_reduction <add>, %833, %cst_221 [1] : vector<2x128xf32> to vector<2xf32>
    %838 = vector.shape_cast %837 : vector<2xf32> to vector<2x1xf32>
    %cst_222 = arith.constant 1.280000e+02 : f32
    %839 = vector.broadcast %cst_222 : f32 to vector<2x1xf32>
    %840 = arith.divf %838, %839 : vector<2x1xf32>
    %841 = vector.broadcast %840 : vector<2x1xf32> to vector<2x128xf32>
    %842 = arith.subf %833, %841 : vector<2x128xf32>
    %843 = arith.mulf %842, %842 : vector<2x128xf32>
    %cst_223 = arith.constant dense<0.000000e+00> : vector<2xf32>
    %844 = vector.multi_reduction <add>, %843, %cst_223 [1] : vector<2x128xf32> to vector<2xf32>
    %845 = vector.shape_cast %844 : vector<2xf32> to vector<2x1xf32>
    %cst_224 = arith.constant 1.280000e+02 : f32
    %846 = vector.broadcast %cst_224 : f32 to vector<2x1xf32>
    %847 = arith.divf %845, %846 : vector<2x1xf32>
    %848 = vector.broadcast %840 : vector<2x1xf32> to vector<2x128xf32>
    %849 = arith.subf %833, %848 : vector<2x128xf32>
    %cst_225 = arith.constant 9.99999974E-6 : f32
    %850 = vector.broadcast %cst_225 : f32 to vector<2x1xf32>
    %851 = arith.addf %847, %850 : vector<2x1xf32>
    %852 = math.rsqrt %851 : vector<2x1xf32>
    %853 = vector.broadcast %852 : vector<2x1xf32> to vector<2x128xf32>
    %854 = arith.mulf %849, %853 : vector<2x128xf32>
    %855 = vector.broadcast %12 : vector<1x128xf32> to vector<2x128xf32>
    %856 = arith.mulf %854, %855 : vector<2x128xf32>
    %cst_226 = arith.constant dense<0.000000e+00> : vector<2xf32>
    %857 = vector.multi_reduction <add>, %836, %cst_226 [1] : vector<2x128xf32> to vector<2xf32>
    %858 = vector.shape_cast %857 : vector<2xf32> to vector<2x1xf32>
    %cst_227 = arith.constant 1.280000e+02 : f32
    %859 = vector.broadcast %cst_227 : f32 to vector<2x1xf32>
    %860 = arith.divf %858, %859 : vector<2x1xf32>
    %861 = vector.broadcast %860 : vector<2x1xf32> to vector<2x128xf32>
    %862 = arith.subf %836, %861 : vector<2x128xf32>
    %863 = arith.mulf %862, %862 : vector<2x128xf32>
    %cst_228 = arith.constant dense<0.000000e+00> : vector<2xf32>
    %864 = vector.multi_reduction <add>, %863, %cst_228 [1] : vector<2x128xf32> to vector<2xf32>
    %865 = vector.shape_cast %864 : vector<2xf32> to vector<2x1xf32>
    %cst_229 = arith.constant 1.280000e+02 : f32
    %866 = vector.broadcast %cst_229 : f32 to vector<2x1xf32>
    %867 = arith.divf %865, %866 : vector<2x1xf32>
    %868 = vector.broadcast %860 : vector<2x1xf32> to vector<2x128xf32>
    %869 = arith.subf %836, %868 : vector<2x128xf32>
    %cst_230 = arith.constant 9.99999974E-6 : f32
    %870 = vector.broadcast %cst_230 : f32 to vector<2x1xf32>
    %871 = arith.addf %867, %870 : vector<2x1xf32>
    %872 = math.rsqrt %871 : vector<2x1xf32>
    %873 = vector.broadcast %872 : vector<2x1xf32> to vector<2x128xf32>
    %874 = arith.mulf %869, %873 : vector<2x128xf32>
    %875 = vector.broadcast %14 : vector<1x128xf32> to vector<2x128xf32>
    %876 = arith.mulf %874, %875 : vector<2x128xf32>
    %877 = arith.addf %856, %876 : vector<2x128xf32>
    %878 = vector.broadcast %20 : vector<1x128xf32> to vector<2x128xf32>
    %879 = arith.addf %877, %878 : vector<2x128xf32>
    %880 = vector.extract_strided_slice %879 {offsets = [0, 0], sizes = [2, 96], strides = [1, 1]} : vector<2x128xf32> to vector<2x96xf32>
    %881 = arith.negf %880 : vector<2x96xf32>
    %882 = math.exp %881 : vector<2x96xf32>
    %cst_231 = arith.constant 1.000000e+00 : f32
    %883 = vector.broadcast %cst_231 : f32 to vector<2x96xf32>
    %884 = arith.addf %883, %882 : vector<2x96xf32>
    %885 = arith.divf %883, %884 : vector<2x96xf32>
    %886 = vector.extract_strided_slice %879 {offsets = [0, 96], sizes = [2, 32], strides = [1, 1]} : vector<2x128xf32> to vector<2x32xf32>
    %887 = math.tanh %886 : vector<2x32xf32>
    %888 = vector.extract_strided_slice %885 {offsets = [0, 0], sizes = [2, 32], strides = [1, 1]} : vector<2x96xf32> to vector<2x32xf32>
    %889 = vector.extract_strided_slice %885 {offsets = [0, 32], sizes = [2, 32], strides = [1, 1]} : vector<2x96xf32> to vector<2x32xf32>
    %890 = vector.extract_strided_slice %885 {offsets = [0, 64], sizes = [2, 32], strides = [1, 1]} : vector<2x96xf32> to vector<2x32xf32>
    %891 = arith.mulf %889, %716 : vector<2x32xf32>
    %892 = arith.mulf %888, %887 : vector<2x32xf32>
    %893 = arith.addf %891, %892 : vector<2x32xf32>
    %cst_232 = arith.constant dense<0.000000e+00> : vector<2xf32>
    %894 = vector.multi_reduction <add>, %893, %cst_232 [1] : vector<2x32xf32> to vector<2xf32>
    %895 = vector.shape_cast %894 : vector<2xf32> to vector<2x1xf32>
    %cst_233 = arith.constant 3.200000e+01 : f32
    %896 = vector.broadcast %cst_233 : f32 to vector<2x1xf32>
    %897 = arith.divf %895, %896 : vector<2x1xf32>
    %898 = vector.broadcast %897 : vector<2x1xf32> to vector<2x32xf32>
    %899 = arith.subf %893, %898 : vector<2x32xf32>
    %900 = arith.mulf %899, %899 : vector<2x32xf32>
    %cst_234 = arith.constant dense<0.000000e+00> : vector<2xf32>
    %901 = vector.multi_reduction <add>, %900, %cst_234 [1] : vector<2x32xf32> to vector<2xf32>
    %902 = vector.shape_cast %901 : vector<2xf32> to vector<2x1xf32>
    %cst_235 = arith.constant 3.200000e+01 : f32
    %903 = vector.broadcast %cst_235 : f32 to vector<2x1xf32>
    %904 = arith.divf %902, %903 : vector<2x1xf32>
    %905 = vector.broadcast %897 : vector<2x1xf32> to vector<2x32xf32>
    %906 = arith.subf %893, %905 : vector<2x32xf32>
    %cst_236 = arith.constant 9.99999974E-6 : f32
    %907 = vector.broadcast %cst_236 : f32 to vector<2x1xf32>
    %908 = arith.addf %904, %907 : vector<2x1xf32>
    %909 = math.rsqrt %908 : vector<2x1xf32>
    %910 = vector.broadcast %909 : vector<2x1xf32> to vector<2x32xf32>
    %911 = arith.mulf %906, %910 : vector<2x32xf32>
    %912 = vector.broadcast %22 : vector<1x32xf32> to vector<2x32xf32>
    %913 = arith.mulf %911, %912 : vector<2x32xf32>
    %914 = vector.broadcast %24 : vector<1x32xf32> to vector<2x32xf32>
    %915 = arith.addf %913, %914 : vector<2x32xf32>
    %916 = math.tanh %915 : vector<2x32xf32>
    %917 = arith.mulf %890, %916 : vector<2x32xf32>
    %c5_i32 = arith.constant 5 : i32
    %918 = arith.index_cast %c5_i32 : i32 to index
    %c0_237 = arith.constant 0 : index
    %c0_238 = arith.constant 0 : index
    %919 = vector.load %arg1[%918, %c0_237, %c0_238] : memref<8x2x16xf32, #tpu.memory_space<vmem>>, vector<1x2x16xf32>
    %920 = vector.shape_cast %919 : vector<1x2x16xf32> to vector<2x16xf32>
    %cst_239 = arith.constant dense<0.000000e+00> : vector<2x128xf32>
    %921 = tpu.matmul %920, %3, %cst_239 {dimension_numbers = #tpu.dot_dimension_numbers<[1], [0], [0], [1], [0, 0, 1, 1], [], []>} : vector<2x16xf32>, vector<16x128xf32>, vector<2x128xf32> -> vector<2x128xf32>
    %922 = vector.broadcast %7 : vector<1x128xf32> to vector<2x128xf32>
    %923 = arith.addf %921, %922 : vector<2x128xf32>
    %cst_240 = arith.constant dense<0.000000e+00> : vector<2x128xf32>
    %924 = tpu.matmul %830, %5, %cst_240 {dimension_numbers = #tpu.dot_dimension_numbers<[1], [0], [0], [1], [0, 0, 1, 1], [], []>} : vector<2x32xf32>, vector<32x128xf32>, vector<2x128xf32> -> vector<2x128xf32>
    %925 = vector.broadcast %9 : vector<1x128xf32> to vector<2x128xf32>
    %926 = arith.addf %924, %925 : vector<2x128xf32>
    %cst_241 = arith.constant dense<0.000000e+00> : vector<2xf32>
    %927 = vector.multi_reduction <add>, %923, %cst_241 [1] : vector<2x128xf32> to vector<2xf32>
    %928 = vector.shape_cast %927 : vector<2xf32> to vector<2x1xf32>
    %cst_242 = arith.constant 1.280000e+02 : f32
    %929 = vector.broadcast %cst_242 : f32 to vector<2x1xf32>
    %930 = arith.divf %928, %929 : vector<2x1xf32>
    %931 = vector.broadcast %930 : vector<2x1xf32> to vector<2x128xf32>
    %932 = arith.subf %923, %931 : vector<2x128xf32>
    %933 = arith.mulf %932, %932 : vector<2x128xf32>
    %cst_243 = arith.constant dense<0.000000e+00> : vector<2xf32>
    %934 = vector.multi_reduction <add>, %933, %cst_243 [1] : vector<2x128xf32> to vector<2xf32>
    %935 = vector.shape_cast %934 : vector<2xf32> to vector<2x1xf32>
    %cst_244 = arith.constant 1.280000e+02 : f32
    %936 = vector.broadcast %cst_244 : f32 to vector<2x1xf32>
    %937 = arith.divf %935, %936 : vector<2x1xf32>
    %938 = vector.broadcast %930 : vector<2x1xf32> to vector<2x128xf32>
    %939 = arith.subf %923, %938 : vector<2x128xf32>
    %cst_245 = arith.constant 9.99999974E-6 : f32
    %940 = vector.broadcast %cst_245 : f32 to vector<2x1xf32>
    %941 = arith.addf %937, %940 : vector<2x1xf32>
    %942 = math.rsqrt %941 : vector<2x1xf32>
    %943 = vector.broadcast %942 : vector<2x1xf32> to vector<2x128xf32>
    %944 = arith.mulf %939, %943 : vector<2x128xf32>
    %945 = vector.broadcast %11 : vector<1x128xf32> to vector<2x128xf32>
    %946 = arith.mulf %944, %945 : vector<2x128xf32>
    %cst_246 = arith.constant dense<0.000000e+00> : vector<2xf32>
    %947 = vector.multi_reduction <add>, %926, %cst_246 [1] : vector<2x128xf32> to vector<2xf32>
    %948 = vector.shape_cast %947 : vector<2xf32> to vector<2x1xf32>
    %cst_247 = arith.constant 1.280000e+02 : f32
    %949 = vector.broadcast %cst_247 : f32 to vector<2x1xf32>
    %950 = arith.divf %948, %949 : vector<2x1xf32>
    %951 = vector.broadcast %950 : vector<2x1xf32> to vector<2x128xf32>
    %952 = arith.subf %926, %951 : vector<2x128xf32>
    %953 = arith.mulf %952, %952 : vector<2x128xf32>
    %cst_248 = arith.constant dense<0.000000e+00> : vector<2xf32>
    %954 = vector.multi_reduction <add>, %953, %cst_248 [1] : vector<2x128xf32> to vector<2xf32>
    %955 = vector.shape_cast %954 : vector<2xf32> to vector<2x1xf32>
    %cst_249 = arith.constant 1.280000e+02 : f32
    %956 = vector.broadcast %cst_249 : f32 to vector<2x1xf32>
    %957 = arith.divf %955, %956 : vector<2x1xf32>
    %958 = vector.broadcast %950 : vector<2x1xf32> to vector<2x128xf32>
    %959 = arith.subf %926, %958 : vector<2x128xf32>
    %cst_250 = arith.constant 9.99999974E-6 : f32
    %960 = vector.broadcast %cst_250 : f32 to vector<2x1xf32>
    %961 = arith.addf %957, %960 : vector<2x1xf32>
    %962 = math.rsqrt %961 : vector<2x1xf32>
    %963 = vector.broadcast %962 : vector<2x1xf32> to vector<2x128xf32>
    %964 = arith.mulf %959, %963 : vector<2x128xf32>
    %965 = vector.broadcast %13 : vector<1x128xf32> to vector<2x128xf32>
    %966 = arith.mulf %964, %965 : vector<2x128xf32>
    %967 = arith.addf %946, %966 : vector<2x128xf32>
    %968 = vector.broadcast %17 : vector<1x128xf32> to vector<2x128xf32>
    %969 = arith.addf %967, %968 : vector<2x128xf32>
    %970 = vector.extract_strided_slice %969 {offsets = [0, 0], sizes = [2, 96], strides = [1, 1]} : vector<2x128xf32> to vector<2x96xf32>
    %971 = arith.negf %970 : vector<2x96xf32>
    %972 = math.exp %971 : vector<2x96xf32>
    %cst_251 = arith.constant 1.000000e+00 : f32
    %973 = vector.broadcast %cst_251 : f32 to vector<2x96xf32>
    %974 = arith.addf %973, %972 : vector<2x96xf32>
    %975 = arith.divf %973, %974 : vector<2x96xf32>
    %976 = vector.extract_strided_slice %969 {offsets = [0, 96], sizes = [2, 32], strides = [1, 1]} : vector<2x128xf32> to vector<2x32xf32>
    %977 = math.tanh %976 : vector<2x32xf32>
    %978 = vector.extract_strided_slice %975 {offsets = [0, 0], sizes = [2, 32], strides = [1, 1]} : vector<2x96xf32> to vector<2x32xf32>
    %979 = vector.extract_strided_slice %975 {offsets = [0, 32], sizes = [2, 32], strides = [1, 1]} : vector<2x96xf32> to vector<2x32xf32>
    %980 = vector.extract_strided_slice %975 {offsets = [0, 64], sizes = [2, 32], strides = [1, 1]} : vector<2x96xf32> to vector<2x32xf32>
    %981 = arith.mulf %979, %806 : vector<2x32xf32>
    %982 = arith.mulf %978, %977 : vector<2x32xf32>
    %983 = arith.addf %981, %982 : vector<2x32xf32>
    %cst_252 = arith.constant dense<0.000000e+00> : vector<2xf32>
    %984 = vector.multi_reduction <add>, %983, %cst_252 [1] : vector<2x32xf32> to vector<2xf32>
    %985 = vector.shape_cast %984 : vector<2xf32> to vector<2x1xf32>
    %cst_253 = arith.constant 3.200000e+01 : f32
    %986 = vector.broadcast %cst_253 : f32 to vector<2x1xf32>
    %987 = arith.divf %985, %986 : vector<2x1xf32>
    %988 = vector.broadcast %987 : vector<2x1xf32> to vector<2x32xf32>
    %989 = arith.subf %983, %988 : vector<2x32xf32>
    %990 = arith.mulf %989, %989 : vector<2x32xf32>
    %cst_254 = arith.constant dense<0.000000e+00> : vector<2xf32>
    %991 = vector.multi_reduction <add>, %990, %cst_254 [1] : vector<2x32xf32> to vector<2xf32>
    %992 = vector.shape_cast %991 : vector<2xf32> to vector<2x1xf32>
    %cst_255 = arith.constant 3.200000e+01 : f32
    %993 = vector.broadcast %cst_255 : f32 to vector<2x1xf32>
    %994 = arith.divf %992, %993 : vector<2x1xf32>
    %995 = vector.broadcast %987 : vector<2x1xf32> to vector<2x32xf32>
    %996 = arith.subf %983, %995 : vector<2x32xf32>
    %cst_256 = arith.constant 9.99999974E-6 : f32
    %997 = vector.broadcast %cst_256 : f32 to vector<2x1xf32>
    %998 = arith.addf %994, %997 : vector<2x1xf32>
    %999 = math.rsqrt %998 : vector<2x1xf32>
    %1000 = vector.broadcast %999 : vector<2x1xf32> to vector<2x32xf32>
    %1001 = arith.mulf %996, %1000 : vector<2x32xf32>
    %1002 = vector.broadcast %21 : vector<1x32xf32> to vector<2x32xf32>
    %1003 = arith.mulf %1001, %1002 : vector<2x32xf32>
    %1004 = vector.broadcast %23 : vector<1x32xf32> to vector<2x32xf32>
    %1005 = arith.addf %1003, %1004 : vector<2x32xf32>
    %1006 = math.tanh %1005 : vector<2x32xf32>
    %1007 = arith.mulf %980, %1006 : vector<2x32xf32>
    %cst_257 = arith.constant dense<0.000000e+00> : vector<2x128xf32>
    %1008 = tpu.matmul %1007, %4, %cst_257 {dimension_numbers = #tpu.dot_dimension_numbers<[1], [0], [0], [1], [0, 0, 1, 1], [], []>} : vector<2x32xf32>, vector<32x128xf32>, vector<2x128xf32> -> vector<2x128xf32>
    %1009 = vector.broadcast %8 : vector<1x128xf32> to vector<2x128xf32>
    %1010 = arith.addf %1008, %1009 : vector<2x128xf32>
    %cst_258 = arith.constant dense<0.000000e+00> : vector<2x128xf32>
    %1011 = tpu.matmul %917, %6, %cst_258 {dimension_numbers = #tpu.dot_dimension_numbers<[1], [0], [0], [1], [0, 0, 1, 1], [], []>} : vector<2x32xf32>, vector<32x128xf32>, vector<2x128xf32> -> vector<2x128xf32>
    %1012 = vector.broadcast %10 : vector<1x128xf32> to vector<2x128xf32>
    %1013 = arith.addf %1011, %1012 : vector<2x128xf32>
    %cst_259 = arith.constant dense<0.000000e+00> : vector<2xf32>
    %1014 = vector.multi_reduction <add>, %1010, %cst_259 [1] : vector<2x128xf32> to vector<2xf32>
    %1015 = vector.shape_cast %1014 : vector<2xf32> to vector<2x1xf32>
    %cst_260 = arith.constant 1.280000e+02 : f32
    %1016 = vector.broadcast %cst_260 : f32 to vector<2x1xf32>
    %1017 = arith.divf %1015, %1016 : vector<2x1xf32>
    %1018 = vector.broadcast %1017 : vector<2x1xf32> to vector<2x128xf32>
    %1019 = arith.subf %1010, %1018 : vector<2x128xf32>
    %1020 = arith.mulf %1019, %1019 : vector<2x128xf32>
    %cst_261 = arith.constant dense<0.000000e+00> : vector<2xf32>
    %1021 = vector.multi_reduction <add>, %1020, %cst_261 [1] : vector<2x128xf32> to vector<2xf32>
    %1022 = vector.shape_cast %1021 : vector<2xf32> to vector<2x1xf32>
    %cst_262 = arith.constant 1.280000e+02 : f32
    %1023 = vector.broadcast %cst_262 : f32 to vector<2x1xf32>
    %1024 = arith.divf %1022, %1023 : vector<2x1xf32>
    %1025 = vector.broadcast %1017 : vector<2x1xf32> to vector<2x128xf32>
    %1026 = arith.subf %1010, %1025 : vector<2x128xf32>
    %cst_263 = arith.constant 9.99999974E-6 : f32
    %1027 = vector.broadcast %cst_263 : f32 to vector<2x1xf32>
    %1028 = arith.addf %1024, %1027 : vector<2x1xf32>
    %1029 = math.rsqrt %1028 : vector<2x1xf32>
    %1030 = vector.broadcast %1029 : vector<2x1xf32> to vector<2x128xf32>
    %1031 = arith.mulf %1026, %1030 : vector<2x128xf32>
    %1032 = vector.broadcast %12 : vector<1x128xf32> to vector<2x128xf32>
    %1033 = arith.mulf %1031, %1032 : vector<2x128xf32>
    %cst_264 = arith.constant dense<0.000000e+00> : vector<2xf32>
    %1034 = vector.multi_reduction <add>, %1013, %cst_264 [1] : vector<2x128xf32> to vector<2xf32>
    %1035 = vector.shape_cast %1034 : vector<2xf32> to vector<2x1xf32>
    %cst_265 = arith.constant 1.280000e+02 : f32
    %1036 = vector.broadcast %cst_265 : f32 to vector<2x1xf32>
    %1037 = arith.divf %1035, %1036 : vector<2x1xf32>
    %1038 = vector.broadcast %1037 : vector<2x1xf32> to vector<2x128xf32>
    %1039 = arith.subf %1013, %1038 : vector<2x128xf32>
    %1040 = arith.mulf %1039, %1039 : vector<2x128xf32>
    %cst_266 = arith.constant dense<0.000000e+00> : vector<2xf32>
    %1041 = vector.multi_reduction <add>, %1040, %cst_266 [1] : vector<2x128xf32> to vector<2xf32>
    %1042 = vector.shape_cast %1041 : vector<2xf32> to vector<2x1xf32>
    %cst_267 = arith.constant 1.280000e+02 : f32
    %1043 = vector.broadcast %cst_267 : f32 to vector<2x1xf32>
    %1044 = arith.divf %1042, %1043 : vector<2x1xf32>
    %1045 = vector.broadcast %1037 : vector<2x1xf32> to vector<2x128xf32>
    %1046 = arith.subf %1013, %1045 : vector<2x128xf32>
    %cst_268 = arith.constant 9.99999974E-6 : f32
    %1047 = vector.broadcast %cst_268 : f32 to vector<2x1xf32>
    %1048 = arith.addf %1044, %1047 : vector<2x1xf32>
    %1049 = math.rsqrt %1048 : vector<2x1xf32>
    %1050 = vector.broadcast %1049 : vector<2x1xf32> to vector<2x128xf32>
    %1051 = arith.mulf %1046, %1050 : vector<2x128xf32>
    %1052 = vector.broadcast %14 : vector<1x128xf32> to vector<2x128xf32>
    %1053 = arith.mulf %1051, %1052 : vector<2x128xf32>
    %1054 = arith.addf %1033, %1053 : vector<2x128xf32>
    %1055 = vector.broadcast %20 : vector<1x128xf32> to vector<2x128xf32>
    %1056 = arith.addf %1054, %1055 : vector<2x128xf32>
    %1057 = vector.extract_strided_slice %1056 {offsets = [0, 0], sizes = [2, 96], strides = [1, 1]} : vector<2x128xf32> to vector<2x96xf32>
    %1058 = arith.negf %1057 : vector<2x96xf32>
    %1059 = math.exp %1058 : vector<2x96xf32>
    %cst_269 = arith.constant 1.000000e+00 : f32
    %1060 = vector.broadcast %cst_269 : f32 to vector<2x96xf32>
    %1061 = arith.addf %1060, %1059 : vector<2x96xf32>
    %1062 = arith.divf %1060, %1061 : vector<2x96xf32>
    %1063 = vector.extract_strided_slice %1056 {offsets = [0, 96], sizes = [2, 32], strides = [1, 1]} : vector<2x128xf32> to vector<2x32xf32>
    %1064 = math.tanh %1063 : vector<2x32xf32>
    %1065 = vector.extract_strided_slice %1062 {offsets = [0, 0], sizes = [2, 32], strides = [1, 1]} : vector<2x96xf32> to vector<2x32xf32>
    %1066 = vector.extract_strided_slice %1062 {offsets = [0, 32], sizes = [2, 32], strides = [1, 1]} : vector<2x96xf32> to vector<2x32xf32>
    %1067 = vector.extract_strided_slice %1062 {offsets = [0, 64], sizes = [2, 32], strides = [1, 1]} : vector<2x96xf32> to vector<2x32xf32>
    %1068 = arith.mulf %1066, %893 : vector<2x32xf32>
    %1069 = arith.mulf %1065, %1064 : vector<2x32xf32>
    %1070 = arith.addf %1068, %1069 : vector<2x32xf32>
    %cst_270 = arith.constant dense<0.000000e+00> : vector<2xf32>
    %1071 = vector.multi_reduction <add>, %1070, %cst_270 [1] : vector<2x32xf32> to vector<2xf32>
    %1072 = vector.shape_cast %1071 : vector<2xf32> to vector<2x1xf32>
    %cst_271 = arith.constant 3.200000e+01 : f32
    %1073 = vector.broadcast %cst_271 : f32 to vector<2x1xf32>
    %1074 = arith.divf %1072, %1073 : vector<2x1xf32>
    %1075 = vector.broadcast %1074 : vector<2x1xf32> to vector<2x32xf32>
    %1076 = arith.subf %1070, %1075 : vector<2x32xf32>
    %1077 = arith.mulf %1076, %1076 : vector<2x32xf32>
    %cst_272 = arith.constant dense<0.000000e+00> : vector<2xf32>
    %1078 = vector.multi_reduction <add>, %1077, %cst_272 [1] : vector<2x32xf32> to vector<2xf32>
    %1079 = vector.shape_cast %1078 : vector<2xf32> to vector<2x1xf32>
    %cst_273 = arith.constant 3.200000e+01 : f32
    %1080 = vector.broadcast %cst_273 : f32 to vector<2x1xf32>
    %1081 = arith.divf %1079, %1080 : vector<2x1xf32>
    %1082 = vector.broadcast %1074 : vector<2x1xf32> to vector<2x32xf32>
    %1083 = arith.subf %1070, %1082 : vector<2x32xf32>
    %cst_274 = arith.constant 9.99999974E-6 : f32
    %1084 = vector.broadcast %cst_274 : f32 to vector<2x1xf32>
    %1085 = arith.addf %1081, %1084 : vector<2x1xf32>
    %1086 = math.rsqrt %1085 : vector<2x1xf32>
    %1087 = vector.broadcast %1086 : vector<2x1xf32> to vector<2x32xf32>
    %1088 = arith.mulf %1083, %1087 : vector<2x32xf32>
    %1089 = vector.broadcast %22 : vector<1x32xf32> to vector<2x32xf32>
    %1090 = arith.mulf %1088, %1089 : vector<2x32xf32>
    %1091 = vector.broadcast %24 : vector<1x32xf32> to vector<2x32xf32>
    %1092 = arith.addf %1090, %1091 : vector<2x32xf32>
    %1093 = math.tanh %1092 : vector<2x32xf32>
    %1094 = arith.mulf %1067, %1093 : vector<2x32xf32>
    %c6_i32 = arith.constant 6 : i32
    %1095 = arith.index_cast %c6_i32 : i32 to index
    %c0_275 = arith.constant 0 : index
    %c0_276 = arith.constant 0 : index
    %1096 = vector.load %arg1[%1095, %c0_275, %c0_276] : memref<8x2x16xf32, #tpu.memory_space<vmem>>, vector<1x2x16xf32>
    %1097 = vector.shape_cast %1096 : vector<1x2x16xf32> to vector<2x16xf32>
    %cst_277 = arith.constant dense<0.000000e+00> : vector<2x128xf32>
    %1098 = tpu.matmul %1097, %3, %cst_277 {dimension_numbers = #tpu.dot_dimension_numbers<[1], [0], [0], [1], [0, 0, 1, 1], [], []>} : vector<2x16xf32>, vector<16x128xf32>, vector<2x128xf32> -> vector<2x128xf32>
    %1099 = vector.broadcast %7 : vector<1x128xf32> to vector<2x128xf32>
    %1100 = arith.addf %1098, %1099 : vector<2x128xf32>
    %cst_278 = arith.constant dense<0.000000e+00> : vector<2x128xf32>
    %1101 = tpu.matmul %1007, %5, %cst_278 {dimension_numbers = #tpu.dot_dimension_numbers<[1], [0], [0], [1], [0, 0, 1, 1], [], []>} : vector<2x32xf32>, vector<32x128xf32>, vector<2x128xf32> -> vector<2x128xf32>
    %1102 = vector.broadcast %9 : vector<1x128xf32> to vector<2x128xf32>
    %1103 = arith.addf %1101, %1102 : vector<2x128xf32>
    %cst_279 = arith.constant dense<0.000000e+00> : vector<2xf32>
    %1104 = vector.multi_reduction <add>, %1100, %cst_279 [1] : vector<2x128xf32> to vector<2xf32>
    %1105 = vector.shape_cast %1104 : vector<2xf32> to vector<2x1xf32>
    %cst_280 = arith.constant 1.280000e+02 : f32
    %1106 = vector.broadcast %cst_280 : f32 to vector<2x1xf32>
    %1107 = arith.divf %1105, %1106 : vector<2x1xf32>
    %1108 = vector.broadcast %1107 : vector<2x1xf32> to vector<2x128xf32>
    %1109 = arith.subf %1100, %1108 : vector<2x128xf32>
    %1110 = arith.mulf %1109, %1109 : vector<2x128xf32>
    %cst_281 = arith.constant dense<0.000000e+00> : vector<2xf32>
    %1111 = vector.multi_reduction <add>, %1110, %cst_281 [1] : vector<2x128xf32> to vector<2xf32>
    %1112 = vector.shape_cast %1111 : vector<2xf32> to vector<2x1xf32>
    %cst_282 = arith.constant 1.280000e+02 : f32
    %1113 = vector.broadcast %cst_282 : f32 to vector<2x1xf32>
    %1114 = arith.divf %1112, %1113 : vector<2x1xf32>
    %1115 = vector.broadcast %1107 : vector<2x1xf32> to vector<2x128xf32>
    %1116 = arith.subf %1100, %1115 : vector<2x128xf32>
    %cst_283 = arith.constant 9.99999974E-6 : f32
    %1117 = vector.broadcast %cst_283 : f32 to vector<2x1xf32>
    %1118 = arith.addf %1114, %1117 : vector<2x1xf32>
    %1119 = math.rsqrt %1118 : vector<2x1xf32>
    %1120 = vector.broadcast %1119 : vector<2x1xf32> to vector<2x128xf32>
    %1121 = arith.mulf %1116, %1120 : vector<2x128xf32>
    %1122 = vector.broadcast %11 : vector<1x128xf32> to vector<2x128xf32>
    %1123 = arith.mulf %1121, %1122 : vector<2x128xf32>
    %cst_284 = arith.constant dense<0.000000e+00> : vector<2xf32>
    %1124 = vector.multi_reduction <add>, %1103, %cst_284 [1] : vector<2x128xf32> to vector<2xf32>
    %1125 = vector.shape_cast %1124 : vector<2xf32> to vector<2x1xf32>
    %cst_285 = arith.constant 1.280000e+02 : f32
    %1126 = vector.broadcast %cst_285 : f32 to vector<2x1xf32>
    %1127 = arith.divf %1125, %1126 : vector<2x1xf32>
    %1128 = vector.broadcast %1127 : vector<2x1xf32> to vector<2x128xf32>
    %1129 = arith.subf %1103, %1128 : vector<2x128xf32>
    %1130 = arith.mulf %1129, %1129 : vector<2x128xf32>
    %cst_286 = arith.constant dense<0.000000e+00> : vector<2xf32>
    %1131 = vector.multi_reduction <add>, %1130, %cst_286 [1] : vector<2x128xf32> to vector<2xf32>
    %1132 = vector.shape_cast %1131 : vector<2xf32> to vector<2x1xf32>
    %cst_287 = arith.constant 1.280000e+02 : f32
    %1133 = vector.broadcast %cst_287 : f32 to vector<2x1xf32>
    %1134 = arith.divf %1132, %1133 : vector<2x1xf32>
    %1135 = vector.broadcast %1127 : vector<2x1xf32> to vector<2x128xf32>
    %1136 = arith.subf %1103, %1135 : vector<2x128xf32>
    %cst_288 = arith.constant 9.99999974E-6 : f32
    %1137 = vector.broadcast %cst_288 : f32 to vector<2x1xf32>
    %1138 = arith.addf %1134, %1137 : vector<2x1xf32>
    %1139 = math.rsqrt %1138 : vector<2x1xf32>
    %1140 = vector.broadcast %1139 : vector<2x1xf32> to vector<2x128xf32>
    %1141 = arith.mulf %1136, %1140 : vector<2x128xf32>
    %1142 = vector.broadcast %13 : vector<1x128xf32> to vector<2x128xf32>
    %1143 = arith.mulf %1141, %1142 : vector<2x128xf32>
    %1144 = arith.addf %1123, %1143 : vector<2x128xf32>
    %1145 = vector.broadcast %17 : vector<1x128xf32> to vector<2x128xf32>
    %1146 = arith.addf %1144, %1145 : vector<2x128xf32>
    %1147 = vector.extract_strided_slice %1146 {offsets = [0, 0], sizes = [2, 96], strides = [1, 1]} : vector<2x128xf32> to vector<2x96xf32>
    %1148 = arith.negf %1147 : vector<2x96xf32>
    %1149 = math.exp %1148 : vector<2x96xf32>
    %cst_289 = arith.constant 1.000000e+00 : f32
    %1150 = vector.broadcast %cst_289 : f32 to vector<2x96xf32>
    %1151 = arith.addf %1150, %1149 : vector<2x96xf32>
    %1152 = arith.divf %1150, %1151 : vector<2x96xf32>
    %1153 = vector.extract_strided_slice %1146 {offsets = [0, 96], sizes = [2, 32], strides = [1, 1]} : vector<2x128xf32> to vector<2x32xf32>
    %1154 = math.tanh %1153 : vector<2x32xf32>
    %1155 = vector.extract_strided_slice %1152 {offsets = [0, 0], sizes = [2, 32], strides = [1, 1]} : vector<2x96xf32> to vector<2x32xf32>
    %1156 = vector.extract_strided_slice %1152 {offsets = [0, 32], sizes = [2, 32], strides = [1, 1]} : vector<2x96xf32> to vector<2x32xf32>
    %1157 = vector.extract_strided_slice %1152 {offsets = [0, 64], sizes = [2, 32], strides = [1, 1]} : vector<2x96xf32> to vector<2x32xf32>
    %1158 = arith.mulf %1156, %983 : vector<2x32xf32>
    %1159 = arith.mulf %1155, %1154 : vector<2x32xf32>
    %1160 = arith.addf %1158, %1159 : vector<2x32xf32>
    %cst_290 = arith.constant dense<0.000000e+00> : vector<2xf32>
    %1161 = vector.multi_reduction <add>, %1160, %cst_290 [1] : vector<2x32xf32> to vector<2xf32>
    %1162 = vector.shape_cast %1161 : vector<2xf32> to vector<2x1xf32>
    %cst_291 = arith.constant 3.200000e+01 : f32
    %1163 = vector.broadcast %cst_291 : f32 to vector<2x1xf32>
    %1164 = arith.divf %1162, %1163 : vector<2x1xf32>
    %1165 = vector.broadcast %1164 : vector<2x1xf32> to vector<2x32xf32>
    %1166 = arith.subf %1160, %1165 : vector<2x32xf32>
    %1167 = arith.mulf %1166, %1166 : vector<2x32xf32>
    %cst_292 = arith.constant dense<0.000000e+00> : vector<2xf32>
    %1168 = vector.multi_reduction <add>, %1167, %cst_292 [1] : vector<2x32xf32> to vector<2xf32>
    %1169 = vector.shape_cast %1168 : vector<2xf32> to vector<2x1xf32>
    %cst_293 = arith.constant 3.200000e+01 : f32
    %1170 = vector.broadcast %cst_293 : f32 to vector<2x1xf32>
    %1171 = arith.divf %1169, %1170 : vector<2x1xf32>
    %1172 = vector.broadcast %1164 : vector<2x1xf32> to vector<2x32xf32>
    %1173 = arith.subf %1160, %1172 : vector<2x32xf32>
    %cst_294 = arith.constant 9.99999974E-6 : f32
    %1174 = vector.broadcast %cst_294 : f32 to vector<2x1xf32>
    %1175 = arith.addf %1171, %1174 : vector<2x1xf32>
    %1176 = math.rsqrt %1175 : vector<2x1xf32>
    %1177 = vector.broadcast %1176 : vector<2x1xf32> to vector<2x32xf32>
    %1178 = arith.mulf %1173, %1177 : vector<2x32xf32>
    %1179 = vector.broadcast %21 : vector<1x32xf32> to vector<2x32xf32>
    %1180 = arith.mulf %1178, %1179 : vector<2x32xf32>
    %1181 = vector.broadcast %23 : vector<1x32xf32> to vector<2x32xf32>
    %1182 = arith.addf %1180, %1181 : vector<2x32xf32>
    %1183 = math.tanh %1182 : vector<2x32xf32>
    %1184 = arith.mulf %1157, %1183 : vector<2x32xf32>
    %cst_295 = arith.constant dense<0.000000e+00> : vector<2x128xf32>
    %1185 = tpu.matmul %1184, %4, %cst_295 {dimension_numbers = #tpu.dot_dimension_numbers<[1], [0], [0], [1], [0, 0, 1, 1], [], []>} : vector<2x32xf32>, vector<32x128xf32>, vector<2x128xf32> -> vector<2x128xf32>
    %1186 = vector.broadcast %8 : vector<1x128xf32> to vector<2x128xf32>
    %1187 = arith.addf %1185, %1186 : vector<2x128xf32>
    %cst_296 = arith.constant dense<0.000000e+00> : vector<2x128xf32>
    %1188 = tpu.matmul %1094, %6, %cst_296 {dimension_numbers = #tpu.dot_dimension_numbers<[1], [0], [0], [1], [0, 0, 1, 1], [], []>} : vector<2x32xf32>, vector<32x128xf32>, vector<2x128xf32> -> vector<2x128xf32>
    %1189 = vector.broadcast %10 : vector<1x128xf32> to vector<2x128xf32>
    %1190 = arith.addf %1188, %1189 : vector<2x128xf32>
    %cst_297 = arith.constant dense<0.000000e+00> : vector<2xf32>
    %1191 = vector.multi_reduction <add>, %1187, %cst_297 [1] : vector<2x128xf32> to vector<2xf32>
    %1192 = vector.shape_cast %1191 : vector<2xf32> to vector<2x1xf32>
    %cst_298 = arith.constant 1.280000e+02 : f32
    %1193 = vector.broadcast %cst_298 : f32 to vector<2x1xf32>
    %1194 = arith.divf %1192, %1193 : vector<2x1xf32>
    %1195 = vector.broadcast %1194 : vector<2x1xf32> to vector<2x128xf32>
    %1196 = arith.subf %1187, %1195 : vector<2x128xf32>
    %1197 = arith.mulf %1196, %1196 : vector<2x128xf32>
    %cst_299 = arith.constant dense<0.000000e+00> : vector<2xf32>
    %1198 = vector.multi_reduction <add>, %1197, %cst_299 [1] : vector<2x128xf32> to vector<2xf32>
    %1199 = vector.shape_cast %1198 : vector<2xf32> to vector<2x1xf32>
    %cst_300 = arith.constant 1.280000e+02 : f32
    %1200 = vector.broadcast %cst_300 : f32 to vector<2x1xf32>
    %1201 = arith.divf %1199, %1200 : vector<2x1xf32>
    %1202 = vector.broadcast %1194 : vector<2x1xf32> to vector<2x128xf32>
    %1203 = arith.subf %1187, %1202 : vector<2x128xf32>
    %cst_301 = arith.constant 9.99999974E-6 : f32
    %1204 = vector.broadcast %cst_301 : f32 to vector<2x1xf32>
    %1205 = arith.addf %1201, %1204 : vector<2x1xf32>
    %1206 = math.rsqrt %1205 : vector<2x1xf32>
    %1207 = vector.broadcast %1206 : vector<2x1xf32> to vector<2x128xf32>
    %1208 = arith.mulf %1203, %1207 : vector<2x128xf32>
    %1209 = vector.broadcast %12 : vector<1x128xf32> to vector<2x128xf32>
    %1210 = arith.mulf %1208, %1209 : vector<2x128xf32>
    %cst_302 = arith.constant dense<0.000000e+00> : vector<2xf32>
    %1211 = vector.multi_reduction <add>, %1190, %cst_302 [1] : vector<2x128xf32> to vector<2xf32>
    %1212 = vector.shape_cast %1211 : vector<2xf32> to vector<2x1xf32>
    %cst_303 = arith.constant 1.280000e+02 : f32
    %1213 = vector.broadcast %cst_303 : f32 to vector<2x1xf32>
    %1214 = arith.divf %1212, %1213 : vector<2x1xf32>
    %1215 = vector.broadcast %1214 : vector<2x1xf32> to vector<2x128xf32>
    %1216 = arith.subf %1190, %1215 : vector<2x128xf32>
    %1217 = arith.mulf %1216, %1216 : vector<2x128xf32>
    %cst_304 = arith.constant dense<0.000000e+00> : vector<2xf32>
    %1218 = vector.multi_reduction <add>, %1217, %cst_304 [1] : vector<2x128xf32> to vector<2xf32>
    %1219 = vector.shape_cast %1218 : vector<2xf32> to vector<2x1xf32>
    %cst_305 = arith.constant 1.280000e+02 : f32
    %1220 = vector.broadcast %cst_305 : f32 to vector<2x1xf32>
    %1221 = arith.divf %1219, %1220 : vector<2x1xf32>
    %1222 = vector.broadcast %1214 : vector<2x1xf32> to vector<2x128xf32>
    %1223 = arith.subf %1190, %1222 : vector<2x128xf32>
    %cst_306 = arith.constant 9.99999974E-6 : f32
    %1224 = vector.broadcast %cst_306 : f32 to vector<2x1xf32>
    %1225 = arith.addf %1221, %1224 : vector<2x1xf32>
    %1226 = math.rsqrt %1225 : vector<2x1xf32>
    %1227 = vector.broadcast %1226 : vector<2x1xf32> to vector<2x128xf32>
    %1228 = arith.mulf %1223, %1227 : vector<2x128xf32>
    %1229 = vector.broadcast %14 : vector<1x128xf32> to vector<2x128xf32>
    %1230 = arith.mulf %1228, %1229 : vector<2x128xf32>
    %1231 = arith.addf %1210, %1230 : vector<2x128xf32>
    %1232 = vector.broadcast %20 : vector<1x128xf32> to vector<2x128xf32>
    %1233 = arith.addf %1231, %1232 : vector<2x128xf32>
    %1234 = vector.extract_strided_slice %1233 {offsets = [0, 0], sizes = [2, 96], strides = [1, 1]} : vector<2x128xf32> to vector<2x96xf32>
    %1235 = arith.negf %1234 : vector<2x96xf32>
    %1236 = math.exp %1235 : vector<2x96xf32>
    %cst_307 = arith.constant 1.000000e+00 : f32
    %1237 = vector.broadcast %cst_307 : f32 to vector<2x96xf32>
    %1238 = arith.addf %1237, %1236 : vector<2x96xf32>
    %1239 = arith.divf %1237, %1238 : vector<2x96xf32>
    %1240 = vector.extract_strided_slice %1233 {offsets = [0, 96], sizes = [2, 32], strides = [1, 1]} : vector<2x128xf32> to vector<2x32xf32>
    %1241 = math.tanh %1240 : vector<2x32xf32>
    %1242 = vector.extract_strided_slice %1239 {offsets = [0, 0], sizes = [2, 32], strides = [1, 1]} : vector<2x96xf32> to vector<2x32xf32>
    %1243 = vector.extract_strided_slice %1239 {offsets = [0, 32], sizes = [2, 32], strides = [1, 1]} : vector<2x96xf32> to vector<2x32xf32>
    %1244 = vector.extract_strided_slice %1239 {offsets = [0, 64], sizes = [2, 32], strides = [1, 1]} : vector<2x96xf32> to vector<2x32xf32>
    %1245 = arith.mulf %1243, %1070 : vector<2x32xf32>
    %1246 = arith.mulf %1242, %1241 : vector<2x32xf32>
    %1247 = arith.addf %1245, %1246 : vector<2x32xf32>
    %cst_308 = arith.constant dense<0.000000e+00> : vector<2xf32>
    %1248 = vector.multi_reduction <add>, %1247, %cst_308 [1] : vector<2x32xf32> to vector<2xf32>
    %1249 = vector.shape_cast %1248 : vector<2xf32> to vector<2x1xf32>
    %cst_309 = arith.constant 3.200000e+01 : f32
    %1250 = vector.broadcast %cst_309 : f32 to vector<2x1xf32>
    %1251 = arith.divf %1249, %1250 : vector<2x1xf32>
    %1252 = vector.broadcast %1251 : vector<2x1xf32> to vector<2x32xf32>
    %1253 = arith.subf %1247, %1252 : vector<2x32xf32>
    %1254 = arith.mulf %1253, %1253 : vector<2x32xf32>
    %cst_310 = arith.constant dense<0.000000e+00> : vector<2xf32>
    %1255 = vector.multi_reduction <add>, %1254, %cst_310 [1] : vector<2x32xf32> to vector<2xf32>
    %1256 = vector.shape_cast %1255 : vector<2xf32> to vector<2x1xf32>
    %cst_311 = arith.constant 3.200000e+01 : f32
    %1257 = vector.broadcast %cst_311 : f32 to vector<2x1xf32>
    %1258 = arith.divf %1256, %1257 : vector<2x1xf32>
    %1259 = vector.broadcast %1251 : vector<2x1xf32> to vector<2x32xf32>
    %1260 = arith.subf %1247, %1259 : vector<2x32xf32>
    %cst_312 = arith.constant 9.99999974E-6 : f32
    %1261 = vector.broadcast %cst_312 : f32 to vector<2x1xf32>
    %1262 = arith.addf %1258, %1261 : vector<2x1xf32>
    %1263 = math.rsqrt %1262 : vector<2x1xf32>
    %1264 = vector.broadcast %1263 : vector<2x1xf32> to vector<2x32xf32>
    %1265 = arith.mulf %1260, %1264 : vector<2x32xf32>
    %1266 = vector.broadcast %22 : vector<1x32xf32> to vector<2x32xf32>
    %1267 = arith.mulf %1265, %1266 : vector<2x32xf32>
    %1268 = vector.broadcast %24 : vector<1x32xf32> to vector<2x32xf32>
    %1269 = arith.addf %1267, %1268 : vector<2x32xf32>
    %1270 = math.tanh %1269 : vector<2x32xf32>
    %1271 = arith.mulf %1244, %1270 : vector<2x32xf32>
    %c7_i32 = arith.constant 7 : i32
    %1272 = arith.index_cast %c7_i32 : i32 to index
    %c0_313 = arith.constant 0 : index
    %c0_314 = arith.constant 0 : index
    %1273 = vector.load %arg1[%1272, %c0_313, %c0_314] : memref<8x2x16xf32, #tpu.memory_space<vmem>>, vector<1x2x16xf32>
    %1274 = vector.shape_cast %1273 : vector<1x2x16xf32> to vector<2x16xf32>
    %cst_315 = arith.constant dense<0.000000e+00> : vector<2x128xf32>
    %1275 = tpu.matmul %1274, %3, %cst_315 {dimension_numbers = #tpu.dot_dimension_numbers<[1], [0], [0], [1], [0, 0, 1, 1], [], []>} : vector<2x16xf32>, vector<16x128xf32>, vector<2x128xf32> -> vector<2x128xf32>
    %1276 = vector.broadcast %7 : vector<1x128xf32> to vector<2x128xf32>
    %1277 = arith.addf %1275, %1276 : vector<2x128xf32>
    %cst_316 = arith.constant dense<0.000000e+00> : vector<2x128xf32>
    %1278 = tpu.matmul %1184, %5, %cst_316 {dimension_numbers = #tpu.dot_dimension_numbers<[1], [0], [0], [1], [0, 0, 1, 1], [], []>} : vector<2x32xf32>, vector<32x128xf32>, vector<2x128xf32> -> vector<2x128xf32>
    %1279 = vector.broadcast %9 : vector<1x128xf32> to vector<2x128xf32>
    %1280 = arith.addf %1278, %1279 : vector<2x128xf32>
    %cst_317 = arith.constant dense<0.000000e+00> : vector<2xf32>
    %1281 = vector.multi_reduction <add>, %1277, %cst_317 [1] : vector<2x128xf32> to vector<2xf32>
    %1282 = vector.shape_cast %1281 : vector<2xf32> to vector<2x1xf32>
    %cst_318 = arith.constant 1.280000e+02 : f32
    %1283 = vector.broadcast %cst_318 : f32 to vector<2x1xf32>
    %1284 = arith.divf %1282, %1283 : vector<2x1xf32>
    %1285 = vector.broadcast %1284 : vector<2x1xf32> to vector<2x128xf32>
    %1286 = arith.subf %1277, %1285 : vector<2x128xf32>
    %1287 = arith.mulf %1286, %1286 : vector<2x128xf32>
    %cst_319 = arith.constant dense<0.000000e+00> : vector<2xf32>
    %1288 = vector.multi_reduction <add>, %1287, %cst_319 [1] : vector<2x128xf32> to vector<2xf32>
    %1289 = vector.shape_cast %1288 : vector<2xf32> to vector<2x1xf32>
    %cst_320 = arith.constant 1.280000e+02 : f32
    %1290 = vector.broadcast %cst_320 : f32 to vector<2x1xf32>
    %1291 = arith.divf %1289, %1290 : vector<2x1xf32>
    %1292 = vector.broadcast %1284 : vector<2x1xf32> to vector<2x128xf32>
    %1293 = arith.subf %1277, %1292 : vector<2x128xf32>
    %cst_321 = arith.constant 9.99999974E-6 : f32
    %1294 = vector.broadcast %cst_321 : f32 to vector<2x1xf32>
    %1295 = arith.addf %1291, %1294 : vector<2x1xf32>
    %1296 = math.rsqrt %1295 : vector<2x1xf32>
    %1297 = vector.broadcast %1296 : vector<2x1xf32> to vector<2x128xf32>
    %1298 = arith.mulf %1293, %1297 : vector<2x128xf32>
    %1299 = vector.broadcast %11 : vector<1x128xf32> to vector<2x128xf32>
    %1300 = arith.mulf %1298, %1299 : vector<2x128xf32>
    %cst_322 = arith.constant dense<0.000000e+00> : vector<2xf32>
    %1301 = vector.multi_reduction <add>, %1280, %cst_322 [1] : vector<2x128xf32> to vector<2xf32>
    %1302 = vector.shape_cast %1301 : vector<2xf32> to vector<2x1xf32>
    %cst_323 = arith.constant 1.280000e+02 : f32
    %1303 = vector.broadcast %cst_323 : f32 to vector<2x1xf32>
    %1304 = arith.divf %1302, %1303 : vector<2x1xf32>
    %1305 = vector.broadcast %1304 : vector<2x1xf32> to vector<2x128xf32>
    %1306 = arith.subf %1280, %1305 : vector<2x128xf32>
    %1307 = arith.mulf %1306, %1306 : vector<2x128xf32>
    %cst_324 = arith.constant dense<0.000000e+00> : vector<2xf32>
    %1308 = vector.multi_reduction <add>, %1307, %cst_324 [1] : vector<2x128xf32> to vector<2xf32>
    %1309 = vector.shape_cast %1308 : vector<2xf32> to vector<2x1xf32>
    %cst_325 = arith.constant 1.280000e+02 : f32
    %1310 = vector.broadcast %cst_325 : f32 to vector<2x1xf32>
    %1311 = arith.divf %1309, %1310 : vector<2x1xf32>
    %1312 = vector.broadcast %1304 : vector<2x1xf32> to vector<2x128xf32>
    %1313 = arith.subf %1280, %1312 : vector<2x128xf32>
    %cst_326 = arith.constant 9.99999974E-6 : f32
    %1314 = vector.broadcast %cst_326 : f32 to vector<2x1xf32>
    %1315 = arith.addf %1311, %1314 : vector<2x1xf32>
    %1316 = math.rsqrt %1315 : vector<2x1xf32>
    %1317 = vector.broadcast %1316 : vector<2x1xf32> to vector<2x128xf32>
    %1318 = arith.mulf %1313, %1317 : vector<2x128xf32>
    %1319 = vector.broadcast %13 : vector<1x128xf32> to vector<2x128xf32>
    %1320 = arith.mulf %1318, %1319 : vector<2x128xf32>
    %1321 = arith.addf %1300, %1320 : vector<2x128xf32>
    %1322 = vector.broadcast %17 : vector<1x128xf32> to vector<2x128xf32>
    %1323 = arith.addf %1321, %1322 : vector<2x128xf32>
    %1324 = vector.extract_strided_slice %1323 {offsets = [0, 0], sizes = [2, 96], strides = [1, 1]} : vector<2x128xf32> to vector<2x96xf32>
    %1325 = arith.negf %1324 : vector<2x96xf32>
    %1326 = math.exp %1325 : vector<2x96xf32>
    %cst_327 = arith.constant 1.000000e+00 : f32
    %1327 = vector.broadcast %cst_327 : f32 to vector<2x96xf32>
    %1328 = arith.addf %1327, %1326 : vector<2x96xf32>
    %1329 = arith.divf %1327, %1328 : vector<2x96xf32>
    %1330 = vector.extract_strided_slice %1323 {offsets = [0, 96], sizes = [2, 32], strides = [1, 1]} : vector<2x128xf32> to vector<2x32xf32>
    %1331 = math.tanh %1330 : vector<2x32xf32>
    %1332 = vector.extract_strided_slice %1329 {offsets = [0, 0], sizes = [2, 32], strides = [1, 1]} : vector<2x96xf32> to vector<2x32xf32>
    %1333 = vector.extract_strided_slice %1329 {offsets = [0, 32], sizes = [2, 32], strides = [1, 1]} : vector<2x96xf32> to vector<2x32xf32>
    %1334 = vector.extract_strided_slice %1329 {offsets = [0, 64], sizes = [2, 32], strides = [1, 1]} : vector<2x96xf32> to vector<2x32xf32>
    %1335 = arith.mulf %1333, %1160 : vector<2x32xf32>
    %1336 = arith.mulf %1332, %1331 : vector<2x32xf32>
    %1337 = arith.addf %1335, %1336 : vector<2x32xf32>
    %cst_328 = arith.constant dense<0.000000e+00> : vector<2xf32>
    %1338 = vector.multi_reduction <add>, %1337, %cst_328 [1] : vector<2x32xf32> to vector<2xf32>
    %1339 = vector.shape_cast %1338 : vector<2xf32> to vector<2x1xf32>
    %cst_329 = arith.constant 3.200000e+01 : f32
    %1340 = vector.broadcast %cst_329 : f32 to vector<2x1xf32>
    %1341 = arith.divf %1339, %1340 : vector<2x1xf32>
    %1342 = vector.broadcast %1341 : vector<2x1xf32> to vector<2x32xf32>
    %1343 = arith.subf %1337, %1342 : vector<2x32xf32>
    %1344 = arith.mulf %1343, %1343 : vector<2x32xf32>
    %cst_330 = arith.constant dense<0.000000e+00> : vector<2xf32>
    %1345 = vector.multi_reduction <add>, %1344, %cst_330 [1] : vector<2x32xf32> to vector<2xf32>
    %1346 = vector.shape_cast %1345 : vector<2xf32> to vector<2x1xf32>
    %cst_331 = arith.constant 3.200000e+01 : f32
    %1347 = vector.broadcast %cst_331 : f32 to vector<2x1xf32>
    %1348 = arith.divf %1346, %1347 : vector<2x1xf32>
    %1349 = vector.broadcast %1341 : vector<2x1xf32> to vector<2x32xf32>
    %1350 = arith.subf %1337, %1349 : vector<2x32xf32>
    %cst_332 = arith.constant 9.99999974E-6 : f32
    %1351 = vector.broadcast %cst_332 : f32 to vector<2x1xf32>
    %1352 = arith.addf %1348, %1351 : vector<2x1xf32>
    %1353 = math.rsqrt %1352 : vector<2x1xf32>
    %1354 = vector.broadcast %1353 : vector<2x1xf32> to vector<2x32xf32>
    %1355 = arith.mulf %1350, %1354 : vector<2x32xf32>
    %1356 = vector.broadcast %21 : vector<1x32xf32> to vector<2x32xf32>
    %1357 = arith.mulf %1355, %1356 : vector<2x32xf32>
    %1358 = vector.broadcast %23 : vector<1x32xf32> to vector<2x32xf32>
    %1359 = arith.addf %1357, %1358 : vector<2x32xf32>
    %1360 = math.tanh %1359 : vector<2x32xf32>
    %1361 = arith.mulf %1334, %1360 : vector<2x32xf32>
    %cst_333 = arith.constant dense<0.000000e+00> : vector<2x128xf32>
    %1362 = tpu.matmul %1361, %4, %cst_333 {dimension_numbers = #tpu.dot_dimension_numbers<[1], [0], [0], [1], [0, 0, 1, 1], [], []>} : vector<2x32xf32>, vector<32x128xf32>, vector<2x128xf32> -> vector<2x128xf32>
    %1363 = vector.broadcast %8 : vector<1x128xf32> to vector<2x128xf32>
    %1364 = arith.addf %1362, %1363 : vector<2x128xf32>
    %cst_334 = arith.constant dense<0.000000e+00> : vector<2x128xf32>
    %1365 = tpu.matmul %1271, %6, %cst_334 {dimension_numbers = #tpu.dot_dimension_numbers<[1], [0], [0], [1], [0, 0, 1, 1], [], []>} : vector<2x32xf32>, vector<32x128xf32>, vector<2x128xf32> -> vector<2x128xf32>
    %1366 = vector.broadcast %10 : vector<1x128xf32> to vector<2x128xf32>
    %1367 = arith.addf %1365, %1366 : vector<2x128xf32>
    %cst_335 = arith.constant dense<0.000000e+00> : vector<2xf32>
    %1368 = vector.multi_reduction <add>, %1364, %cst_335 [1] : vector<2x128xf32> to vector<2xf32>
    %1369 = vector.shape_cast %1368 : vector<2xf32> to vector<2x1xf32>
    %cst_336 = arith.constant 1.280000e+02 : f32
    %1370 = vector.broadcast %cst_336 : f32 to vector<2x1xf32>
    %1371 = arith.divf %1369, %1370 : vector<2x1xf32>
    %1372 = vector.broadcast %1371 : vector<2x1xf32> to vector<2x128xf32>
    %1373 = arith.subf %1364, %1372 : vector<2x128xf32>
    %1374 = arith.mulf %1373, %1373 : vector<2x128xf32>
    %cst_337 = arith.constant dense<0.000000e+00> : vector<2xf32>
    %1375 = vector.multi_reduction <add>, %1374, %cst_337 [1] : vector<2x128xf32> to vector<2xf32>
    %1376 = vector.shape_cast %1375 : vector<2xf32> to vector<2x1xf32>
    %cst_338 = arith.constant 1.280000e+02 : f32
    %1377 = vector.broadcast %cst_338 : f32 to vector<2x1xf32>
    %1378 = arith.divf %1376, %1377 : vector<2x1xf32>
    %1379 = vector.broadcast %1371 : vector<2x1xf32> to vector<2x128xf32>
    %1380 = arith.subf %1364, %1379 : vector<2x128xf32>
    %cst_339 = arith.constant 9.99999974E-6 : f32
    %1381 = vector.broadcast %cst_339 : f32 to vector<2x1xf32>
    %1382 = arith.addf %1378, %1381 : vector<2x1xf32>
    %1383 = math.rsqrt %1382 : vector<2x1xf32>
    %1384 = vector.broadcast %1383 : vector<2x1xf32> to vector<2x128xf32>
    %1385 = arith.mulf %1380, %1384 : vector<2x128xf32>
    %1386 = vector.broadcast %12 : vector<1x128xf32> to vector<2x128xf32>
    %1387 = arith.mulf %1385, %1386 : vector<2x128xf32>
    %cst_340 = arith.constant dense<0.000000e+00> : vector<2xf32>
    %1388 = vector.multi_reduction <add>, %1367, %cst_340 [1] : vector<2x128xf32> to vector<2xf32>
    %1389 = vector.shape_cast %1388 : vector<2xf32> to vector<2x1xf32>
    %cst_341 = arith.constant 1.280000e+02 : f32
    %1390 = vector.broadcast %cst_341 : f32 to vector<2x1xf32>
    %1391 = arith.divf %1389, %1390 : vector<2x1xf32>
    %1392 = vector.broadcast %1391 : vector<2x1xf32> to vector<2x128xf32>
    %1393 = arith.subf %1367, %1392 : vector<2x128xf32>
    %1394 = arith.mulf %1393, %1393 : vector<2x128xf32>
    %cst_342 = arith.constant dense<0.000000e+00> : vector<2xf32>
    %1395 = vector.multi_reduction <add>, %1394, %cst_342 [1] : vector<2x128xf32> to vector<2xf32>
    %1396 = vector.shape_cast %1395 : vector<2xf32> to vector<2x1xf32>
    %cst_343 = arith.constant 1.280000e+02 : f32
    %1397 = vector.broadcast %cst_343 : f32 to vector<2x1xf32>
    %1398 = arith.divf %1396, %1397 : vector<2x1xf32>
    %1399 = vector.broadcast %1391 : vector<2x1xf32> to vector<2x128xf32>
    %1400 = arith.subf %1367, %1399 : vector<2x128xf32>
    %cst_344 = arith.constant 9.99999974E-6 : f32
    %1401 = vector.broadcast %cst_344 : f32 to vector<2x1xf32>
    %1402 = arith.addf %1398, %1401 : vector<2x1xf32>
    %1403 = math.rsqrt %1402 : vector<2x1xf32>
    %1404 = vector.broadcast %1403 : vector<2x1xf32> to vector<2x128xf32>
    %1405 = arith.mulf %1400, %1404 : vector<2x128xf32>
    %1406 = vector.broadcast %14 : vector<1x128xf32> to vector<2x128xf32>
    %1407 = arith.mulf %1405, %1406 : vector<2x128xf32>
    %1408 = arith.addf %1387, %1407 : vector<2x128xf32>
    %1409 = vector.broadcast %20 : vector<1x128xf32> to vector<2x128xf32>
    %1410 = arith.addf %1408, %1409 : vector<2x128xf32>
    %1411 = vector.extract_strided_slice %1410 {offsets = [0, 0], sizes = [2, 96], strides = [1, 1]} : vector<2x128xf32> to vector<2x96xf32>
    %1412 = arith.negf %1411 : vector<2x96xf32>
    %1413 = math.exp %1412 : vector<2x96xf32>
    %cst_345 = arith.constant 1.000000e+00 : f32
    %1414 = vector.broadcast %cst_345 : f32 to vector<2x96xf32>
    %1415 = arith.addf %1414, %1413 : vector<2x96xf32>
    %1416 = arith.divf %1414, %1415 : vector<2x96xf32>
    %1417 = vector.extract_strided_slice %1410 {offsets = [0, 96], sizes = [2, 32], strides = [1, 1]} : vector<2x128xf32> to vector<2x32xf32>
    %1418 = math.tanh %1417 : vector<2x32xf32>
    %1419 = vector.extract_strided_slice %1416 {offsets = [0, 0], sizes = [2, 32], strides = [1, 1]} : vector<2x96xf32> to vector<2x32xf32>
    %1420 = vector.extract_strided_slice %1416 {offsets = [0, 32], sizes = [2, 32], strides = [1, 1]} : vector<2x96xf32> to vector<2x32xf32>
    %1421 = vector.extract_strided_slice %1416 {offsets = [0, 64], sizes = [2, 32], strides = [1, 1]} : vector<2x96xf32> to vector<2x32xf32>
    %1422 = arith.mulf %1420, %1247 : vector<2x32xf32>
    %1423 = arith.mulf %1419, %1418 : vector<2x32xf32>
    %1424 = arith.addf %1422, %1423 : vector<2x32xf32>
    %cst_346 = arith.constant dense<0.000000e+00> : vector<2xf32>
    %1425 = vector.multi_reduction <add>, %1424, %cst_346 [1] : vector<2x32xf32> to vector<2xf32>
    %1426 = vector.shape_cast %1425 : vector<2xf32> to vector<2x1xf32>
    %cst_347 = arith.constant 3.200000e+01 : f32
    %1427 = vector.broadcast %cst_347 : f32 to vector<2x1xf32>
    %1428 = arith.divf %1426, %1427 : vector<2x1xf32>
    %1429 = vector.broadcast %1428 : vector<2x1xf32> to vector<2x32xf32>
    %1430 = arith.subf %1424, %1429 : vector<2x32xf32>
    %1431 = arith.mulf %1430, %1430 : vector<2x32xf32>
    %cst_348 = arith.constant dense<0.000000e+00> : vector<2xf32>
    %1432 = vector.multi_reduction <add>, %1431, %cst_348 [1] : vector<2x32xf32> to vector<2xf32>
    %1433 = vector.shape_cast %1432 : vector<2xf32> to vector<2x1xf32>
    %cst_349 = arith.constant 3.200000e+01 : f32
    %1434 = vector.broadcast %cst_349 : f32 to vector<2x1xf32>
    %1435 = arith.divf %1433, %1434 : vector<2x1xf32>
    %1436 = vector.broadcast %1428 : vector<2x1xf32> to vector<2x32xf32>
    %1437 = arith.subf %1424, %1436 : vector<2x32xf32>
    %cst_350 = arith.constant 9.99999974E-6 : f32
    %1438 = vector.broadcast %cst_350 : f32 to vector<2x1xf32>
    %1439 = arith.addf %1435, %1438 : vector<2x1xf32>
    %1440 = math.rsqrt %1439 : vector<2x1xf32>
    %1441 = vector.broadcast %1440 : vector<2x1xf32> to vector<2x32xf32>
    %1442 = arith.mulf %1437, %1441 : vector<2x32xf32>
    %1443 = vector.broadcast %22 : vector<1x32xf32> to vector<2x32xf32>
    %1444 = arith.mulf %1442, %1443 : vector<2x32xf32>
    %1445 = vector.broadcast %24 : vector<1x32xf32> to vector<2x32xf32>
    %1446 = arith.addf %1444, %1445 : vector<2x32xf32>
    %1447 = math.tanh %1446 : vector<2x32xf32>
    %1448 = arith.mulf %1421, %1447 : vector<2x32xf32>
    %c8_i32 = arith.constant 8 : i32
    %c0_351 = arith.constant 0 : index
    %c0_352 = arith.constant 0 : index
    %c0_353 = arith.constant 0 : index
    %1449 = vector.load %arg10[%c0_351, %c0_352, %c0_353] : memref<2x2x32xf32, #tpu.memory_space<vmem>>, vector<1x2x32xf32>
    %1450 = vector.shape_cast %1449 : vector<1x2x32xf32> to vector<2x32xf32>
    %1451 = vector.shape_cast %1361 : vector<2x32xf32> to vector<1x2x32xf32>
    tpu.vector_store %arg10[%c0_351, %c0_352, %c0_353], %1451 {strides = array<i32>} : memref<2x2x32xf32, #tpu.memory_space<vmem>>, vector<1x2x32xf32>,
    %c0_354 = arith.constant 0 : index
    %c0_355 = arith.constant 0 : index
    %c0_356 = arith.constant 0 : index
    %1452 = vector.load %arg11[%c0_354, %c0_355, %c0_356] : memref<2x2x32xf32, #tpu.memory_space<vmem>>, vector<1x2x32xf32>
    %1453 = vector.shape_cast %1452 : vector<1x2x32xf32> to vector<2x32xf32>
    %1454 = vector.shape_cast %1337 : vector<2x32xf32> to vector<1x2x32xf32>
    tpu.vector_store %arg11[%c0_354, %c0_355, %c0_356], %1454 {strides = array<i32>} : memref<2x2x32xf32, #tpu.memory_space<vmem>>, vector<1x2x32xf32>,
    %c1_357 = arith.constant 1 : index
    %c0_358 = arith.constant 0 : index
    %c0_359 = arith.constant 0 : index
    %1455 = vector.load %arg10[%c1_357, %c0_358, %c0_359] : memref<2x2x32xf32, #tpu.memory_space<vmem>>, vector<1x2x32xf32>
    %1456 = vector.shape_cast %1455 : vector<1x2x32xf32> to vector<2x32xf32>
    %1457 = vector.shape_cast %1448 : vector<2x32xf32> to vector<1x2x32xf32>
    tpu.vector_store %arg10[%c1_357, %c0_358, %c0_359], %1457 {strides = array<i32>} : memref<2x2x32xf32, #tpu.memory_space<vmem>>, vector<1x2x32xf32>,
    %c1_360 = arith.constant 1 : index
    %c0_361 = arith.constant 0 : index
    %c0_362 = arith.constant 0 : index
    %1458 = vector.load %arg11[%c1_360, %c0_361, %c0_362] : memref<2x2x32xf32, #tpu.memory_space<vmem>>, vector<1x2x32xf32>
    %1459 = vector.shape_cast %1458 : vector<1x2x32xf32> to vector<2x32xf32>
    %1460 = vector.shape_cast %1424 : vector<2x32xf32> to vector<1x2x32xf32>
    tpu.vector_store %arg11[%c1_360, %c0_361, %c0_362], %1460 {strides = array<i32>} : memref<2x2x32xf32, #tpu.memory_space<vmem>>, vector<1x2x32xf32>,
    return
  }
  func.func @transform_0(%arg0: i32) -> (i32, i32, i32) {
    %c0_i32 = arith.constant 0 : i32
    %c0_i32_0 = arith.constant 0 : i32
    %c0_i32_1 = arith.constant 0 : i32
    return %arg0, %c0_i32, %c0_i32_0 : i32, i32, i32
  }
  func.func @transform_1(%arg0: i32) -> (i32, i32) {
    %c0_i32 = arith.constant 0 : i32
    %c0_i32_0 = arith.constant 0 : i32
    %c0_i32_1 = arith.constant 0 : i32
    return %c0_i32, %c0_i32_0 : i32, i32
  }
  func.func @transform_2(%arg0: i32) -> (i32, i32) {
    %c0_i32 = arith.constant 0 : i32
    %c0_i32_0 = arith.constant 0 : i32
    %c0_i32_1 = arith.constant 0 : i32
    return %c0_i32, %c0_i32_0 : i32, i32
  }
  func.func @transform_3(%arg0: i32) -> (i32, i32) {
    %c0_i32 = arith.constant 0 : i32
    %c0_i32_0 = arith.constant 0 : i32
    %c0_i32_1 = arith.constant 0 : i32
    return %c0_i32, %c0_i32_0 : i32, i32
  }
  func.func @transform_4(%arg0: i32) -> (i32, i32) {
    %c0_i32 = arith.constant 0 : i32
    %c0_i32_0 = arith.constant 0 : i32
    %c0_i32_1 = arith.constant 0 : i32
    return %c0_i32, %c0_i32_0 : i32, i32
  }
  func.func @transform_5(%arg0: i32) -> (i32, i32) {
    %c0_i32 = arith.constant 0 : i32
    %c0_i32_0 = arith.constant 0 : i32
    %c0_i32_1 = arith.constant 0 : i32
    return %c0_i32, %c0_i32_0 : i32, i32
  }
  func.func @transform_6(%arg0: i32) -> (i32, i32) {
    %c0_i32 = arith.constant 0 : i32
    %c0_i32_0 = arith.constant 0 : i32
    %c0_i32_1 = arith.constant 0 : i32
    return %c0_i32, %c0_i32_0 : i32, i32
  }
  func.func @transform_7(%arg0: i32) -> (i32, i32) {
    %c0_i32 = arith.constant 0 : i32
    %c0_i32_0 = arith.constant 0 : i32
    %c0_i32_1 = arith.constant 0 : i32
    return %c0_i32, %c0_i32_0 : i32, i32
  }
  func.func @transform_8(%arg0: i32) -> (i32, i32) {
    %c0_i32 = arith.constant 0 : i32
    %c0_i32_0 = arith.constant 0 : i32
    %c0_i32_1 = arith.constant 0 : i32
    return %c0_i32, %c0_i32_0 : i32, i32
  }
  func.func @transform_9(%arg0: i32) -> (i32, i32, i32) {
    %c0_i32 = arith.constant 0 : i32
    %c0_i32_0 = arith.constant 0 : i32
    %c0_i32_1 = arith.constant 0 : i32
    %c0_i32_2 = arith.constant 0 : i32
    return %c0_i32, %c0_i32_0, %c0_i32_1 : i32, i32, i32
  }
  func.func @transform_10(%arg0: i32) -> (i32, i32, i32) {
    %c0_i32 = arith.constant 0 : i32
    %c0_i32_0 = arith.constant 0 : i32
    %c0_i32_1 = arith.constant 0 : i32
    %c0_i32_2 = arith.constant 0 : i32
    return %c0_i32, %c0_i32_0, %c0_i32_1 : i32, i32, i32
  }
}

</mosaic_0001>

<llo_original>
// kernel: layer_norm_lstm_forward.1
$region0: #{layer_norm_lstm_forward.1}
  #allocation0 [shape = 'u32[]', space=smem, size = 0x4, offset = 0x4, fixed_abs, tag = 'smem constant byte address 0x4 - core index']
  #allocation1 [shape = 'u32[72,128]{1,0:T(1,128)}', space=vmem, size = 0x9000, scoped, tag = 'internal scratch']
  %s0 = inlined_call_operand.hbm [shape: f32[8,2,16], index: 0, kind: input, shape index: {}]
  %s1 = inlined_call_operand.hbm [shape: f32[16,128], index: 1, kind: input, shape index: {}]
  %s2 = inlined_call_operand.hbm [shape: f32[32,128], index: 2, kind: input, shape index: {}]
  %s3 = inlined_call_operand.hbm [shape: f32[6,128], index: 3, kind: input, shape index: {}]
  %s4 = inlined_call_operand.hbm [shape: f32[2,32], index: 4, kind: input, shape index: {}]
  %s5 = inlined_call_operand.hbm [shape: f32[32,128], index: 5, kind: input, shape index: {}]
  %s6 = inlined_call_operand.hbm [shape: f32[32,128], index: 6, kind: input, shape index: {}]
  %s7 = inlined_call_operand.hbm [shape: f32[6,128], index: 7, kind: input, shape index: {}]
  %s8 = inlined_call_operand.vmem [shape: f32[2,32], index: 8, kind: input, shape index: {}]
  %s9 = inlined_call_operand.vmem [shape: f32[2,2,32], index: 9, kind: output, shape index: {0}]
  %s10 = inlined_call_operand.hbm [shape: f32[2,2,32], index: 10, kind: output, shape index: {1}]
  %11 = xla_tuple %s9, %s10
  %s12 = sld [smem:[#allocation0]]
  $region90: #{layer_norm_lstm_forward.1} parent=0
    _
  %s14 = ssub.s32 1, %s12
  %s15 = scalar_select 0, %s14, %s12
  $region1: #{layer_norm_lstm_forward.1} parent=0
    #allocation2 [shape = 'u8[8192]{0}', space=vmem, size = 0x2000, scoped, tag = 'input window, operand 0, single buffered']
    #allocation3 [shape = 's32[1]{0}', space=sflag, size = 0x4, scoped, tag = 'scoped memory for layer_norm_lstm_forward.1']
    #allocation4 [shape = 's32[1]{0}', space=sflag, size = 0x4, scoped, tag = 'scoped memory for layer_norm_lstm_forward.1']
    #allocation5 [shape = 'u8[8192]{0}', space=vmem, size = 0x2000, scoped, tag = 'input window, operand 1, single buffered']
    #allocation6 [shape = 's32[1]{0}', space=sflag, size = 0x4, scoped, tag = 'scoped memory for layer_norm_lstm_forward.1']
    #allocation7 [shape = 'u8[16384]{0}', space=vmem, size = 0x4000, scoped, tag = 'input window, operand 2, single buffered']
    #allocation8 [shape = 'u8[4096]{0}', space=vmem, size = 0x1000, scoped, tag = 'input window, operand 3, single buffered']
    #allocation9 [shape = 's32[1]{0}', space=sflag, size = 0x4, scoped, tag = 'scoped memory for layer_norm_lstm_forward.1']
    #allocation10 [shape = 'u8[1024]{0}', space=vmem, size = 0x400, scoped, tag = 'input window, operand 4, single buffered']
    #allocation11 [shape = 'u8[16384]{0}', space=vmem, size = 0x4000, scoped, tag = 'input window, operand 5, single buffered']
    #allocation12 [shape = 's32[1]{0}', space=sflag, size = 0x4, scoped, tag = 'scoped memory for layer_norm_lstm_forward.1']
    #allocation13 [shape = 'u8[16384]{0}', space=vmem, size = 0x4000, scoped, tag = 'input window, operand 6, single buffered']
    #allocation14 [shape = 'u8[4096]{0}', space=vmem, size = 0x1000, scoped, tag = 'input window, operand 7, single buffered']
    #allocation15 [shape = 's32[1]{0}', space=sflag, size = 0x4, scoped, tag = 'scoped memory for layer_norm_lstm_forward.1']
    #allocation16 [shape = 'u8[2048]{0}', space=vmem, size = 0x800, scoped, tag = 'output window, operand 1, single buffered']
    %16 = vsyncpa [#allocation3], 0
    %17 = vsyncpa [#allocation6], 0
    %18 = vsyncpa [#allocation9], 0
    %19 = vsyncpa [#allocation12], 0
    %20 = vsyncpa [#allocation15], 0
    %21 = vsyncpa [#allocation4], 0
    // Predicated region
    $region2: #{layer_norm_lstm_forward.1} parent=1 // pred_check
      _
    $region3: #{layer_norm_lstm_forward.1} parent=1 // pred_check_branch
      %23 = sbr.rel (0) target = $region5
    $region4: #{layer_norm_lstm_forward.1} parent=1 // pred_region
      %25 = vsyncadd [#allocation3], 0
      %s26 = sshll.u32 %s0, 4
      %s27 = int_to_ptr.hbm [resolvable:$true] %s26
      %s28 = sshll.u32 [#allocation2], 4
      %s29 = int_to_ptr.vmem [resolvable:$true] %s28
      %34 = dma.hbm_to_vmem [thread:$0]  %s27, 256, %s29, [#allocation3], 32, 32, 2
    $region5: #{layer_norm_lstm_forward.1} parent=1 // pred_fallthru
      _
    // Predicated region
    $region6: #{layer_norm_lstm_forward.1} parent=1 // pred_check
      _
    $region7: #{layer_norm_lstm_forward.1} parent=1 // pred_check_branch
      %36 = sbr.rel (0) target = $region9
    $region8: #{layer_norm_lstm_forward.1} parent=1 // pred_region
      %38 = vsyncadd [#allocation6], 0
      %s39 = sshll.u32 %s1, 4
      %s40 = int_to_ptr.hbm [resolvable:$true] %s39
      %s41 = sshll.u32 [#allocation5], 4
      %s42 = int_to_ptr.vmem [resolvable:$true] %s41
      %47 = dma.hbm_to_vmem [thread:$0]  %s40, 256, %s42, [#allocation6], 128, 128, 8
    $region9: #{layer_norm_lstm_forward.1} parent=1 // pred_fallthru
      _
    // Predicated region
    $region10: #{layer_norm_lstm_forward.1} parent=1 // pred_check
      _
    $region11: #{layer_norm_lstm_forward.1} parent=1 // pred_check_branch
      %49 = sbr.rel (0) target = $region13
    $region12: #{layer_norm_lstm_forward.1} parent=1 // pred_region
      %51 = vsyncadd [#allocation6], 0
      %s52 = sshll.u32 %s2, 4
      %s53 = int_to_ptr.hbm [resolvable:$true] %s52
      %s54 = sshll.u32 [#allocation7], 4
      %s55 = int_to_ptr.vmem [resolvable:$true] %s54
      %60 = dma.hbm_to_vmem [thread:$0]  %s53, 512, %s55, [#allocation6], 128, 128, 8
    $region13: #{layer_norm_lstm_forward.1} parent=1 // pred_fallthru
      _
    // Predicated region
    $region14: #{layer_norm_lstm_forward.1} parent=1 // pred_check
      _
    $region15: #{layer_norm_lstm_forward.1} parent=1 // pred_check_branch
      %62 = sbr.rel (0) target = $region17
    $region16: #{layer_norm_lstm_forward.1} parent=1 // pred_region
      %64 = vsyncadd [#allocation9], 0
      %s66 = sshll.u32 %s3, 4
      %s67 = int_to_ptr.hbm [resolvable:$true] %s66
      %s68 = sshll.u32 [#allocation8], 4
      %s69 = int_to_ptr.vmem [resolvable:$true] %s68
      %71 = dma.hbm_to_vmem [thread:$0]  %s67, 128, %s69, [#allocation9]
    $region17: #{layer_norm_lstm_forward.1} parent=1 // pred_fallthru
      _
    // Predicated region
    $region18: #{layer_norm_lstm_forward.1} parent=1 // pred_check
      _
    $region19: #{layer_norm_lstm_forward.1} parent=1 // pred_check_branch
      %73 = sbr.rel (0) target = $region21
    $region20: #{layer_norm_lstm_forward.1} parent=1 // pred_region
      %75 = vsyncadd [#allocation9], 0
      %s77 = sshll.u32 %s4, 4
      %s78 = int_to_ptr.hbm [resolvable:$true] %s77
      %s79 = sshll.u32 [#allocation10], 4
      %s80 = int_to_ptr.vmem [resolvable:$true] %s79
      %82 = dma.hbm_to_vmem [thread:$0]  %s78, 32, %s80, [#allocation9]
    $region21: #{layer_norm_lstm_forward.1} parent=1 // pred_fallthru
      _
    // Predicated region
    $region22: #{layer_norm_lstm_forward.1} parent=1 // pred_check
      _
    $region23: #{layer_norm_lstm_forward.1} parent=1 // pred_check_branch
      %84 = sbr.rel (0) target = $region25
    $region24: #{layer_norm_lstm_forward.1} parent=1 // pred_region
      %86 = vsyncadd [#allocation12], 0
      %s87 = sshll.u32 %s5, 4
      %s88 = int_to_ptr.hbm [resolvable:$true] %s87
      %s89 = sshll.u32 [#allocation11], 4
      %s90 = int_to_ptr.vmem [resolvable:$true] %s89
      %95 = dma.hbm_to_vmem [thread:$0]  %s88, 512, %s90, [#allocation12], 128, 128, 8
    $region25: #{layer_norm_lstm_forward.1} parent=1 // pred_fallthru
      _
    // Predicated region
    $region26: #{layer_norm_lstm_forward.1} parent=1 // pred_check
      _
    $region27: #{layer_norm_lstm_forward.1} parent=1 // pred_check_branch
      %97 = sbr.rel (0) target = $region29
    $region28: #{layer_norm_lstm_forward.1} parent=1 // pred_region
      %99 = vsyncadd [#allocation12], 0
      %s100 = sshll.u32 %s6, 4
      %s101 = int_to_ptr.hbm [resolvable:$true] %s100
      %s102 = sshll.u32 [#allocation13], 4
      %s103 = int_to_ptr.vmem [resolvable:$true] %s102
      %108 = dma.hbm_to_vmem [thread:$0]  %s101, 512, %s103, [#allocation12], 128, 128, 8
    $region29: #{layer_norm_lstm_forward.1} parent=1 // pred_fallthru
      _
    // Predicated region
    $region30: #{layer_norm_lstm_forward.1} parent=1 // pred_check
      _
    $region31: #{layer_norm_lstm_forward.1} parent=1 // pred_check_branch
      %110 = sbr.rel (0) target = $region33
    $region32: #{layer_norm_lstm_forward.1} parent=1 // pred_region
      %112 = vsyncadd [#allocation15], 0
      %s114 = sshll.u32 %s7, 4
      %s115 = int_to_ptr.hbm [resolvable:$true] %s114
      %s116 = sshll.u32 [#allocation14], 4
      %s117 = int_to_ptr.vmem [resolvable:$true] %s116
      %119 = dma.hbm_to_vmem [thread:$0]  %s115, 128, %s117, [#allocation15]
    $region33: #{layer_norm_lstm_forward.1} parent=1 // pred_fallthru
      _
    // Predicated region
    $region34: #{layer_norm_lstm_forward.1} parent=1 // pred_check
      _
    $region35: #{layer_norm_lstm_forward.1} parent=1 // pred_check_branch
      %121 = sbr.rel (0) target = $region37
    $region36: #{layer_norm_lstm_forward.1} parent=1 // pred_region
      _
    $region37: #{layer_norm_lstm_forward.1} parent=1 // pred_fallthru
      _
    // Predicated region
    $region38: #{layer_norm_lstm_forward.1} parent=1 // pred_check
      _
    $region39: #{layer_norm_lstm_forward.1} parent=1 // pred_check_branch
      %123 = sbr.rel (0) target = $region41
    $region40: #{layer_norm_lstm_forward.1} parent=1 // pred_region
      %125 = dma.done [#allocation3], 256
    $region41: #{layer_norm_lstm_forward.1} parent=1 // pred_fallthru
      _
    // Predicated region
    $region42: #{layer_norm_lstm_forward.1} parent=1 // pred_check
      _
    $region43: #{layer_norm_lstm_forward.1} parent=1 // pred_check_branch
      %127 = sbr.rel (0) target = $region45
    $region44: #{layer_norm_lstm_forward.1} parent=1 // pred_region
      %129 = dma.done [#allocation6], 256
    $region45: #{layer_norm_lstm_forward.1} parent=1 // pred_fallthru
      _
    // Predicated region
    $region46: #{layer_norm_lstm_forward.1} parent=1 // pred_check
      _
    $region47: #{layer_norm_lstm_forward.1} parent=1 // pred_check_branch
      %131 = sbr.rel (0) target = $region49
    $region48: #{layer_norm_lstm_forward.1} parent=1 // pred_region
      %133 = dma.done [#allocation6], 512
    $region49: #{layer_norm_lstm_forward.1} parent=1 // pred_fallthru
      _
    // Predicated region
    $region50: #{layer_norm_lstm_forward.1} parent=1 // pred_check
      _
    $region51: #{layer_norm_lstm_forward.1} parent=1 // pred_check_branch
      %135 = sbr.rel (0) target = $region53
    $region52: #{layer_norm_lstm_forward.1} parent=1 // pred_region
      %137 = dma.done [#allocation9], 128
    $region53: #{layer_norm_lstm_forward.1} parent=1 // pred_fallthru
      _
    // Predicated region
    $region54: #{layer_norm_lstm_forward.1} parent=1 // pred_check
      _
    $region55: #{layer_norm_lstm_forward.1} parent=1 // pred_check_branch
      %139 = sbr.rel (0) target = $region57
    $region56: #{layer_norm_lstm_forward.1} parent=1 // pred_region
      %141 = dma.done [#allocation9], 32
    $region57: #{layer_norm_lstm_forward.1} parent=1 // pred_fallthru
      _
    // Predicated region
    $region58: #{layer_norm_lstm_forward.1} parent=1 // pred_check
      _
    $region59: #{layer_norm_lstm_forward.1} parent=1 // pred_check_branch
      %143 = sbr.rel (0) target = $region61
    $region60: #{layer_norm_lstm_forward.1} parent=1 // pred_region
      %145 = dma.done [#allocation12], 512
    $region61: #{layer_norm_lstm_forward.1} parent=1 // pred_fallthru
      _
    // Predicated region
    $region62: #{layer_norm_lstm_forward.1} parent=1 // pred_check
      _
    $region63: #{layer_norm_lstm_forward.1} parent=1 // pred_check_branch
      %147 = sbr.rel (0) target = $region65
    $region64: #{layer_norm_lstm_forward.1} parent=1 // pred_region
      %149 = dma.done [#allocation12], 512
    $region65: #{layer_norm_lstm_forward.1} parent=1 // pred_fallthru
      _
    // Predicated region
    $region66: #{layer_norm_lstm_forward.1} parent=1 // pred_check
      _
    $region67: #{layer_norm_lstm_forward.1} parent=1 // pred_check_branch
      %151 = sbr.rel (0) target = $region69
    $region68: #{layer_norm_lstm_forward.1} parent=1 // pred_region
      %153 = dma.done [#allocation15], 128
    $region69: #{layer_norm_lstm_forward.1} parent=1 // pred_fallthru
      _
    %p154 = scmp.eq.s32.totalorder 0, 0
    // Predicated region
    $region70: #{layer_norm_lstm_forward.1} parent=1 // pred_check
      %p155 = pneg %p154
    $region71: #{layer_norm_lstm_forward.1} parent=1 // pred_check_branch
      %157 = sbr.rel (%p155) target = $region73
    $region72: #{layer_norm_lstm_forward.1} parent=1 // pred_region
      %vm158 = vcmask 254976
      %159 = vst.msk [vmem:[%s9] sm:$0x3] %vm158, 0.0
      %160 = vst.msk [vmem:[%s9 + $0x2] sm:$0x3] %vm158, 0.0
      %161 = vst.msk [vmem:[#allocation16] sm:$0x3] %vm158, 0.0
      %162 = vst.msk [vmem:[#allocation16 + $0x2] sm:$0x3] %vm158, 0.0
    $region73: #{layer_norm_lstm_forward.1} parent=1 // pred_fallthru
      _
    %v163 = vld [vmem:[#allocation5] sm:$0xff]
    %v164 = vld [vmem:[#allocation5 + $0x8] sm:$0xff]
    %v165 = vld [vmem:[#allocation11] sm:$0xff]
    %v166 = vld [vmem:[#allocation11 + $0x8] sm:$0xff]
    %v167 = vld [vmem:[#allocation11 + $0x10] sm:$0xff]
    %v168 = vld [vmem:[#allocation11 + $0x18] sm:$0xff]
    %v169 = vld [vmem:[#allocation7] sm:$0xff]
    %v170 = vld [vmem:[#allocation7 + $0x8] sm:$0xff]
    %v171 = vld [vmem:[#allocation7 + $0x10] sm:$0xff]
    %v172 = vld [vmem:[#allocation7 + $0x18] sm:$0xff]
    %v173 = vld [vmem:[#allocation13] sm:$0xff]
    %v174 = vld [vmem:[#allocation13 + $0x8] sm:$0xff]
    %v175 = vld [vmem:[#allocation13 + $0x10] sm:$0xff]
    %v176 = vld [vmem:[#allocation13 + $0x18] sm:$0xff]
    %v177 = vld [vmem:[#allocation8] sm:$0x1]
    %v178 = vld [vmem:[#allocation14] sm:$0x1]
    %v179 = vld [vmem:[#allocation8 + $0x1] sm:$0x1]
    %v180 = vld [vmem:[#allocation14 + $0x1] sm:$0x1]
    %v181 = vld [vmem:[#allocation8 + $0x2] sm:$0x1]
    %v182 = vld [vmem:[#allocation14 + $0x2] sm:$0x1]
    %v183 = vld [vmem:[#allocation8 + $0x4] sm:$0x1]
    %v184 = vld [vmem:[#allocation14 + $0x4] sm:$0x1]
    %v185 = vld [vmem:[#allocation8 + $0x3] sm:$0x1]
    %v186 = vld [vmem:[#allocation8 + $0x5] sm:$0x1]
    %v187 = vadd.f32 %v185, %v186
    %v188 = vld [vmem:[#allocation14 + $0x3] sm:$0x1]
    %v189 = vld [vmem:[#allocation14 + $0x5] sm:$0x1]
    %v190 = vadd.f32 %v188, %v189
    %v191 = vld [vmem:[#allocation10] sm:$0x1]
    %v192 = vld [vmem:[%s8] sm:$0x1]
    %v193 = vld [vmem:[#allocation10 + $0x1] sm:$0x1]
    %v194 = vld [vmem:[%s8 + $0x1] sm:$0x1]
    %v195 = vld [vmem:[%s9] sm:$0x3]
    %s196 = scalar_lea.vmem %s9, 2
    %v197 = vld [vmem:[%s196] sm:$0x3]
    %v198 = vld [vmem:[#allocation16] sm:$0x3]
    %s199 = scalar_lea.vmem [#allocation16], 2
    %v200 = vld [vmem:[%s199] sm:$0x3]
    %v201 = vld [vmem:[#allocation2] sm:$0x3]
    %v202 = vperm.slane %v177, 0
    %vm203 = vcmask 130048
    %v205 = vsel %vm203, %v201, 0
    %207 = vmatpush.msra.mxu0 0.0
    %208 = vmatpush.msra.mxu0 0.0
    %209 = vmatpush.msra.mxu0 0.0
    %210 = vmatpush.msra.mxu0 0.0
    %211 = vmatpush.msra.mxu0 0.0
    %212 = vmatpush.msra.mxu0 0.0
    %213 = vmatpush.msra.mxu0 0.0
    %214 = vmatpush.msra.mxu0 0.0
    %215 = vmatpush.msra.mxu0 0.0
    %216 = vmatpush.msra.mxu0 0.0
    %217 = vmatpush.msra.mxu0 0.0
    %218 = vmatpush.msra.mxu0 0.0
    %219 = vmatpush.msra.mxu0 0.0
    %220 = vmatpush.msra.mxu0 0.0
    %221 = vmatpush.msra.mxu0 %v164
    %222 = vmatpush.msra.mxu0 %v163
    %223 = vmatmul.f32.gmra.mxu0 %v205
    %v224 = vpop.f32.mrf.mxu0
    %v225 = vadd.f32 %v202, %v224
    %226 = vdwg.mxu0
    %v227 = vperm.slane %v179, 0
    %vm228 = vcmask 261120
    %v230 = vsel %vm228, %v195, 0
    %232 = vmatpush.msra.mxu0 0.0
    %233 = vmatpush.msra.mxu0 0.0
    %234 = vmatpush.msra.mxu0 0.0
    %235 = vmatpush.msra.mxu0 0.0
    %236 = vmatpush.msra.mxu0 0.0
    %237 = vmatpush.msra.mxu0 0.0
    %238 = vmatpush.msra.mxu0 0.0
    %239 = vmatpush.msra.mxu0 0.0
    %240 = vmatpush.msra.mxu0 0.0
    %241 = vmatpush.msra.mxu0 0.0
    %242 = vmatpush.msra.mxu0 0.0
    %243 = vmatpush.msra.mxu0 0.0
    %244 = vmatpush.msra.mxu0 %v172
    %245 = vmatpush.msra.mxu0 %v171
    %246 = vmatpush.msra.mxu0 %v170
    %247 = vmatpush.msra.mxu0 %v169
    %248 = vmatmul.f32.gmra.mxu0 %v230
    %v249 = vpop.f32.mrf.mxu0
    %v250 = vadd.f32 %v227, %v249
    %251 = vdwg.mxu0
    %vm252 = vcmask 1041408
    %v253 = vsel %vm252, %v225, 0.0
    %254 = vadd.xlane.f32.xlu0 %v253
    %v255 = vpop.xlane.xlu0 %254
    %v256 = vrcp.pop 128.0
    %v257 = vmul.f32 128.0, %v256
    %v258 = vsub.f32 1.0, %v257
    %v259 = vmul.f32 %v256, %v258
    %v260 = vadd.f32 %v256, %v259
    %vm261 = vweird.f32 %v256
    %v262 = vsel %vm261, %v256, %v260
    %v263 = vmul.f32 %v255, %v262
    %v264 = vsub.f32 %v225, %v263
    %v265 = vmul.f32 %v264, %v264
    %v266 = vsel %vm252, %v265, 0.0
    %267 = vadd.xlane.f32.xlu0 %v266
    %v268 = vpop.xlane.xlu0 %267
    %v269 = vmul.f32 %v268, %v262
    %v270 = vadd.f32 %v269, 1e-05
    %v271 = vrsqrt.pop %v270
    %v272 = vmul.f32 %v271, %v270
    %v273 = vmul.f32 %v272, %v271
    %v274 = vmul.f32 0.5, %v273
    %v275 = vsub.f32 1.5, %v274
    %v276 = vmul.f32 %v271, %v275
    %vm277 = vweird.f32 %v270
    %vm278 = vweird.f32 %v271
    %vm279 = vmor %vm277, %vm278
    %v280 = vsel %vm279, %v271, %v276
    %v281 = vmul.f32 %v264, %v280
    %v282 = vperm.slane %v181, 0
    %v283 = vmul.f32 %v281, %v282
    %v284 = vsel %vm252, %v250, 0.0
    %285 = vadd.xlane.f32.xlu0 %v284
    %v286 = vpop.xlane.xlu0 %285
    %v287 = vmul.f32 %v286, %v262
    %v288 = vsub.f32 %v250, %v287
    %v289 = vmul.f32 %v288, %v288
    %v290 = vsel %vm252, %v289, 0.0
    %291 = vadd.xlane.f32.xlu0 %v290
    %v292 = vpop.xlane.xlu0 %291
    %v293 = vmul.f32 %v292, %v262
    %v294 = vadd.f32 %v293, 1e-05
    %v295 = vrsqrt.pop %v294
    %v296 = vmul.f32 %v295, %v294
    %v297 = vmul.f32 %v296, %v295
    %v298 = vmul.f32 0.5, %v297
    %v299 = vsub.f32 1.5, %v298
    %v300 = vmul.f32 %v295, %v299
    %vm301 = vweird.f32 %v294
    %vm302 = vweird.f32 %v295
    %vm303 = vmor %vm301, %vm302
    %v304 = vsel %vm303, %v295, %v300
    %v305 = vmul.f32 %v288, %v304
    %v306 = vperm.slane %v183, 0
    %v307 = vmul.f32 %v305, %v306
    %v308 = vadd.f32 %v283, %v307
    %v309 = vperm.slane %v187, 0
    %v310 = vadd.f32 %v308, %v309
    %v311 = vxor.u32 %v310, 2147483648
    %v312 = vmul.f32 %v311, 1.442695
    %v313 = vpow.pop %v312
    %v314 = vadd.f32 %v313, 1.0
    %v315 = vrcp.pop %v314
    %v316 = vmul.f32 %v314, %v315
    %v317 = vsub.f32 1.0, %v316
    %v318 = vmul.f32 %v315, %v317
    %v319 = vadd.f32 %v315, %v318
    %vm320 = vweird.f32 %v314
    %vm321 = vweird.f32 %v315
    %vm322 = vmor %vm320, %vm321
    %v323 = vsel %vm322, %v315, %v319
    %v324 = vand.u32 2147483647, %v314
    %vm325 = vcmp.eq.f32.partialorder %v324, 8.507059e+37
    %v326 = vand.u32 %v314, 2147483648
    %v327 = vor.u32 1.1754944e-38, %v326
    %v328 = vsel %vm325, %v327, %v323
    %v329 = vmul.f32 1.0, %v328
    %v330 = vtanh.pop %v310
    %332 = vrot.lane.b32.xlu0 %v198, 32
    %v333 = vpop.permute.xlu0 %332
    %v335 = vmul.f32 %v329, %v333
    %337 = vrot.lane.b32.xlu0 %v330, 32
    %v338 = vpop.permute.xlu0 %337
    %v340 = vmul.f32 %v329, %v338
    %342 = vrot.lane.b32.xlu0 %v340, 32
    %v343 = vpop.permute.xlu0 %342
    %v345 = vadd.f32 %v335, %v343
    %347 = vrot.lane.b32.xlu0 %v345, 96
    %v348 = vpop.permute.xlu0 %347
    %vm350 = vcmask 254976
    %v351 = vsel %vm350, %v348, 0.0
    %352 = vadd.xlane.f32.xlu0 %v351
    %v353 = vpop.xlane.xlu0 %352
    %v354 = vrcp.pop 32.0
    %v355 = vmul.f32 32.0, %v354
    %v356 = vsub.f32 1.0, %v355
    %v357 = vmul.f32 %v354, %v356
    %v358 = vadd.f32 %v354, %v357
    %vm359 = vweird.f32 %v354
    %v360 = vsel %vm359, %v354, %v358
    %v361 = vmul.f32 %v353, %v360
    %v362 = vsub.f32 %v345, %v361
    %v363 = vmul.f32 %v362, %v362
    %365 = vrot.lane.b32.xlu0 %v363, 96
    %v366 = vpop.permute.xlu0 %365
    %v368 = vsel %vm350, %v366, 0.0
    %369 = vadd.xlane.f32.xlu0 %v368
    %v370 = vpop.xlane.xlu0 %369
    %v371 = vmul.f32 %v370, %v360
    %v372 = vadd.f32 %v371, 1e-05
    %v373 = vrsqrt.pop %v372
    %v374 = vmul.f32 %v373, %v372
    %v375 = vmul.f32 %v374, %v373
    %v376 = vmul.f32 0.5, %v375
    %v377 = vsub.f32 1.5, %v376
    %v378 = vmul.f32 %v373, %v377
    %vm379 = vweird.f32 %v372
    %vm380 = vweird.f32 %v373
    %vm381 = vmor %vm379, %vm380
    %v382 = vsel %vm381, %v373, %v378
    %v383 = vmul.f32 %v362, %v382
    %v384 = vperm.slane %v191, 0
    %386 = vrot.lane.b32.xlu0 %v384, 32
    %v387 = vpop.permute.xlu0 %386
    %v389 = vmul.f32 %v383, %v387
    %v390 = vperm.slane %v193, 0
    %392 = vrot.lane.b32.xlu0 %v390, 32
    %v393 = vpop.permute.xlu0 %392
    %v395 = vadd.f32 %v389, %v393
    %v396 = vtanh.pop %v395
    %398 = vrot.lane.b32.xlu0 %v396, 32
    %v399 = vpop.permute.xlu0 %398
    %v401 = vmul.f32 %v329, %v399
    %v402 = vperm.slane %v178, 0
    %404 = vrot.lane.b32.xlu0 %v401, 64
    %v405 = vpop.permute.xlu0 %404
    %v406 = vsel %vm228, %v405, 0
    %408 = vmatpush.msra.mxu0 0.0
    %409 = vmatpush.msra.mxu0 0.0
    %410 = vmatpush.msra.mxu0 0.0
    %411 = vmatpush.msra.mxu0 0.0
    %412 = vmatpush.msra.mxu0 0.0
    %413 = vmatpush.msra.mxu0 0.0
    %414 = vmatpush.msra.mxu0 0.0
    %415 = vmatpush.msra.mxu0 0.0
    %416 = vmatpush.msra.mxu0 0.0
    %417 = vmatpush.msra.mxu0 0.0
    %418 = vmatpush.msra.mxu0 0.0
    %419 = vmatpush.msra.mxu0 0.0
    %420 = vmatpush.msra.mxu0 %v168
    %421 = vmatpush.msra.mxu0 %v167
    %422 = vmatpush.msra.mxu0 %v166
    %423 = vmatpush.msra.mxu0 %v165
    %424 = vmatmul.f32.gmra.mxu0 %v406
    %v425 = vpop.f32.mrf.mxu0
    %v426 = vadd.f32 %v402, %v425
    %427 = vdwg.mxu0
    %v428 = vperm.slane %v180, 0
    %v430 = vsel %vm228, %v197, 0
    %432 = vmatpush.msra.mxu0 0.0
    %433 = vmatpush.msra.mxu0 0.0
    %434 = vmatpush.msra.mxu0 0.0
    %435 = vmatpush.msra.mxu0 0.0
    %436 = vmatpush.msra.mxu0 0.0
    %437 = vmatpush.msra.mxu0 0.0
    %438 = vmatpush.msra.mxu0 0.0
    %439 = vmatpush.msra.mxu0 0.0
    %440 = vmatpush.msra.mxu0 0.0
    %441 = vmatpush.msra.mxu0 0.0
    %442 = vmatpush.msra.mxu0 0.0
    %443 = vmatpush.msra.mxu0 0.0
    %444 = vmatpush.msra.mxu0 %v176
    %445 = vmatpush.msra.mxu0 %v175
    %446 = vmatpush.msra.mxu0 %v174
    %447 = vmatpush.msra.mxu0 %v173
    %448 = vmatmul.f32.gmra.mxu0 %v430
    %v449 = vpop.f32.mrf.mxu0
    %v450 = vadd.f32 %v428, %v449
    %451 = vdwg.mxu0
    %v452 = vsel %vm252, %v426, 0.0
    %453 = vadd.xlane.f32.xlu0 %v452
    %v454 = vpop.xlane.xlu0 %453
    %v455 = vmul.f32 %v454, %v262
    %v456 = vsub.f32 %v426, %v455
    %v457 = vmul.f32 %v456, %v456
    %v458 = vsel %vm252, %v457, 0.0
    %459 = vadd.xlane.f32.xlu0 %v458
    %v460 = vpop.xlane.xlu0 %459
    %v461 = vmul.f32 %v460, %v262
    %v462 = vadd.f32 %v461, 1e-05
    %v463 = vrsqrt.pop %v462
    %v464 = vmul.f32 %v463, %v462
    %v465 = vmul.f32 %v464, %v463
    %v466 = vmul.f32 0.5, %v465
    %v467 = vsub.f32 1.5, %v466
    %v468 = vmul.f32 %v463, %v467
    %vm469 = vweird.f32 %v462
    %vm470 = vweird.f32 %v463
    %vm471 = vmor %vm469, %vm470
    %v472 = vsel %vm471, %v463, %v468
    %v473 = vmul.f32 %v456, %v472
    %v474 = vperm.slane %v182, 0
    %v475 = vmul.f32 %v473, %v474
    %v476 = vsel %vm252, %v450, 0.0
    %477 = vadd.xlane.f32.xlu0 %v476
    %v478 = vpop.xlane.xlu0 %477
    %v479 = vmul.f32 %v478, %v262
    %v480 = vsub.f32 %v450, %v479
    %v481 = vmul.f32 %v480, %v480
    %v482 = vsel %vm252, %v481, 0.0
    %483 = vadd.xlane.f32.xlu0 %v482
    %v484 = vpop.xlane.xlu0 %483
    %v485 = vmul.f32 %v484, %v262
    %v486 = vadd.f32 %v485, 1e-05
    %v487 = vrsqrt.pop %v486
    %v488 = vmul.f32 %v487, %v486
    %v489 = vmul.f32 %v488, %v487
    %v490 = vmul.f32 0.5, %v489
    %v491 = vsub.f32 1.5, %v490
    %v492 = vmul.f32 %v487, %v491
    %vm493 = vweird.f32 %v486
    %vm494 = vweird.f32 %v487
    %vm495 = vmor %vm493, %vm494
    %v496 = vsel %vm495, %v487, %v492
    %v497 = vmul.f32 %v480, %v496
    %v498 = vperm.slane %v184, 0
    %v499 = vmul.f32 %v497, %v498
    %v500 = vadd.f32 %v475, %v499
    %v501 = vperm.slane %v190, 0
    %v502 = vadd.f32 %v500, %v501
    %v503 = vxor.u32 %v502, 2147483648
    %v504 = vmul.f32 %v503, 1.442695
    %v505 = vpow.pop %v504
    %v506 = vadd.f32 %v505, 1.0
    %v507 = vrcp.pop %v506
    %v508 = vmul.f32 %v506, %v507
    %v509 = vsub.f32 1.0, %v508
    %v510 = vmul.f32 %v507, %v509
    %v511 = vadd.f32 %v507, %v510
    %vm512 = vweird.f32 %v506
    %vm513 = vweird.f32 %v507
    %vm514 = vmor %vm512, %vm513
    %v515 = vsel %vm514, %v507, %v511
    %v516 = vand.u32 2147483647, %v506
    %vm517 = vcmp.eq.f32.partialorder %v516, 8.507059e+37
    %v518 = vand.u32 %v506, 2147483648
    %v519 = vor.u32 1.1754944e-38, %v518
    %v520 = vsel %vm517, %v519, %v515
    %v521 = vmul.f32 1.0, %v520
    %v522 = vtanh.pop %v502
    %524 = vrot.lane.b32.xlu0 %v200, 32
    %v525 = vpop.permute.xlu0 %524
    %v527 = vmul.f32 %v521, %v525
    %529 = vrot.lane.b32.xlu0 %v522, 32
    %v530 = vpop.permute.xlu0 %529
    %v532 = vmul.f32 %v521, %v530
    %534 = vrot.lane.b32.xlu0 %v532, 32
    %v535 = vpop.permute.xlu0 %534
    %v537 = vadd.f32 %v527, %v535
    %539 = vrot.lane.b32.xlu0 %v537, 96
    %v540 = vpop.permute.xlu0 %539
    %v542 = vsel %vm350, %v540, 0.0
    %543 = vadd.xlane.f32.xlu0 %v542
    %v544 = vpop.xlane.xlu0 %543
    %v545 = vmul.f32 %v544, %v360
    %v546 = vsub.f32 %v537, %v545
    %v547 = vmul.f32 %v546, %v546
    %549 = vrot.lane.b32.xlu0 %v547, 96
    %v550 = vpop.permute.xlu0 %549
    %v552 = vsel %vm350, %v550, 0.0
    %553 = vadd.xlane.f32.xlu0 %v552
    %v554 = vpop.xlane.xlu0 %553
    %v555 = vmul.f32 %v554, %v360
    %v556 = vadd.f32 %v555, 1e-05
    %v557 = vrsqrt.pop %v556
    %v558 = vmul.f32 %v557, %v556
    %v559 = vmul.f32 %v558, %v557
    %v560 = vmul.f32 0.5, %v559
    %v561 = vsub.f32 1.5, %v560
    %v562 = vmul.f32 %v557, %v561
    %vm563 = vweird.f32 %v556
    %vm564 = vweird.f32 %v557
    %vm565 = vmor %vm563, %vm564
    %v566 = vsel %vm565, %v557, %v562
    %v567 = vmul.f32 %v546, %v566
    %v568 = vperm.slane %v192, 0
    %570 = vrot.lane.b32.xlu0 %v568, 32
    %v571 = vpop.permute.xlu0 %570
    %v573 = vmul.f32 %v567, %v571
    %v574 = vperm.slane %v194, 0
    %576 = vrot.lane.b32.xlu0 %v574, 32
    %v577 = vpop.permute.xlu0 %576
    %v579 = vadd.f32 %v573, %v577
    %v580 = vtanh.pop %v579
    %582 = vrot.lane.b32.xlu0 %v580, 32
    %v583 = vpop.permute.xlu0 %582
    %v585 = vmul.f32 %v521, %v583
    %s586 = scalar_lea.vmem [#allocation2], 2
    %v587 = vld [vmem:[%s586] sm:$0x3]
    %v589 = vsel %vm203, %v587, 0
    %591 = vmatpush.msra.mxu0 0.0
    %592 = vmatpush.msra.mxu0 0.0
    %593 = vmatpush.msra.mxu0 0.0
    %594 = vmatpush.msra.mxu0 0.0
    %595 = vmatpush.msra.mxu0 0.0
    %596 = vmatpush.msra.mxu0 0.0
    %597 = vmatpush.msra.mxu0 0.0
    %598 = vmatpush.msra.mxu0 0.0
    %599 = vmatpush.msra.mxu0 0.0
    %600 = vmatpush.msra.mxu0 0.0
    %601 = vmatpush.msra.mxu0 0.0
    %602 = vmatpush.msra.mxu0 0.0
    %603 = vmatpush.msra.mxu0 0.0
    %604 = vmatpush.msra.mxu0 0.0
    %605 = vmatpush.msra.mxu0 %v164
    %606 = vmatpush.msra.mxu0 %v163
    %607 = vmatmul.f32.gmra.mxu0 %v589
    %v608 = vpop.f32.mrf.mxu0
    %v609 = vadd.f32 %v202, %v608
    %610 = vdwg.mxu0
    %611 = vmatpush.msra.mxu0 0.0
    %612 = vmatpush.msra.mxu0 0.0
    %613 = vmatpush.msra.mxu0 0.0
    %614 = vmatpush.msra.mxu0 0.0
    %615 = vmatpush.msra.mxu0 0.0
    %616 = vmatpush.msra.mxu0 0.0
    %617 = vmatpush.msra.mxu0 0.0
    %618 = vmatpush.msra.mxu0 0.0
    %619 = vmatpush.msra.mxu0 0.0
    %620 = vmatpush.msra.mxu0 0.0
    %621 = vmatpush.msra.mxu0 0.0
    %622 = vmatpush.msra.mxu0 0.0
    %623 = vmatpush.msra.mxu0 %v172
    %624 = vmatpush.msra.mxu0 %v171
    %625 = vmatpush.msra.mxu0 %v170
    %626 = vmatpush.msra.mxu0 %v169
    %627 = vmatmul.f32.gmra.mxu0 %v406
    %v628 = vpop.f32.mrf.mxu0
    %v629 = vadd.f32 %v227, %v628
    %630 = vdwg.mxu0
    %v631 = vsel %vm252, %v609, 0.0
    %632 = vadd.xlane.f32.xlu0 %v631
    %v633 = vpop.xlane.xlu0 %632
    %v634 = vmul.f32 %v633, %v262
    %v635 = vsub.f32 %v609, %v634
    %v636 = vmul.f32 %v635, %v635
    %v637 = vsel %vm252, %v636, 0.0
    %638 = vadd.xlane.f32.xlu0 %v637
    %v639 = vpop.xlane.xlu0 %638
    %v640 = vmul.f32 %v639, %v262
    %v641 = vadd.f32 %v640, 1e-05
    %v642 = vrsqrt.pop %v641
    %v643 = vmul.f32 %v642, %v641
    %v644 = vmul.f32 %v643, %v642
    %v645 = vmul.f32 0.5, %v644
    %v646 = vsub.f32 1.5, %v645
    %v647 = vmul.f32 %v642, %v646
    %vm648 = vweird.f32 %v641
    %vm649 = vweird.f32 %v642
    %vm650 = vmor %vm648, %vm649
    %v651 = vsel %vm650, %v642, %v647
    %v652 = vmul.f32 %v635, %v651
    %v653 = vmul.f32 %v652, %v282
    %v654 = vsel %vm252, %v629, 0.0
    %655 = vadd.xlane.f32.xlu0 %v654
    %v656 = vpop.xlane.xlu0 %655
    %v657 = vmul.f32 %v656, %v262
    %v658 = vsub.f32 %v629, %v657
    %v659 = vmul.f32 %v658, %v658
    %v660 = vsel %vm252, %v659, 0.0
    %661 = vadd.xlane.f32.xlu0 %v660
    %v662 = vpop.xlane.xlu0 %661
    %v663 = vmul.f32 %v662, %v262
    %v664 = vadd.f32 %v663, 1e-05
    %v665 = vrsqrt.pop %v664
    %v666 = vmul.f32 %v665, %v664
    %v667 = vmul.f32 %v666, %v665
    %v668 = vmul.f32 0.5, %v667
    %v669 = vsub.f32 1.5, %v668
    %v670 = vmul.f32 %v665, %v669
    %vm671 = vweird.f32 %v664
    %vm672 = vweird.f32 %v665
    %vm673 = vmor %vm671, %vm672
    %v674 = vsel %vm673, %v665, %v670
    %v675 = vmul.f32 %v658, %v674
    %v676 = vmul.f32 %v675, %v306
    %v677 = vadd.f32 %v653, %v676
    %v678 = vadd.f32 %v677, %v309
    %v679 = vxor.u32 %v678, 2147483648
    %v680 = vmul.f32 %v679, 1.442695
    %v681 = vpow.pop %v680
    %v682 = vadd.f32 %v681, 1.0
    %v683 = vrcp.pop %v682
    %v684 = vmul.f32 %v682, %v683
    %v685 = vsub.f32 1.0, %v684
    %v686 = vmul.f32 %v683, %v685
    %v687 = vadd.f32 %v683, %v686
    %vm688 = vweird.f32 %v682
    %vm689 = vweird.f32 %v683
    %vm690 = vmor %vm688, %vm689
    %v691 = vsel %vm690, %v683, %v687
    %v692 = vand.u32 2147483647, %v682
    %vm693 = vcmp.eq.f32.partialorder %v692, 8.507059e+37
    %v694 = vand.u32 %v682, 2147483648
    %v695 = vor.u32 1.1754944e-38, %v694
    %v696 = vsel %vm693, %v695, %v691
    %v697 = vmul.f32 1.0, %v696
    %v698 = vtanh.pop %v678
    %v699 = vmul.f32 %v697, %v345
    %701 = vrot.lane.b32.xlu0 %v698, 32
    %v702 = vpop.permute.xlu0 %701
    %v704 = vmul.f32 %v697, %v702
    %706 = vrot.lane.b32.xlu0 %v704, 32
    %v707 = vpop.permute.xlu0 %706
    %v709 = vadd.f32 %v699, %v707
    %711 = vrot.lane.b32.xlu0 %v709, 96
    %v712 = vpop.permute.xlu0 %711
    %v714 = vsel %vm350, %v712, 0.0
    %715 = vadd.xlane.f32.xlu0 %v714
    %v716 = vpop.xlane.xlu0 %715
    %v717 = vmul.f32 %v716, %v360
    %v718 = vsub.f32 %v709, %v717
    %v719 = vmul.f32 %v718, %v718
    %721 = vrot.lane.b32.xlu0 %v719, 96
    %v722 = vpop.permute.xlu0 %721
    %v724 = vsel %vm350, %v722, 0.0
    %725 = vadd.xlane.f32.xlu0 %v724
    %v726 = vpop.xlane.xlu0 %725
    %v727 = vmul.f32 %v726, %v360
    %v728 = vadd.f32 %v727, 1e-05
    %v729 = vrsqrt.pop %v728
    %v730 = vmul.f32 %v729, %v728
    %v731 = vmul.f32 %v730, %v729
    %v732 = vmul.f32 0.5, %v731
    %v733 = vsub.f32 1.5, %v732
    %v734 = vmul.f32 %v729, %v733
    %vm735 = vweird.f32 %v728
    %vm736 = vweird.f32 %v729
    %vm737 = vmor %vm735, %vm736
    %v738 = vsel %vm737, %v729, %v734
    %v739 = vmul.f32 %v718, %v738
    %v740 = vmul.f32 %v739, %v387
    %v741 = vadd.f32 %v740, %v393
    %v742 = vtanh.pop %v741
    %744 = vrot.lane.b32.xlu0 %v742, 32
    %v745 = vpop.permute.xlu0 %744
    %v747 = vmul.f32 %v697, %v745
    %749 = vrot.lane.b32.xlu0 %v747, 64
    %v750 = vpop.permute.xlu0 %749
    %v751 = vsel %vm228, %v750, 0
    %753 = vmatpush.msra.mxu0 0.0
    %754 = vmatpush.msra.mxu0 0.0
    %755 = vmatpush.msra.mxu0 0.0
    %756 = vmatpush.msra.mxu0 0.0
    %757 = vmatpush.msra.mxu0 0.0
    %758 = vmatpush.msra.mxu0 0.0
    %759 = vmatpush.msra.mxu0 0.0
    %760 = vmatpush.msra.mxu0 0.0
    %761 = vmatpush.msra.mxu0 0.0
    %762 = vmatpush.msra.mxu0 0.0
    %763 = vmatpush.msra.mxu0 0.0
    %764 = vmatpush.msra.mxu0 0.0
    %765 = vmatpush.msra.mxu0 %v168
    %766 = vmatpush.msra.mxu0 %v167
    %767 = vmatpush.msra.mxu0 %v166
    %768 = vmatpush.msra.mxu0 %v165
    %769 = vmatmul.f32.gmra.mxu0 %v751
    %v770 = vpop.f32.mrf.mxu0
    %v771 = vadd.f32 %v402, %v770
    %772 = vdwg.mxu0
    %774 = vrot.lane.b32.xlu0 %v585, 64
    %v775 = vpop.permute.xlu0 %774
    %v776 = vsel %vm228, %v775, 0
    %778 = vmatpush.msra.mxu0 0.0
    %779 = vmatpush.msra.mxu0 0.0
    %780 = vmatpush.msra.mxu0 0.0
    %781 = vmatpush.msra.mxu0 0.0
    %782 = vmatpush.msra.mxu0 0.0
    %783 = vmatpush.msra.mxu0 0.0
    %784 = vmatpush.msra.mxu0 0.0
    %785 = vmatpush.msra.mxu0 0.0
    %786 = vmatpush.msra.mxu0 0.0
    %787 = vmatpush.msra.mxu0 0.0
    %788 = vmatpush.msra.mxu0 0.0
    %789 = vmatpush.msra.mxu0 0.0
    %790 = vmatpush.msra.mxu0 %v176
    %791 = vmatpush.msra.mxu0 %v175
    %792 = vmatpush.msra.mxu0 %v174
    %793 = vmatpush.msra.mxu0 %v173
    %794 = vmatmul.f32.gmra.mxu0 %v776
    %v795 = vpop.f32.mrf.mxu0
    %v796 = vadd.f32 %v428, %v795
    %797 = vdwg.mxu0
    %v798 = vsel %vm252, %v771, 0.0
    %799 = vadd.xlane.f32.xlu0 %v798
    %v800 = vpop.xlane.xlu0 %799
    %v801 = vmul.f32 %v800, %v262
    %v802 = vsub.f32 %v771, %v801
    %v803 = vmul.f32 %v802, %v802
    %v804 = vsel %vm252, %v803, 0.0
    %805 = vadd.xlane.f32.xlu0 %v804
    %v806 = vpop.xlane.xlu0 %805
    %v807 = vmul.f32 %v806, %v262
    %v808 = vadd.f32 %v807, 1e-05
    %v809 = vrsqrt.pop %v808
    %v810 = vmul.f32 %v809, %v808
    %v811 = vmul.f32 %v810, %v809
    %v812 = vmul.f32 0.5, %v811
    %v813 = vsub.f32 1.5, %v812
    %v814 = vmul.f32 %v809, %v813
    %vm815 = vweird.f32 %v808
    %vm816 = vweird.f32 %v809
    %vm817 = vmor %vm815, %vm816
    %v818 = vsel %vm817, %v809, %v814
    %v819 = vmul.f32 %v802, %v818
    %v820 = vmul.f32 %v819, %v474
    %v821 = vsel %vm252, %v796, 0.0
    %822 = vadd.xlane.f32.xlu0 %v821
    %v823 = vpop.xlane.xlu0 %822
    %v824 = vmul.f32 %v823, %v262
    %v825 = vsub.f32 %v796, %v824
    %v826 = vmul.f32 %v825, %v825
    %v827 = vsel %vm252, %v826, 0.0
    %828 = vadd.xlane.f32.xlu0 %v827
    %v829 = vpop.xlane.xlu0 %828
    %v830 = vmul.f32 %v829, %v262
    %v831 = vadd.f32 %v830, 1e-05
    %v832 = vrsqrt.pop %v831
    %v833 = vmul.f32 %v832, %v831
    %v834 = vmul.f32 %v833, %v832
    %v835 = vmul.f32 0.5, %v834
    %v836 = vsub.f32 1.5, %v835
    %v837 = vmul.f32 %v832, %v836
    %vm838 = vweird.f32 %v831
    %vm839 = vweird.f32 %v832
    %vm840 = vmor %vm838, %vm839
    %v841 = vsel %vm840, %v832, %v837
    %v842 = vmul.f32 %v825, %v841
    %v843 = vmul.f32 %v842, %v498
    %v844 = vadd.f32 %v820, %v843
    %v845 = vadd.f32 %v844, %v501
    %v846 = vxor.u32 %v845, 2147483648
    %v847 = vmul.f32 %v846, 1.442695
    %v848 = vpow.pop %v847
    %v849 = vadd.f32 %v848, 1.0
    %v850 = vrcp.pop %v849
    %v851 = vmul.f32 %v849, %v850
    %v852 = vsub.f32 1.0, %v851
    %v853 = vmul.f32 %v850, %v852
    %v854 = vadd.f32 %v850, %v853
    %vm855 = vweird.f32 %v849
    %vm856 = vweird.f32 %v850
    %vm857 = vmor %vm855, %vm856
    %v858 = vsel %vm857, %v850, %v854
    %v859 = vand.u32 2147483647, %v849
    %vm860 = vcmp.eq.f32.partialorder %v859, 8.507059e+37
    %v861 = vand.u32 %v849, 2147483648
    %v862 = vor.u32 1.1754944e-38, %v861
    %v863 = vsel %vm860, %v862, %v858
    %v864 = vmul.f32 1.0, %v863
    %v865 = vtanh.pop %v845
    %v866 = vmul.f32 %v864, %v537
    %868 = vrot.lane.b32.xlu0 %v865, 32
    %v869 = vpop.permute.xlu0 %868
    %v871 = vmul.f32 %v864, %v869
    %873 = vrot.lane.b32.xlu0 %v871, 32
    %v874 = vpop.permute.xlu0 %873
    %v876 = vadd.f32 %v866, %v874
    %878 = vrot.lane.b32.xlu0 %v876, 96
    %v879 = vpop.permute.xlu0 %878
    %v881 = vsel %vm350, %v879, 0.0
    %882 = vadd.xlane.f32.xlu0 %v881
    %v883 = vpop.xlane.xlu0 %882
    %v884 = vmul.f32 %v883, %v360
    %v885 = vsub.f32 %v876, %v884
    %v886 = vmul.f32 %v885, %v885
    %888 = vrot.lane.b32.xlu0 %v886, 96
    %v889 = vpop.permute.xlu0 %888
    %v891 = vsel %vm350, %v889, 0.0
    %892 = vadd.xlane.f32.xlu0 %v891
    %v893 = vpop.xlane.xlu0 %892
    %v894 = vmul.f32 %v893, %v360
    %v895 = vadd.f32 %v894, 1e-05
    %v896 = vrsqrt.pop %v895
    %v897 = vmul.f32 %v896, %v895
    %v898 = vmul.f32 %v897, %v896
    %v899 = vmul.f32 0.5, %v898
    %v900 = vsub.f32 1.5, %v899
    %v901 = vmul.f32 %v896, %v900
    %vm902 = vweird.f32 %v895
    %vm903 = vweird.f32 %v896
    %vm904 = vmor %vm902, %vm903
    %v905 = vsel %vm904, %v896, %v901
    %v906 = vmul.f32 %v885, %v905
    %v907 = vmul.f32 %v906, %v571
    %v908 = vadd.f32 %v907, %v577
    %v909 = vtanh.pop %v908
    %911 = vrot.lane.b32.xlu0 %v909, 32
    %v912 = vpop.permute.xlu0 %911
    %v914 = vmul.f32 %v864, %v912
    %s915 = scalar_lea.vmem [#allocation2], 4
    %v916 = vld [vmem:[%s915] sm:$0x3]
    %v918 = vsel %vm203, %v916, 0
    %920 = vmatpush.msra.mxu0 0.0
    %921 = vmatpush.msra.mxu0 0.0
    %922 = vmatpush.msra.mxu0 0.0
    %923 = vmatpush.msra.mxu0 0.0
    %924 = vmatpush.msra.mxu0 0.0
    %925 = vmatpush.msra.mxu0 0.0
    %926 = vmatpush.msra.mxu0 0.0
    %927 = vmatpush.msra.mxu0 0.0
    %928 = vmatpush.msra.mxu0 0.0
    %929 = vmatpush.msra.mxu0 0.0
    %930 = vmatpush.msra.mxu0 0.0
    %931 = vmatpush.msra.mxu0 0.0
    %932 = vmatpush.msra.mxu0 0.0
    %933 = vmatpush.msra.mxu0 0.0
    %934 = vmatpush.msra.mxu0 %v164
    %935 = vmatpush.msra.mxu0 %v163
    %936 = vmatmul.f32.gmra.mxu0 %v918
    %v937 = vpop.f32.mrf.mxu0
    %v938 = vadd.f32 %v202, %v937
    %939 = vdwg.mxu0
    %940 = vmatpush.msra.mxu0 0.0
    %941 = vmatpush.msra.mxu0 0.0
    %942 = vmatpush.msra.mxu0 0.0
    %943 = vmatpush.msra.mxu0 0.0
    %944 = vmatpush.msra.mxu0 0.0
    %945 = vmatpush.msra.mxu0 0.0
    %946 = vmatpush.msra.mxu0 0.0
    %947 = vmatpush.msra.mxu0 0.0
    %948 = vmatpush.msra.mxu0 0.0
    %949 = vmatpush.msra.mxu0 0.0
    %950 = vmatpush.msra.mxu0 0.0
    %951 = vmatpush.msra.mxu0 0.0
    %952 = vmatpush.msra.mxu0 %v172
    %953 = vmatpush.msra.mxu0 %v171
    %954 = vmatpush.msra.mxu0 %v170
    %955 = vmatpush.msra.mxu0 %v169
    %956 = vmatmul.f32.gmra.mxu0 %v751
    %v957 = vpop.f32.mrf.mxu0
    %v958 = vadd.f32 %v227, %v957
    %959 = vdwg.mxu0
    %v960 = vsel %vm252, %v938, 0.0
    %961 = vadd.xlane.f32.xlu0 %v960
    %v962 = vpop.xlane.xlu0 %961
    %v963 = vmul.f32 %v962, %v262
    %v964 = vsub.f32 %v938, %v963
    %v965 = vmul.f32 %v964, %v964
    %v966 = vsel %vm252, %v965, 0.0
    %967 = vadd.xlane.f32.xlu0 %v966
    %v968 = vpop.xlane.xlu0 %967
    %v969 = vmul.f32 %v968, %v262
    %v970 = vadd.f32 %v969, 1e-05
    %v971 = vrsqrt.pop %v970
    %v972 = vmul.f32 %v971, %v970
    %v973 = vmul.f32 %v972, %v971
    %v974 = vmul.f32 0.5, %v973
    %v975 = vsub.f32 1.5, %v974
    %v976 = vmul.f32 %v971, %v975
    %vm977 = vweird.f32 %v970
    %vm978 = vweird.f32 %v971
    %vm979 = vmor %vm977, %vm978
    %v980 = vsel %vm979, %v971, %v976
    %v981 = vmul.f32 %v964, %v980
    %v982 = vmul.f32 %v981, %v282
    %v983 = vsel %vm252, %v958, 0.0
    %984 = vadd.xlane.f32.xlu0 %v983
    %v985 = vpop.xlane.xlu0 %984
    %v986 = vmul.f32 %v985, %v262
    %v987 = vsub.f32 %v958, %v986
    %v988 = vmul.f32 %v987, %v987
    %v989 = vsel %vm252, %v988, 0.0
    %990 = vadd.xlane.f32.xlu0 %v989
    %v991 = vpop.xlane.xlu0 %990
    %v992 = vmul.f32 %v991, %v262
    %v993 = vadd.f32 %v992, 1e-05
    %v994 = vrsqrt.pop %v993
    %v995 = vmul.f32 %v994, %v993
    %v996 = vmul.f32 %v995, %v994
    %v997 = vmul.f32 0.5, %v996
    %v998 = vsub.f32 1.5, %v997
    %v999 = vmul.f32 %v994, %v998
    %vm1000 = vweird.f32 %v993
    %vm1001 = vweird.f32 %v994
    %vm1002 = vmor %vm1000, %vm1001
    %v1003 = vsel %vm1002, %v994, %v999
    %v1004 = vmul.f32 %v987, %v1003
    %v1005 = vmul.f32 %v1004, %v306
    %v1006 = vadd.f32 %v982, %v1005
    %v1007 = vadd.f32 %v1006, %v309
    %v1008 = vxor.u32 %v1007, 2147483648
    %v1009 = vmul.f32 %v1008, 1.442695
    %v1010 = vpow.pop %v1009
    %v1011 = vadd.f32 %v1010, 1.0
    %v1012 = vrcp.pop %v1011
    %v1013 = vmul.f32 %v1011, %v1012
    %v1014 = vsub.f32 1.0, %v1013
    %v1015 = vmul.f32 %v1012, %v1014
    %v1016 = vadd.f32 %v1012, %v1015
    %vm1017 = vweird.f32 %v1011
    %vm1018 = vweird.f32 %v1012
    %vm1019 = vmor %vm1017, %vm1018
    %v1020 = vsel %vm1019, %v1012, %v1016
    %v1021 = vand.u32 2147483647, %v1011
    %vm1022 = vcmp.eq.f32.partialorder %v1021, 8.507059e+37
    %v1023 = vand.u32 %v1011, 2147483648
    %v1024 = vor.u32 1.1754944e-38, %v1023
    %v1025 = vsel %vm1022, %v1024, %v1020
    %v1026 = vmul.f32 1.0, %v1025
    %v1027 = vtanh.pop %v1007
    %v1028 = vmul.f32 %v1026, %v709
    %1030 = vrot.lane.b32.xlu0 %v1027, 32
    %v1031 = vpop.permute.xlu0 %1030
    %v1033 = vmul.f32 %v1026, %v1031
    %1035 = vrot.lane.b32.xlu0 %v1033, 32
    %v1036 = vpop.permute.xlu0 %1035
    %v1038 = vadd.f32 %v1028, %v1036
    %1040 = vrot.lane.b32.xlu0 %v1038, 96
    %v1041 = vpop.permute.xlu0 %1040
    %v1043 = vsel %vm350, %v1041, 0.0
    %1044 = vadd.xlane.f32.xlu0 %v1043
    %v1045 = vpop.xlane.xlu0 %1044
    %v1046 = vmul.f32 %v1045, %v360
    %v1047 = vsub.f32 %v1038, %v1046
    %v1048 = vmul.f32 %v1047, %v1047
    %1050 = vrot.lane.b32.xlu0 %v1048, 96
    %v1051 = vpop.permute.xlu0 %1050
    %v1053 = vsel %vm350, %v1051, 0.0
    %1054 = vadd.xlane.f32.xlu0 %v1053
    %v1055 = vpop.xlane.xlu0 %1054
    %v1056 = vmul.f32 %v1055, %v360
    %v1057 = vadd.f32 %v1056, 1e-05
    %v1058 = vrsqrt.pop %v1057
    %v1059 = vmul.f32 %v1058, %v1057
    %v1060 = vmul.f32 %v1059, %v1058
    %v1061 = vmul.f32 0.5, %v1060
    %v1062 = vsub.f32 1.5, %v1061
    %v1063 = vmul.f32 %v1058, %v1062
    %vm1064 = vweird.f32 %v1057
    %vm1065 = vweird.f32 %v1058
    %vm1066 = vmor %vm1064, %vm1065
    %v1067 = vsel %vm1066, %v1058, %v1063
    %v1068 = vmul.f32 %v1047, %v1067
    %v1069 = vmul.f32 %v1068, %v387
    %v1070 = vadd.f32 %v1069, %v393
    %v1071 = vtanh.pop %v1070
    %1073 = vrot.lane.b32.xlu0 %v1071, 32
    %v1074 = vpop.permute.xlu0 %1073
    %v1076 = vmul.f32 %v1026, %v1074
    %1078 = vrot.lane.b32.xlu0 %v1076, 64
    %v1079 = vpop.permute.xlu0 %1078
    %v1080 = vsel %vm228, %v1079, 0
    %1082 = vmatpush.msra.mxu0 0.0
    %1083 = vmatpush.msra.mxu0 0.0
    %1084 = vmatpush.msra.mxu0 0.0
    %1085 = vmatpush.msra.mxu0 0.0
    %1086 = vmatpush.msra.mxu0 0.0
    %1087 = vmatpush.msra.mxu0 0.0
    %1088 = vmatpush.msra.mxu0 0.0
    %1089 = vmatpush.msra.mxu0 0.0
    %1090 = vmatpush.msra.mxu0 0.0
    %1091 = vmatpush.msra.mxu0 0.0
    %1092 = vmatpush.msra.mxu0 0.0
    %1093 = vmatpush.msra.mxu0 0.0
    %1094 = vmatpush.msra.mxu0 %v168
    %1095 = vmatpush.msra.mxu0 %v167
    %1096 = vmatpush.msra.mxu0 %v166
    %1097 = vmatpush.msra.mxu0 %v165
    %1098 = vmatmul.f32.gmra.mxu0 %v1080
    %v1099 = vpop.f32.mrf.mxu0
    %v1100 = vadd.f32 %v402, %v1099
    %1101 = vdwg.mxu0
    %1103 = vrot.lane.b32.xlu0 %v914, 64
    %v1104 = vpop.permute.xlu0 %1103
    %v1105 = vsel %vm228, %v1104, 0
    %1107 = vmatpush.msra.mxu0 0.0
    %1108 = vmatpush.msra.mxu0 0.0
    %1109 = vmatpush.msra.mxu0 0.0
    %1110 = vmatpush.msra.mxu0 0.0
    %1111 = vmatpush.msra.mxu0 0.0
    %1112 = vmatpush.msra.mxu0 0.0
    %1113 = vmatpush.msra.mxu0 0.0
    %1114 = vmatpush.msra.mxu0 0.0
    %1115 = vmatpush.msra.mxu0 0.0
    %1116 = vmatpush.msra.mxu0 0.0
    %1117 = vmatpush.msra.mxu0 0.0
    %1118 = vmatpush.msra.mxu0 0.0
    %1119 = vmatpush.msra.mxu0 %v176
    %1120 = vmatpush.msra.mxu0 %v175
    %1121 = vmatpush.msra.mxu0 %v174
    %1122 = vmatpush.msra.mxu0 %v173
    %1123 = vmatmul.f32.gmra.mxu0 %v1105
    %v1124 = vpop.f32.mrf.mxu0
    %v1125 = vadd.f32 %v428, %v1124
    %1126 = vdwg.mxu0
    %v1127 = vsel %vm252, %v1100, 0.0
    %1128 = vadd.xlane.f32.xlu0 %v1127
    %v1129 = vpop.xlane.xlu0 %1128
    %v1130 = vmul.f32 %v1129, %v262
    %v1131 = vsub.f32 %v1100, %v1130
    %v1132 = vmul.f32 %v1131, %v1131
    %v1133 = vsel %vm252, %v1132, 0.0
    %1134 = vadd.xlane.f32.xlu0 %v1133
    %v1135 = vpop.xlane.xlu0 %1134
    %v1136 = vmul.f32 %v1135, %v262
    %v1137 = vadd.f32 %v1136, 1e-05
    %v1138 = vrsqrt.pop %v1137
    %v1139 = vmul.f32 %v1138, %v1137
    %v1140 = vmul.f32 %v1139, %v1138
    %v1141 = vmul.f32 0.5, %v1140
    %v1142 = vsub.f32 1.5, %v1141
    %v1143 = vmul.f32 %v1138, %v1142
    %vm1144 = vweird.f32 %v1137
    %vm1145 = vweird.f32 %v1138
    %vm1146 = vmor %vm1144, %vm1145
    %v1147 = vsel %vm1146, %v1138, %v1143
    %v1148 = vmul.f32 %v1131, %v1147
    %v1149 = vmul.f32 %v1148, %v474
    %v1150 = vsel %vm252, %v1125, 0.0
    %1151 = vadd.xlane.f32.xlu0 %v1150
    %v1152 = vpop.xlane.xlu0 %1151
    %v1153 = vmul.f32 %v1152, %v262
    %v1154 = vsub.f32 %v1125, %v1153
    %v1155 = vmul.f32 %v1154, %v1154
    %v1156 = vsel %vm252, %v1155, 0.0
    %1157 = vadd.xlane.f32.xlu0 %v1156
    %v1158 = vpop.xlane.xlu0 %1157
    %v1159 = vmul.f32 %v1158, %v262
    %v1160 = vadd.f32 %v1159, 1e-05
    %v1161 = vrsqrt.pop %v1160
    %v1162 = vmul.f32 %v1161, %v1160
    %v1163 = vmul.f32 %v1162, %v1161
    %v1164 = vmul.f32 0.5, %v1163
    %v1165 = vsub.f32 1.5, %v1164
    %v1166 = vmul.f32 %v1161, %v1165
    %vm1167 = vweird.f32 %v1160
    %vm1168 = vweird.f32 %v1161
    %vm1169 = vmor %vm1167, %vm1168
    %v1170 = vsel %vm1169, %v1161, %v1166
    %v1171 = vmul.f32 %v1154, %v1170
    %v1172 = vmul.f32 %v1171, %v498
    %v1173 = vadd.f32 %v1149, %v1172
    %v1174 = vadd.f32 %v1173, %v501
    %v1175 = vxor.u32 %v1174, 2147483648
    %v1176 = vmul.f32 %v1175, 1.442695
    %v1177 = vpow.pop %v1176
    %v1178 = vadd.f32 %v1177, 1.0
    %v1179 = vrcp.pop %v1178
    %v1180 = vmul.f32 %v1178, %v1179
    %v1181 = vsub.f32 1.0, %v1180
    %v1182 = vmul.f32 %v1179, %v1181
    %v1183 = vadd.f32 %v1179, %v1182
    %vm1184 = vweird.f32 %v1178
    %vm1185 = vweird.f32 %v1179
    %vm1186 = vmor %vm1184, %vm1185
    %v1187 = vsel %vm1186, %v1179, %v1183
    %v1188 = vand.u32 2147483647, %v1178
    %vm1189 = vcmp.eq.f32.partialorder %v1188, 8.507059e+37
    %v1190 = vand.u32 %v1178, 2147483648
    %v1191 = vor.u32 1.1754944e-38, %v1190
    %v1192 = vsel %vm1189, %v1191, %v1187
    %v1193 = vmul.f32 1.0, %v1192
    %v1194 = vtanh.pop %v1174
    %v1195 = vmul.f32 %v1193, %v876
    %1197 = vrot.lane.b32.xlu0 %v1194, 32
    %v1198 = vpop.permute.xlu0 %1197
    %v1200 = vmul.f32 %v1193, %v1198
    %1202 = vrot.lane.b32.xlu0 %v1200, 32
    %v1203 = vpop.permute.xlu0 %1202
    %v1205 = vadd.f32 %v1195, %v1203
    %1207 = vrot.lane.b32.xlu0 %v1205, 96
    %v1208 = vpop.permute.xlu0 %1207
    %v1210 = vsel %vm350, %v1208, 0.0
    %1211 = vadd.xlane.f32.xlu0 %v1210
    %v1212 = vpop.xlane.xlu0 %1211
    %v1213 = vmul.f32 %v1212, %v360
    %v1214 = vsub.f32 %v1205, %v1213
    %v1215 = vmul.f32 %v1214, %v1214
    %1217 = vrot.lane.b32.xlu0 %v1215, 96
    %v1218 = vpop.permute.xlu0 %1217
    %v1220 = vsel %vm350, %v1218, 0.0
    %1221 = vadd.xlane.f32.xlu0 %v1220
    %v1222 = vpop.xlane.xlu0 %1221
    %v1223 = vmul.f32 %v1222, %v360
    %v1224 = vadd.f32 %v1223, 1e-05
    %v1225 = vrsqrt.pop %v1224
    %v1226 = vmul.f32 %v1225, %v1224
    %v1227 = vmul.f32 %v1226, %v1225
    %v1228 = vmul.f32 0.5, %v1227
    %v1229 = vsub.f32 1.5, %v1228
    %v1230 = vmul.f32 %v1225, %v1229
    %vm1231 = vweird.f32 %v1224
    %vm1232 = vweird.f32 %v1225
    %vm1233 = vmor %vm1231, %vm1232
    %v1234 = vsel %vm1233, %v1225, %v1230
    %v1235 = vmul.f32 %v1214, %v1234
    %v1236 = vmul.f32 %v1235, %v571
    %v1237 = vadd.f32 %v1236, %v577
    %v1238 = vtanh.pop %v1237
    %1240 = vrot.lane.b32.xlu0 %v1238, 32
    %v1241 = vpop.permute.xlu0 %1240
    %v1243 = vmul.f32 %v1193, %v1241
    %s1244 = scalar_lea.vmem [#allocation2], 6
    %v1245 = vld [vmem:[%s1244] sm:$0x3]
    %v1247 = vsel %vm203, %v1245, 0
    %1249 = vmatpush.msra.mxu0 0.0
    %1250 = vmatpush.msra.mxu0 0.0
    %1251 = vmatpush.msra.mxu0 0.0
    %1252 = vmatpush.msra.mxu0 0.0
    %1253 = vmatpush.msra.mxu0 0.0
    %1254 = vmatpush.msra.mxu0 0.0
    %1255 = vmatpush.msra.mxu0 0.0
    %1256 = vmatpush.msra.mxu0 0.0
    %1257 = vmatpush.msra.mxu0 0.0
    %1258 = vmatpush.msra.mxu0 0.0
    %1259 = vmatpush.msra.mxu0 0.0
    %1260 = vmatpush.msra.mxu0 0.0
    %1261 = vmatpush.msra.mxu0 0.0
    %1262 = vmatpush.msra.mxu0 0.0
    %1263 = vmatpush.msra.mxu0 %v164
    %1264 = vmatpush.msra.mxu0 %v163
    %1265 = vmatmul.f32.gmra.mxu0 %v1247
    %v1266 = vpop.f32.mrf.mxu0
    %v1267 = vadd.f32 %v202, %v1266
    %1268 = vdwg.mxu0
    %1269 = vmatpush.msra.mxu0 0.0
    %1270 = vmatpush.msra.mxu0 0.0
    %1271 = vmatpush.msra.mxu0 0.0
    %1272 = vmatpush.msra.mxu0 0.0
    %1273 = vmatpush.msra.mxu0 0.0
    %1274 = vmatpush.msra.mxu0 0.0
    %1275 = vmatpush.msra.mxu0 0.0
    %1276 = vmatpush.msra.mxu0 0.0
    %1277 = vmatpush.msra.mxu0 0.0
    %1278 = vmatpush.msra.mxu0 0.0
    %1279 = vmatpush.msra.mxu0 0.0
    %1280 = vmatpush.msra.mxu0 0.0
    %1281 = vmatpush.msra.mxu0 %v172
    %1282 = vmatpush.msra.mxu0 %v171
    %1283 = vmatpush.msra.mxu0 %v170
    %1284 = vmatpush.msra.mxu0 %v169
    %1285 = vmatmul.f32.gmra.mxu0 %v1080
    %v1286 = vpop.f32.mrf.mxu0
    %v1287 = vadd.f32 %v227, %v1286
    %1288 = vdwg.mxu0
    %v1289 = vsel %vm252, %v1267, 0.0
    %1290 = vadd.xlane.f32.xlu0 %v1289
    %v1291 = vpop.xlane.xlu0 %1290
    %v1292 = vmul.f32 %v1291, %v262
    %v1293 = vsub.f32 %v1267, %v1292
    %v1294 = vmul.f32 %v1293, %v1293
    %v1295 = vsel %vm252, %v1294, 0.0
    %1296 = vadd.xlane.f32.xlu0 %v1295
    %v1297 = vpop.xlane.xlu0 %1296
    %v1298 = vmul.f32 %v1297, %v262
    %v1299 = vadd.f32 %v1298, 1e-05
    %v1300 = vrsqrt.pop %v1299
    %v1301 = vmul.f32 %v1300, %v1299
    %v1302 = vmul.f32 %v1301, %v1300
    %v1303 = vmul.f32 0.5, %v1302
    %v1304 = vsub.f32 1.5, %v1303
    %v1305 = vmul.f32 %v1300, %v1304
    %vm1306 = vweird.f32 %v1299
    %vm1307 = vweird.f32 %v1300
    %vm1308 = vmor %vm1306, %vm1307
    %v1309 = vsel %vm1308, %v1300, %v1305
    %v1310 = vmul.f32 %v1293, %v1309
    %v1311 = vmul.f32 %v1310, %v282
    %v1312 = vsel %vm252, %v1287, 0.0
    %1313 = vadd.xlane.f32.xlu0 %v1312
    %v1314 = vpop.xlane.xlu0 %1313
    %v1315 = vmul.f32 %v1314, %v262
    %v1316 = vsub.f32 %v1287, %v1315
    %v1317 = vmul.f32 %v1316, %v1316
    %v1318 = vsel %vm252, %v1317, 0.0
    %1319 = vadd.xlane.f32.xlu0 %v1318
    %v1320 = vpop.xlane.xlu0 %1319
    %v1321 = vmul.f32 %v1320, %v262
    %v1322 = vadd.f32 %v1321, 1e-05
    %v1323 = vrsqrt.pop %v1322
    %v1324 = vmul.f32 %v1323, %v1322
    %v1325 = vmul.f32 %v1324, %v1323
    %v1326 = vmul.f32 0.5, %v1325
    %v1327 = vsub.f32 1.5, %v1326
    %v1328 = vmul.f32 %v1323, %v1327
    %vm1329 = vweird.f32 %v1322
    %vm1330 = vweird.f32 %v1323
    %vm1331 = vmor %vm1329, %vm1330
    %v1332 = vsel %vm1331, %v1323, %v1328
    %v1333 = vmul.f32 %v1316, %v1332
    %v1334 = vmul.f32 %v1333, %v306
    %v1335 = vadd.f32 %v1311, %v1334
    %v1336 = vadd.f32 %v1335, %v309
    %v1337 = vxor.u32 %v1336, 2147483648
    %v1338 = vmul.f32 %v1337, 1.442695
    %v1339 = vpow.pop %v1338
    %v1340 = vadd.f32 %v1339, 1.0
    %v1341 = vrcp.pop %v1340
    %v1342 = vmul.f32 %v1340, %v1341
    %v1343 = vsub.f32 1.0, %v1342
    %v1344 = vmul.f32 %v1341, %v1343
    %v1345 = vadd.f32 %v1341, %v1344
    %vm1346 = vweird.f32 %v1340
    %vm1347 = vweird.f32 %v1341
    %vm1348 = vmor %vm1346, %vm1347
    %v1349 = vsel %vm1348, %v1341, %v1345
    %v1350 = vand.u32 2147483647, %v1340
    %vm1351 = vcmp.eq.f32.partialorder %v1350, 8.507059e+37
    %v1352 = vand.u32 %v1340, 2147483648
    %v1353 = vor.u32 1.1754944e-38, %v1352
    %v1354 = vsel %vm1351, %v1353, %v1349
    %v1355 = vmul.f32 1.0, %v1354
    %v1356 = vtanh.pop %v1336
    %v1357 = vmul.f32 %v1355, %v1038
    %1359 = vrot.lane.b32.xlu0 %v1356, 32
    %v1360 = vpop.permute.xlu0 %1359
    %v1362 = vmul.f32 %v1355, %v1360
    %1364 = vrot.lane.b32.xlu0 %v1362, 32
    %v1365 = vpop.permute.xlu0 %1364
    %v1367 = vadd.f32 %v1357, %v1365
    %1369 = vrot.lane.b32.xlu0 %v1367, 96
    %v1370 = vpop.permute.xlu0 %1369
    %v1372 = vsel %vm350, %v1370, 0.0
    %1373 = vadd.xlane.f32.xlu0 %v1372
    %v1374 = vpop.xlane.xlu0 %1373
    %v1375 = vmul.f32 %v1374, %v360
    %v1376 = vsub.f32 %v1367, %v1375
    %v1377 = vmul.f32 %v1376, %v1376
    %1379 = vrot.lane.b32.xlu0 %v1377, 96
    %v1380 = vpop.permute.xlu0 %1379
    %v1382 = vsel %vm350, %v1380, 0.0
    %1383 = vadd.xlane.f32.xlu0 %v1382
    %v1384 = vpop.xlane.xlu0 %1383
    %v1385 = vmul.f32 %v1384, %v360
    %v1386 = vadd.f32 %v1385, 1e-05
    %v1387 = vrsqrt.pop %v1386
    %v1388 = vmul.f32 %v1387, %v1386
    %v1389 = vmul.f32 %v1388, %v1387
    %v1390 = vmul.f32 0.5, %v1389
    %v1391 = vsub.f32 1.5, %v1390
    %v1392 = vmul.f32 %v1387, %v1391
    %vm1393 = vweird.f32 %v1386
    %vm1394 = vweird.f32 %v1387
    %vm1395 = vmor %vm1393, %vm1394
    %v1396 = vsel %vm1395, %v1387, %v1392
    %v1397 = vmul.f32 %v1376, %v1396
    %v1398 = vmul.f32 %v1397, %v387
    %v1399 = vadd.f32 %v1398, %v393
    %v1400 = vtanh.pop %v1399
    %1402 = vrot.lane.b32.xlu0 %v1400, 32
    %v1403 = vpop.permute.xlu0 %1402
    %v1405 = vmul.f32 %v1355, %v1403
    %1407 = vrot.lane.b32.xlu0 %v1405, 64
    %v1408 = vpop.permute.xlu0 %1407
    %v1409 = vsel %vm228, %v1408, 0
    %1411 = vmatpush.msra.mxu0 0.0
    %1412 = vmatpush.msra.mxu0 0.0
    %1413 = vmatpush.msra.mxu0 0.0
    %1414 = vmatpush.msra.mxu0 0.0
    %1415 = vmatpush.msra.mxu0 0.0
    %1416 = vmatpush.msra.mxu0 0.0
    %1417 = vmatpush.msra.mxu0 0.0
    %1418 = vmatpush.msra.mxu0 0.0
    %1419 = vmatpush.msra.mxu0 0.0
    %1420 = vmatpush.msra.mxu0 0.0
    %1421 = vmatpush.msra.mxu0 0.0
    %1422 = vmatpush.msra.mxu0 0.0
    %1423 = vmatpush.msra.mxu0 %v168
    %1424 = vmatpush.msra.mxu0 %v167
    %1425 = vmatpush.msra.mxu0 %v166
    %1426 = vmatpush.msra.mxu0 %v165
    %1427 = vmatmul.f32.gmra.mxu0 %v1409
    %v1428 = vpop.f32.mrf.mxu0
    %v1429 = vadd.f32 %v402, %v1428
    %1430 = vdwg.mxu0
    %1432 = vrot.lane.b32.xlu0 %v1243, 64
    %v1433 = vpop.permute.xlu0 %1432
    %v1434 = vsel %vm228, %v1433, 0
    %1436 = vmatpush.msra.mxu0 0.0
    %1437 = vmatpush.msra.mxu0 0.0
    %1438 = vmatpush.msra.mxu0 0.0
    %1439 = vmatpush.msra.mxu0 0.0
    %1440 = vmatpush.msra.mxu0 0.0
    %1441 = vmatpush.msra.mxu0 0.0
    %1442 = vmatpush.msra.mxu0 0.0
    %1443 = vmatpush.msra.mxu0 0.0
    %1444 = vmatpush.msra.mxu0 0.0
    %1445 = vmatpush.msra.mxu0 0.0
    %1446 = vmatpush.msra.mxu0 0.0
    %1447 = vmatpush.msra.mxu0 0.0
    %1448 = vmatpush.msra.mxu0 %v176
    %1449 = vmatpush.msra.mxu0 %v175
    %1450 = vmatpush.msra.mxu0 %v174
    %1451 = vmatpush.msra.mxu0 %v173
    %1452 = vmatmul.f32.gmra.mxu0 %v1434
    %v1453 = vpop.f32.mrf.mxu0
    %v1454 = vadd.f32 %v428, %v1453
    %1455 = vdwg.mxu0
    %v1456 = vsel %vm252, %v1429, 0.0
    %1457 = vadd.xlane.f32.xlu0 %v1456
    %v1458 = vpop.xlane.xlu0 %1457
    %v1459 = vmul.f32 %v1458, %v262
    %v1460 = vsub.f32 %v1429, %v1459
    %v1461 = vmul.f32 %v1460, %v1460
    %v1462 = vsel %vm252, %v1461, 0.0
    %1463 = vadd.xlane.f32.xlu0 %v1462
    %v1464 = vpop.xlane.xlu0 %1463
    %v1465 = vmul.f32 %v1464, %v262
    %v1466 = vadd.f32 %v1465, 1e-05
    %v1467 = vrsqrt.pop %v1466
    %v1468 = vmul.f32 %v1467, %v1466
    %v1469 = vmul.f32 %v1468, %v1467
    %v1470 = vmul.f32 0.5, %v1469
    %v1471 = vsub.f32 1.5, %v1470
    %v1472 = vmul.f32 %v1467, %v1471
    %vm1473 = vweird.f32 %v1466
    %vm1474 = vweird.f32 %v1467
    %vm1475 = vmor %vm1473, %vm1474
    %v1476 = vsel %vm1475, %v1467, %v1472
    %v1477 = vmul.f32 %v1460, %v1476
    %v1478 = vmul.f32 %v1477, %v474
    %v1479 = vsel %vm252, %v1454, 0.0
    %1480 = vadd.xlane.f32.xlu0 %v1479
    %v1481 = vpop.xlane.xlu0 %1480
    %v1482 = vmul.f32 %v1481, %v262
    %v1483 = vsub.f32 %v1454, %v1482
    %v1484 = vmul.f32 %v1483, %v1483
    %v1485 = vsel %vm252, %v1484, 0.0
    %1486 = vadd.xlane.f32.xlu0 %v1485
    %v1487 = vpop.xlane.xlu0 %1486
    %v1488 = vmul.f32 %v1487, %v262
    %v1489 = vadd.f32 %v1488, 1e-05
    %v1490 = vrsqrt.pop %v1489
    %v1491 = vmul.f32 %v1490, %v1489
    %v1492 = vmul.f32 %v1491, %v1490
    %v1493 = vmul.f32 0.5, %v1492
    %v1494 = vsub.f32 1.5, %v1493
    %v1495 = vmul.f32 %v1490, %v1494
    %vm1496 = vweird.f32 %v1489
    %vm1497 = vweird.f32 %v1490
    %vm1498 = vmor %vm1496, %vm1497
    %v1499 = vsel %vm1498, %v1490, %v1495
    %v1500 = vmul.f32 %v1483, %v1499
    %v1501 = vmul.f32 %v1500, %v498
    %v1502 = vadd.f32 %v1478, %v1501
    %v1503 = vadd.f32 %v1502, %v501
    %v1504 = vxor.u32 %v1503, 2147483648
    %v1505 = vmul.f32 %v1504, 1.442695
    %v1506 = vpow.pop %v1505
    %v1507 = vadd.f32 %v1506, 1.0
    %v1508 = vrcp.pop %v1507
    %v1509 = vmul.f32 %v1507, %v1508
    %v1510 = vsub.f32 1.0, %v1509
    %v1511 = vmul.f32 %v1508, %v1510
    %v1512 = vadd.f32 %v1508, %v1511
    %vm1513 = vweird.f32 %v1507
    %vm1514 = vweird.f32 %v1508
    %vm1515 = vmor %vm1513, %vm1514
    %v1516 = vsel %vm1515, %v1508, %v1512
    %v1517 = vand.u32 2147483647, %v1507
    %vm1518 = vcmp.eq.f32.partialorder %v1517, 8.507059e+37
    %v1519 = vand.u32 %v1507, 2147483648
    %v1520 = vor.u32 1.1754944e-38, %v1519
    %v1521 = vsel %vm1518, %v1520, %v1516
    %v1522 = vmul.f32 1.0, %v1521
    %v1523 = vtanh.pop %v1503
    %v1524 = vmul.f32 %v1522, %v1205
    %1526 = vrot.lane.b32.xlu0 %v1523, 32
    %v1527 = vpop.permute.xlu0 %1526
    %v1529 = vmul.f32 %v1522, %v1527
    %1531 = vrot.lane.b32.xlu0 %v1529, 32
    %v1532 = vpop.permute.xlu0 %1531
    %v1534 = vadd.f32 %v1524, %v1532
    %1536 = vrot.lane.b32.xlu0 %v1534, 96
    %v1537 = vpop.permute.xlu0 %1536
    %v1539 = vsel %vm350, %v1537, 0.0
    %1540 = vadd.xlane.f32.xlu0 %v1539
    %v1541 = vpop.xlane.xlu0 %1540
    %v1542 = vmul.f32 %v1541, %v360
    %v1543 = vsub.f32 %v1534, %v1542
    %v1544 = vmul.f32 %v1543, %v1543
    %1546 = vrot.lane.b32.xlu0 %v1544, 96
    %v1547 = vpop.permute.xlu0 %1546
    %v1549 = vsel %vm350, %v1547, 0.0
    %1550 = vadd.xlane.f32.xlu0 %v1549
    %v1551 = vpop.xlane.xlu0 %1550
    %v1552 = vmul.f32 %v1551, %v360
    %v1553 = vadd.f32 %v1552, 1e-05
    %v1554 = vrsqrt.pop %v1553
    %v1555 = vmul.f32 %v1554, %v1553
    %v1556 = vmul.f32 %v1555, %v1554
    %v1557 = vmul.f32 0.5, %v1556
    %v1558 = vsub.f32 1.5, %v1557
    %v1559 = vmul.f32 %v1554, %v1558
    %vm1560 = vweird.f32 %v1553
    %vm1561 = vweird.f32 %v1554
    %vm1562 = vmor %vm1560, %vm1561
    %v1563 = vsel %vm1562, %v1554, %v1559
    %v1564 = vmul.f32 %v1543, %v1563
    %v1565 = vmul.f32 %v1564, %v571
    %v1566 = vadd.f32 %v1565, %v577
    %v1567 = vtanh.pop %v1566
    %1569 = vrot.lane.b32.xlu0 %v1567, 32
    %v1570 = vpop.permute.xlu0 %1569
    %v1572 = vmul.f32 %v1522, %v1570
    %s1573 = scalar_lea.vmem [#allocation2], 8
    %v1574 = vld [vmem:[%s1573] sm:$0x3]
    %v1576 = vsel %vm203, %v1574, 0
    %1578 = vmatpush.msra.mxu0 0.0
    %1579 = vmatpush.msra.mxu0 0.0
    %1580 = vmatpush.msra.mxu0 0.0
    %1581 = vmatpush.msra.mxu0 0.0
    %1582 = vmatpush.msra.mxu0 0.0
    %1583 = vmatpush.msra.mxu0 0.0
    %1584 = vmatpush.msra.mxu0 0.0
    %1585 = vmatpush.msra.mxu0 0.0
    %1586 = vmatpush.msra.mxu0 0.0
    %1587 = vmatpush.msra.mxu0 0.0
    %1588 = vmatpush.msra.mxu0 0.0
    %1589 = vmatpush.msra.mxu0 0.0
    %1590 = vmatpush.msra.mxu0 0.0
    %1591 = vmatpush.msra.mxu0 0.0
    %1592 = vmatpush.msra.mxu0 %v164
    %1593 = vmatpush.msra.mxu0 %v163
    %1594 = vmatmul.f32.gmra.mxu0 %v1576
    %v1595 = vpop.f32.mrf.mxu0
    %v1596 = vadd.f32 %v202, %v1595
    %1597 = vdwg.mxu0
    %1598 = vmatpush.msra.mxu0 0.0
    %1599 = vmatpush.msra.mxu0 0.0
    %1600 = vmatpush.msra.mxu0 0.0
    %1601 = vmatpush.msra.mxu0 0.0
    %1602 = vmatpush.msra.mxu0 0.0
    %1603 = vmatpush.msra.mxu0 0.0
    %1604 = vmatpush.msra.mxu0 0.0
    %1605 = vmatpush.msra.mxu0 0.0
    %1606 = vmatpush.msra.mxu0 0.0
    %1607 = vmatpush.msra.mxu0 0.0
    %1608 = vmatpush.msra.mxu0 0.0
    %1609 = vmatpush.msra.mxu0 0.0
    %1610 = vmatpush.msra.mxu0 %v172
    %1611 = vmatpush.msra.mxu0 %v171
    %1612 = vmatpush.msra.mxu0 %v170
    %1613 = vmatpush.msra.mxu0 %v169
    %1614 = vmatmul.f32.gmra.mxu0 %v1409
    %v1615 = vpop.f32.mrf.mxu0
    %v1616 = vadd.f32 %v227, %v1615
    %1617 = vdwg.mxu0
    %v1618 = vsel %vm252, %v1596, 0.0
    %1619 = vadd.xlane.f32.xlu0 %v1618
    %v1620 = vpop.xlane.xlu0 %1619
    %v1621 = vmul.f32 %v1620, %v262
    %v1622 = vsub.f32 %v1596, %v1621
    %v1623 = vmul.f32 %v1622, %v1622
    %v1624 = vsel %vm252, %v1623, 0.0
    %1625 = vadd.xlane.f32.xlu0 %v1624
    %v1626 = vpop.xlane.xlu0 %1625
    %v1627 = vmul.f32 %v1626, %v262
    %v1628 = vadd.f32 %v1627, 1e-05
    %v1629 = vrsqrt.pop %v1628
    %v1630 = vmul.f32 %v1629, %v1628
    %v1631 = vmul.f32 %v1630, %v1629
    %v1632 = vmul.f32 0.5, %v1631
    %v1633 = vsub.f32 1.5, %v1632
    %v1634 = vmul.f32 %v1629, %v1633
    %vm1635 = vweird.f32 %v1628
    %vm1636 = vweird.f32 %v1629
    %vm1637 = vmor %vm1635, %vm1636
    %v1638 = vsel %vm1637, %v1629, %v1634
    %v1639 = vmul.f32 %v1622, %v1638
    %v1640 = vmul.f32 %v1639, %v282
    %v1641 = vsel %vm252, %v1616, 0.0
    %1642 = vadd.xlane.f32.xlu0 %v1641
    %v1643 = vpop.xlane.xlu0 %1642
    %v1644 = vmul.f32 %v1643, %v262
    %v1645 = vsub.f32 %v1616, %v1644
    %v1646 = vmul.f32 %v1645, %v1645
    %v1647 = vsel %vm252, %v1646, 0.0
    %1648 = vadd.xlane.f32.xlu0 %v1647
    %v1649 = vpop.xlane.xlu0 %1648
    %v1650 = vmul.f32 %v1649, %v262
    %v1651 = vadd.f32 %v1650, 1e-05
    %v1652 = vrsqrt.pop %v1651
    %v1653 = vmul.f32 %v1652, %v1651
    %v1654 = vmul.f32 %v1653, %v1652
    %v1655 = vmul.f32 0.5, %v1654
    %v1656 = vsub.f32 1.5, %v1655
    %v1657 = vmul.f32 %v1652, %v1656
    %vm1658 = vweird.f32 %v1651
    %vm1659 = vweird.f32 %v1652
    %vm1660 = vmor %vm1658, %vm1659
    %v1661 = vsel %vm1660, %v1652, %v1657
    %v1662 = vmul.f32 %v1645, %v1661
    %v1663 = vmul.f32 %v1662, %v306
    %v1664 = vadd.f32 %v1640, %v1663
    %v1665 = vadd.f32 %v1664, %v309
    %v1666 = vxor.u32 %v1665, 2147483648
    %v1667 = vmul.f32 %v1666, 1.442695
    %v1668 = vpow.pop %v1667
    %v1669 = vadd.f32 %v1668, 1.0
    %v1670 = vrcp.pop %v1669
    %v1671 = vmul.f32 %v1669, %v1670
    %v1672 = vsub.f32 1.0, %v1671
    %v1673 = vmul.f32 %v1670, %v1672
    %v1674 = vadd.f32 %v1670, %v1673
    %vm1675 = vweird.f32 %v1669
    %vm1676 = vweird.f32 %v1670
    %vm1677 = vmor %vm1675, %vm1676
    %v1678 = vsel %vm1677, %v1670, %v1674
    %v1679 = vand.u32 2147483647, %v1669
    %vm1680 = vcmp.eq.f32.partialorder %v1679, 8.507059e+37
    %v1681 = vand.u32 %v1669, 2147483648
    %v1682 = vor.u32 1.1754944e-38, %v1681
    %v1683 = vsel %vm1680, %v1682, %v1678
    %v1684 = vmul.f32 1.0, %v1683
    %v1685 = vtanh.pop %v1665
    %v1686 = vmul.f32 %v1684, %v1367
    %1688 = vrot.lane.b32.xlu0 %v1685, 32
    %v1689 = vpop.permute.xlu0 %1688
    %v1691 = vmul.f32 %v1684, %v1689
    %1693 = vrot.lane.b32.xlu0 %v1691, 32
    %v1694 = vpop.permute.xlu0 %1693
    %v1696 = vadd.f32 %v1686, %v1694
    %1698 = vrot.lane.b32.xlu0 %v1696, 96
    %v1699 = vpop.permute.xlu0 %1698
    %v1701 = vsel %vm350, %v1699, 0.0
    %1702 = vadd.xlane.f32.xlu0 %v1701
    %v1703 = vpop.xlane.xlu0 %1702
    %v1704 = vmul.f32 %v1703, %v360
    %v1705 = vsub.f32 %v1696, %v1704
    %v1706 = vmul.f32 %v1705, %v1705
    %1708 = vrot.lane.b32.xlu0 %v1706, 96
    %v1709 = vpop.permute.xlu0 %1708
    %v1711 = vsel %vm350, %v1709, 0.0
    %1712 = vadd.xlane.f32.xlu0 %v1711
    %v1713 = vpop.xlane.xlu0 %1712
    %v1714 = vmul.f32 %v1713, %v360
    %v1715 = vadd.f32 %v1714, 1e-05
    %v1716 = vrsqrt.pop %v1715
    %v1717 = vmul.f32 %v1716, %v1715
    %v1718 = vmul.f32 %v1717, %v1716
    %v1719 = vmul.f32 0.5, %v1718
    %v1720 = vsub.f32 1.5, %v1719
    %v1721 = vmul.f32 %v1716, %v1720
    %vm1722 = vweird.f32 %v1715
    %vm1723 = vweird.f32 %v1716
    %vm1724 = vmor %vm1722, %vm1723
    %v1725 = vsel %vm1724, %v1716, %v1721
    %v1726 = vmul.f32 %v1705, %v1725
    %v1727 = vmul.f32 %v1726, %v387
    %v1728 = vadd.f32 %v1727, %v393
    %v1729 = vtanh.pop %v1728
    %1731 = vrot.lane.b32.xlu0 %v1729, 32
    %v1732 = vpop.permute.xlu0 %1731
    %v1734 = vmul.f32 %v1684, %v1732
    %1736 = vrot.lane.b32.xlu0 %v1734, 64
    %v1737 = vpop.permute.xlu0 %1736
    %v1738 = vsel %vm228, %v1737, 0
    %1740 = vmatpush.msra.mxu0 0.0
    %1741 = vmatpush.msra.mxu0 0.0
    %1742 = vmatpush.msra.mxu0 0.0
    %1743 = vmatpush.msra.mxu0 0.0
    %1744 = vmatpush.msra.mxu0 0.0
    %1745 = vmatpush.msra.mxu0 0.0
    %1746 = vmatpush.msra.mxu0 0.0
    %1747 = vmatpush.msra.mxu0 0.0
    %1748 = vmatpush.msra.mxu0 0.0
    %1749 = vmatpush.msra.mxu0 0.0
    %1750 = vmatpush.msra.mxu0 0.0
    %1751 = vmatpush.msra.mxu0 0.0
    %1752 = vmatpush.msra.mxu0 %v168
    %1753 = vmatpush.msra.mxu0 %v167
    %1754 = vmatpush.msra.mxu0 %v166
    %1755 = vmatpush.msra.mxu0 %v165
    %1756 = vmatmul.f32.gmra.mxu0 %v1738
    %v1757 = vpop.f32.mrf.mxu0
    %v1758 = vadd.f32 %v402, %v1757
    %1759 = vdwg.mxu0
    %1761 = vrot.lane.b32.xlu0 %v1572, 64
    %v1762 = vpop.permute.xlu0 %1761
    %v1763 = vsel %vm228, %v1762, 0
    %1765 = vmatpush.msra.mxu0 0.0
    %1766 = vmatpush.msra.mxu0 0.0
    %1767 = vmatpush.msra.mxu0 0.0
    %1768 = vmatpush.msra.mxu0 0.0
    %1769 = vmatpush.msra.mxu0 0.0
    %1770 = vmatpush.msra.mxu0 0.0
    %1771 = vmatpush.msra.mxu0 0.0
    %1772 = vmatpush.msra.mxu0 0.0
    %1773 = vmatpush.msra.mxu0 0.0
    %1774 = vmatpush.msra.mxu0 0.0
    %1775 = vmatpush.msra.mxu0 0.0
    %1776 = vmatpush.msra.mxu0 0.0
    %1777 = vmatpush.msra.mxu0 %v176
    %1778 = vmatpush.msra.mxu0 %v175
    %1779 = vmatpush.msra.mxu0 %v174
    %1780 = vmatpush.msra.mxu0 %v173
    %1781 = vmatmul.f32.gmra.mxu0 %v1763
    %v1782 = vpop.f32.mrf.mxu0
    %v1783 = vadd.f32 %v428, %v1782
    %1784 = vdwg.mxu0
    %v1785 = vsel %vm252, %v1758, 0.0
    %1786 = vadd.xlane.f32.xlu0 %v1785
    %v1787 = vpop.xlane.xlu0 %1786
    %v1788 = vmul.f32 %v1787, %v262
    %v1789 = vsub.f32 %v1758, %v1788
    %v1790 = vmul.f32 %v1789, %v1789
    %v1791 = vsel %vm252, %v1790, 0.0
    %1792 = vadd.xlane.f32.xlu0 %v1791
    %v1793 = vpop.xlane.xlu0 %1792
    %v1794 = vmul.f32 %v1793, %v262
    %v1795 = vadd.f32 %v1794, 1e-05
    %v1796 = vrsqrt.pop %v1795
    %v1797 = vmul.f32 %v1796, %v1795
    %v1798 = vmul.f32 %v1797, %v1796
    %v1799 = vmul.f32 0.5, %v1798
    %v1800 = vsub.f32 1.5, %v1799
    %v1801 = vmul.f32 %v1796, %v1800
    %vm1802 = vweird.f32 %v1795
    %vm1803 = vweird.f32 %v1796
    %vm1804 = vmor %vm1802, %vm1803
    %v1805 = vsel %vm1804, %v1796, %v1801
    %v1806 = vmul.f32 %v1789, %v1805
    %v1807 = vmul.f32 %v1806, %v474
    %v1808 = vsel %vm252, %v1783, 0.0
    %1809 = vadd.xlane.f32.xlu0 %v1808
    %v1810 = vpop.xlane.xlu0 %1809
    %v1811 = vmul.f32 %v1810, %v262
    %v1812 = vsub.f32 %v1783, %v1811
    %v1813 = vmul.f32 %v1812, %v1812
    %v1814 = vsel %vm252, %v1813, 0.0
    %1815 = vadd.xlane.f32.xlu0 %v1814
    %v1816 = vpop.xlane.xlu0 %1815
    %v1817 = vmul.f32 %v1816, %v262
    %v1818 = vadd.f32 %v1817, 1e-05
    %v1819 = vrsqrt.pop %v1818
    %v1820 = vmul.f32 %v1819, %v1818
    %v1821 = vmul.f32 %v1820, %v1819
    %v1822 = vmul.f32 0.5, %v1821
    %v1823 = vsub.f32 1.5, %v1822
    %v1824 = vmul.f32 %v1819, %v1823
    %vm1825 = vweird.f32 %v1818
    %vm1826 = vweird.f32 %v1819
    %vm1827 = vmor %vm1825, %vm1826
    %v1828 = vsel %vm1827, %v1819, %v1824
    %v1829 = vmul.f32 %v1812, %v1828
    %v1830 = vmul.f32 %v1829, %v498
    %v1831 = vadd.f32 %v1807, %v1830
    %v1832 = vadd.f32 %v1831, %v501
    %v1833 = vxor.u32 %v1832, 2147483648
    %v1834 = vmul.f32 %v1833, 1.442695
    %v1835 = vpow.pop %v1834
    %v1836 = vadd.f32 %v1835, 1.0
    %v1837 = vrcp.pop %v1836
    %v1838 = vmul.f32 %v1836, %v1837
    %v1839 = vsub.f32 1.0, %v1838
    %v1840 = vmul.f32 %v1837, %v1839
    %v1841 = vadd.f32 %v1837, %v1840
    %vm1842 = vweird.f32 %v1836
    %vm1843 = vweird.f32 %v1837
    %vm1844 = vmor %vm1842, %vm1843
    %v1845 = vsel %vm1844, %v1837, %v1841
    %v1846 = vand.u32 2147483647, %v1836
    %vm1847 = vcmp.eq.f32.partialorder %v1846, 8.507059e+37
    %v1848 = vand.u32 %v1836, 2147483648
    %v1849 = vor.u32 1.1754944e-38, %v1848
    %v1850 = vsel %vm1847, %v1849, %v1845
    %v1851 = vmul.f32 1.0, %v1850
    %v1852 = vtanh.pop %v1832
    %v1853 = vmul.f32 %v1851, %v1534
    %1855 = vrot.lane.b32.xlu0 %v1852, 32
    %v1856 = vpop.permute.xlu0 %1855
    %v1858 = vmul.f32 %v1851, %v1856
    %1860 = vrot.lane.b32.xlu0 %v1858, 32
    %v1861 = vpop.permute.xlu0 %1860
    %v1863 = vadd.f32 %v1853, %v1861
    %1865 = vrot.lane.b32.xlu0 %v1863, 96
    %v1866 = vpop.permute.xlu0 %1865
    %v1868 = vsel %vm350, %v1866, 0.0
    %1869 = vadd.xlane.f32.xlu0 %v1868
    %v1870 = vpop.xlane.xlu0 %1869
    %v1871 = vmul.f32 %v1870, %v360
    %v1872 = vsub.f32 %v1863, %v1871
    %v1873 = vmul.f32 %v1872, %v1872
    %1875 = vrot.lane.b32.xlu0 %v1873, 96
    %v1876 = vpop.permute.xlu0 %1875
    %v1878 = vsel %vm350, %v1876, 0.0
    %1879 = vadd.xlane.f32.xlu0 %v1878
    %v1880 = vpop.xlane.xlu0 %1879
    %v1881 = vmul.f32 %v1880, %v360
    %v1882 = vadd.f32 %v1881, 1e-05
    %v1883 = vrsqrt.pop %v1882
    %v1884 = vmul.f32 %v1883, %v1882
    %v1885 = vmul.f32 %v1884, %v1883
    %v1886 = vmul.f32 0.5, %v1885
    %v1887 = vsub.f32 1.5, %v1886
    %v1888 = vmul.f32 %v1883, %v1887
    %vm1889 = vweird.f32 %v1882
    %vm1890 = vweird.f32 %v1883
    %vm1891 = vmor %vm1889, %vm1890
    %v1892 = vsel %vm1891, %v1883, %v1888
    %v1893 = vmul.f32 %v1872, %v1892
    %v1894 = vmul.f32 %v1893, %v571
    %v1895 = vadd.f32 %v1894, %v577
    %v1896 = vtanh.pop %v1895
    %1898 = vrot.lane.b32.xlu0 %v1896, 32
    %v1899 = vpop.permute.xlu0 %1898
    %v1901 = vmul.f32 %v1851, %v1899
    %s1902 = scalar_lea.vmem [#allocation2], 10
    %v1903 = vld [vmem:[%s1902] sm:$0x3]
    %v1905 = vsel %vm203, %v1903, 0
    %1907 = vmatpush.msra.mxu0 0.0
    %1908 = vmatpush.msra.mxu0 0.0
    %1909 = vmatpush.msra.mxu0 0.0
    %1910 = vmatpush.msra.mxu0 0.0
    %1911 = vmatpush.msra.mxu0 0.0
    %1912 = vmatpush.msra.mxu0 0.0
    %1913 = vmatpush.msra.mxu0 0.0
    %1914 = vmatpush.msra.mxu0 0.0
    %1915 = vmatpush.msra.mxu0 0.0
    %1916 = vmatpush.msra.mxu0 0.0
    %1917 = vmatpush.msra.mxu0 0.0
    %1918 = vmatpush.msra.mxu0 0.0
    %1919 = vmatpush.msra.mxu0 0.0
    %1920 = vmatpush.msra.mxu0 0.0
    %1921 = vmatpush.msra.mxu0 %v164
    %1922 = vmatpush.msra.mxu0 %v163
    %1923 = vmatmul.f32.gmra.mxu0 %v1905
    %v1924 = vpop.f32.mrf.mxu0
    %v1925 = vadd.f32 %v202, %v1924
    %1926 = vdwg.mxu0
    %1927 = vmatpush.msra.mxu0 0.0
    %1928 = vmatpush.msra.mxu0 0.0
    %1929 = vmatpush.msra.mxu0 0.0
    %1930 = vmatpush.msra.mxu0 0.0
    %1931 = vmatpush.msra.mxu0 0.0
    %1932 = vmatpush.msra.mxu0 0.0
    %1933 = vmatpush.msra.mxu0 0.0
    %1934 = vmatpush.msra.mxu0 0.0
    %1935 = vmatpush.msra.mxu0 0.0
    %1936 = vmatpush.msra.mxu0 0.0
    %1937 = vmatpush.msra.mxu0 0.0
    %1938 = vmatpush.msra.mxu0 0.0
    %1939 = vmatpush.msra.mxu0 %v172
    %1940 = vmatpush.msra.mxu0 %v171
    %1941 = vmatpush.msra.mxu0 %v170
    %1942 = vmatpush.msra.mxu0 %v169
    %1943 = vmatmul.f32.gmra.mxu0 %v1738
    %v1944 = vpop.f32.mrf.mxu0
    %v1945 = vadd.f32 %v227, %v1944
    %1946 = vdwg.mxu0
    %v1947 = vsel %vm252, %v1925, 0.0
    %1948 = vadd.xlane.f32.xlu0 %v1947
    %v1949 = vpop.xlane.xlu0 %1948
    %v1950 = vmul.f32 %v1949, %v262
    %v1951 = vsub.f32 %v1925, %v1950
    %v1952 = vmul.f32 %v1951, %v1951
    %v1953 = vsel %vm252, %v1952, 0.0
    %1954 = vadd.xlane.f32.xlu0 %v1953
    %v1955 = vpop.xlane.xlu0 %1954
    %v1956 = vmul.f32 %v1955, %v262
    %v1957 = vadd.f32 %v1956, 1e-05
    %v1958 = vrsqrt.pop %v1957
    %v1959 = vmul.f32 %v1958, %v1957
    %v1960 = vmul.f32 %v1959, %v1958
    %v1961 = vmul.f32 0.5, %v1960
    %v1962 = vsub.f32 1.5, %v1961
    %v1963 = vmul.f32 %v1958, %v1962
    %vm1964 = vweird.f32 %v1957
    %vm1965 = vweird.f32 %v1958
    %vm1966 = vmor %vm1964, %vm1965
    %v1967 = vsel %vm1966, %v1958, %v1963
    %v1968 = vmul.f32 %v1951, %v1967
    %v1969 = vmul.f32 %v1968, %v282
    %v1970 = vsel %vm252, %v1945, 0.0
    %1971 = vadd.xlane.f32.xlu0 %v1970
    %v1972 = vpop.xlane.xlu0 %1971
    %v1973 = vmul.f32 %v1972, %v262
    %v1974 = vsub.f32 %v1945, %v1973
    %v1975 = vmul.f32 %v1974, %v1974
    %v1976 = vsel %vm252, %v1975, 0.0
    %1977 = vadd.xlane.f32.xlu0 %v1976
    %v1978 = vpop.xlane.xlu0 %1977
    %v1979 = vmul.f32 %v1978, %v262
    %v1980 = vadd.f32 %v1979, 1e-05
    %v1981 = vrsqrt.pop %v1980
    %v1982 = vmul.f32 %v1981, %v1980
    %v1983 = vmul.f32 %v1982, %v1981
    %v1984 = vmul.f32 0.5, %v1983
    %v1985 = vsub.f32 1.5, %v1984
    %v1986 = vmul.f32 %v1981, %v1985
    %vm1987 = vweird.f32 %v1980
    %vm1988 = vweird.f32 %v1981
    %vm1989 = vmor %vm1987, %vm1988
    %v1990 = vsel %vm1989, %v1981, %v1986
    %v1991 = vmul.f32 %v1974, %v1990
    %v1992 = vmul.f32 %v1991, %v306
    %v1993 = vadd.f32 %v1969, %v1992
    %v1994 = vadd.f32 %v1993, %v309
    %v1995 = vxor.u32 %v1994, 2147483648
    %v1996 = vmul.f32 %v1995, 1.442695
    %v1997 = vpow.pop %v1996
    %v1998 = vadd.f32 %v1997, 1.0
    %v1999 = vrcp.pop %v1998
    %v2000 = vmul.f32 %v1998, %v1999
    %v2001 = vsub.f32 1.0, %v2000
    %v2002 = vmul.f32 %v1999, %v2001
    %v2003 = vadd.f32 %v1999, %v2002
    %vm2004 = vweird.f32 %v1998
    %vm2005 = vweird.f32 %v1999
    %vm2006 = vmor %vm2004, %vm2005
    %v2007 = vsel %vm2006, %v1999, %v2003
    %v2008 = vand.u32 2147483647, %v1998
    %vm2009 = vcmp.eq.f32.partialorder %v2008, 8.507059e+37
    %v2010 = vand.u32 %v1998, 2147483648
    %v2011 = vor.u32 1.1754944e-38, %v2010
    %v2012 = vsel %vm2009, %v2011, %v2007
    %v2013 = vmul.f32 1.0, %v2012
    %v2014 = vtanh.pop %v1994
    %v2015 = vmul.f32 %v2013, %v1696
    %2017 = vrot.lane.b32.xlu0 %v2014, 32
    %v2018 = vpop.permute.xlu0 %2017
    %v2020 = vmul.f32 %v2013, %v2018
    %2022 = vrot.lane.b32.xlu0 %v2020, 32
    %v2023 = vpop.permute.xlu0 %2022
    %v2025 = vadd.f32 %v2015, %v2023
    %2027 = vrot.lane.b32.xlu0 %v2025, 96
    %v2028 = vpop.permute.xlu0 %2027
    %v2030 = vsel %vm350, %v2028, 0.0
    %2031 = vadd.xlane.f32.xlu0 %v2030
    %v2032 = vpop.xlane.xlu0 %2031
    %v2033 = vmul.f32 %v2032, %v360
    %v2034 = vsub.f32 %v2025, %v2033
    %v2035 = vmul.f32 %v2034, %v2034
    %2037 = vrot.lane.b32.xlu0 %v2035, 96
    %v2038 = vpop.permute.xlu0 %2037
    %v2040 = vsel %vm350, %v2038, 0.0
    %2041 = vadd.xlane.f32.xlu0 %v2040
    %v2042 = vpop.xlane.xlu0 %2041
    %v2043 = vmul.f32 %v2042, %v360
    %v2044 = vadd.f32 %v2043, 1e-05
    %v2045 = vrsqrt.pop %v2044
    %v2046 = vmul.f32 %v2045, %v2044
    %v2047 = vmul.f32 %v2046, %v2045
    %v2048 = vmul.f32 0.5, %v2047
    %v2049 = vsub.f32 1.5, %v2048
    %v2050 = vmul.f32 %v2045, %v2049
    %vm2051 = vweird.f32 %v2044
    %vm2052 = vweird.f32 %v2045
    %vm2053 = vmor %vm2051, %vm2052
    %v2054 = vsel %vm2053, %v2045, %v2050
    %v2055 = vmul.f32 %v2034, %v2054
    %v2056 = vmul.f32 %v2055, %v387
    %v2057 = vadd.f32 %v2056, %v393
    %v2058 = vtanh.pop %v2057
    %2060 = vrot.lane.b32.xlu0 %v2058, 32
    %v2061 = vpop.permute.xlu0 %2060
    %v2063 = vmul.f32 %v2013, %v2061
    %2065 = vrot.lane.b32.xlu0 %v2063, 64
    %v2066 = vpop.permute.xlu0 %2065
    %v2067 = vsel %vm228, %v2066, 0
    %2069 = vmatpush.msra.mxu0 0.0
    %2070 = vmatpush.msra.mxu0 0.0
    %2071 = vmatpush.msra.mxu0 0.0
    %2072 = vmatpush.msra.mxu0 0.0
    %2073 = vmatpush.msra.mxu0 0.0
    %2074 = vmatpush.msra.mxu0 0.0
    %2075 = vmatpush.msra.mxu0 0.0
    %2076 = vmatpush.msra.mxu0 0.0
    %2077 = vmatpush.msra.mxu0 0.0
    %2078 = vmatpush.msra.mxu0 0.0
    %2079 = vmatpush.msra.mxu0 0.0
    %2080 = vmatpush.msra.mxu0 0.0
    %2081 = vmatpush.msra.mxu0 %v168
    %2082 = vmatpush.msra.mxu0 %v167
    %2083 = vmatpush.msra.mxu0 %v166
    %2084 = vmatpush.msra.mxu0 %v165
    %2085 = vmatmul.f32.gmra.mxu0 %v2067
    %v2086 = vpop.f32.mrf.mxu0
    %v2087 = vadd.f32 %v402, %v2086
    %2088 = vdwg.mxu0
    %2090 = vrot.lane.b32.xlu0 %v1901, 64
    %v2091 = vpop.permute.xlu0 %2090
    %v2092 = vsel %vm228, %v2091, 0
    %2094 = vmatpush.msra.mxu0 0.0
    %2095 = vmatpush.msra.mxu0 0.0
    %2096 = vmatpush.msra.mxu0 0.0
    %2097 = vmatpush.msra.mxu0 0.0
    %2098 = vmatpush.msra.mxu0 0.0
    %2099 = vmatpush.msra.mxu0 0.0
    %2100 = vmatpush.msra.mxu0 0.0
    %2101 = vmatpush.msra.mxu0 0.0
    %2102 = vmatpush.msra.mxu0 0.0
    %2103 = vmatpush.msra.mxu0 0.0
    %2104 = vmatpush.msra.mxu0 0.0
    %2105 = vmatpush.msra.mxu0 0.0
    %2106 = vmatpush.msra.mxu0 %v176
    %2107 = vmatpush.msra.mxu0 %v175
    %2108 = vmatpush.msra.mxu0 %v174
    %2109 = vmatpush.msra.mxu0 %v173
    %2110 = vmatmul.f32.gmra.mxu0 %v2092
    %v2111 = vpop.f32.mrf.mxu0
    %v2112 = vadd.f32 %v428, %v2111
    %2113 = vdwg.mxu0
    %v2114 = vsel %vm252, %v2087, 0.0
    %2115 = vadd.xlane.f32.xlu0 %v2114
    %v2116 = vpop.xlane.xlu0 %2115
    %v2117 = vmul.f32 %v2116, %v262
    %v2118 = vsub.f32 %v2087, %v2117
    %v2119 = vmul.f32 %v2118, %v2118
    %v2120 = vsel %vm252, %v2119, 0.0
    %2121 = vadd.xlane.f32.xlu0 %v2120
    %v2122 = vpop.xlane.xlu0 %2121
    %v2123 = vmul.f32 %v2122, %v262
    %v2124 = vadd.f32 %v2123, 1e-05
    %v2125 = vrsqrt.pop %v2124
    %v2126 = vmul.f32 %v2125, %v2124
    %v2127 = vmul.f32 %v2126, %v2125
    %v2128 = vmul.f32 0.5, %v2127
    %v2129 = vsub.f32 1.5, %v2128
    %v2130 = vmul.f32 %v2125, %v2129
    %vm2131 = vweird.f32 %v2124
    %vm2132 = vweird.f32 %v2125
    %vm2133 = vmor %vm2131, %vm2132
    %v2134 = vsel %vm2133, %v2125, %v2130
    %v2135 = vmul.f32 %v2118, %v2134
    %v2136 = vmul.f32 %v2135, %v474
    %v2137 = vsel %vm252, %v2112, 0.0
    %2138 = vadd.xlane.f32.xlu0 %v2137
    %v2139 = vpop.xlane.xlu0 %2138
    %v2140 = vmul.f32 %v2139, %v262
    %v2141 = vsub.f32 %v2112, %v2140
    %v2142 = vmul.f32 %v2141, %v2141
    %v2143 = vsel %vm252, %v2142, 0.0
    %2144 = vadd.xlane.f32.xlu0 %v2143
    %v2145 = vpop.xlane.xlu0 %2144
    %v2146 = vmul.f32 %v2145, %v262
    %v2147 = vadd.f32 %v2146, 1e-05
    %v2148 = vrsqrt.pop %v2147
    %v2149 = vmul.f32 %v2148, %v2147
    %v2150 = vmul.f32 %v2149, %v2148
    %v2151 = vmul.f32 0.5, %v2150
    %v2152 = vsub.f32 1.5, %v2151
    %v2153 = vmul.f32 %v2148, %v2152
    %vm2154 = vweird.f32 %v2147
    %vm2155 = vweird.f32 %v2148
    %vm2156 = vmor %vm2154, %vm2155
    %v2157 = vsel %vm2156, %v2148, %v2153
    %v2158 = vmul.f32 %v2141, %v2157
    %v2159 = vmul.f32 %v2158, %v498
    %v2160 = vadd.f32 %v2136, %v2159
    %v2161 = vadd.f32 %v2160, %v501
    %v2162 = vxor.u32 %v2161, 2147483648
    %v2163 = vmul.f32 %v2162, 1.442695
    %v2164 = vpow.pop %v2163
    %v2165 = vadd.f32 %v2164, 1.0
    %v2166 = vrcp.pop %v2165
    %v2167 = vmul.f32 %v2165, %v2166
    %v2168 = vsub.f32 1.0, %v2167
    %v2169 = vmul.f32 %v2166, %v2168
    %v2170 = vadd.f32 %v2166, %v2169
    %vm2171 = vweird.f32 %v2165
    %vm2172 = vweird.f32 %v2166
    %vm2173 = vmor %vm2171, %vm2172
    %v2174 = vsel %vm2173, %v2166, %v2170
    %v2175 = vand.u32 2147483647, %v2165
    %vm2176 = vcmp.eq.f32.partialorder %v2175, 8.507059e+37
    %v2177 = vand.u32 %v2165, 2147483648
    %v2178 = vor.u32 1.1754944e-38, %v2177
    %v2179 = vsel %vm2176, %v2178, %v2174
    %v2180 = vmul.f32 1.0, %v2179
    %v2181 = vtanh.pop %v2161
    %v2182 = vmul.f32 %v2180, %v1863
    %2184 = vrot.lane.b32.xlu0 %v2181, 32
    %v2185 = vpop.permute.xlu0 %2184
    %v2187 = vmul.f32 %v2180, %v2185
    %2189 = vrot.lane.b32.xlu0 %v2187, 32
    %v2190 = vpop.permute.xlu0 %2189
    %v2192 = vadd.f32 %v2182, %v2190
    %2194 = vrot.lane.b32.xlu0 %v2192, 96
    %v2195 = vpop.permute.xlu0 %2194
    %v2197 = vsel %vm350, %v2195, 0.0
    %2198 = vadd.xlane.f32.xlu0 %v2197
    %v2199 = vpop.xlane.xlu0 %2198
    %v2200 = vmul.f32 %v2199, %v360
    %v2201 = vsub.f32 %v2192, %v2200
    %v2202 = vmul.f32 %v2201, %v2201
    %2204 = vrot.lane.b32.xlu0 %v2202, 96
    %v2205 = vpop.permute.xlu0 %2204
    %v2207 = vsel %vm350, %v2205, 0.0
    %2208 = vadd.xlane.f32.xlu0 %v2207
    %v2209 = vpop.xlane.xlu0 %2208
    %v2210 = vmul.f32 %v2209, %v360
    %v2211 = vadd.f32 %v2210, 1e-05
    %v2212 = vrsqrt.pop %v2211
    %v2213 = vmul.f32 %v2212, %v2211
    %v2214 = vmul.f32 %v2213, %v2212
    %v2215 = vmul.f32 0.5, %v2214
    %v2216 = vsub.f32 1.5, %v2215
    %v2217 = vmul.f32 %v2212, %v2216
    %vm2218 = vweird.f32 %v2211
    %vm2219 = vweird.f32 %v2212
    %vm2220 = vmor %vm2218, %vm2219
    %v2221 = vsel %vm2220, %v2212, %v2217
    %v2222 = vmul.f32 %v2201, %v2221
    %v2223 = vmul.f32 %v2222, %v571
    %v2224 = vadd.f32 %v2223, %v577
    %v2225 = vtanh.pop %v2224
    %2227 = vrot.lane.b32.xlu0 %v2225, 32
    %v2228 = vpop.permute.xlu0 %2227
    %v2230 = vmul.f32 %v2180, %v2228
    %s2231 = scalar_lea.vmem [#allocation2], 12
    %v2232 = vld [vmem:[%s2231] sm:$0x3]
    %v2234 = vsel %vm203, %v2232, 0
    %2236 = vmatpush.msra.mxu0 0.0
    %2237 = vmatpush.msra.mxu0 0.0
    %2238 = vmatpush.msra.mxu0 0.0
    %2239 = vmatpush.msra.mxu0 0.0
    %2240 = vmatpush.msra.mxu0 0.0
    %2241 = vmatpush.msra.mxu0 0.0
    %2242 = vmatpush.msra.mxu0 0.0
    %2243 = vmatpush.msra.mxu0 0.0
    %2244 = vmatpush.msra.mxu0 0.0
    %2245 = vmatpush.msra.mxu0 0.0
    %2246 = vmatpush.msra.mxu0 0.0
    %2247 = vmatpush.msra.mxu0 0.0
    %2248 = vmatpush.msra.mxu0 0.0
    %2249 = vmatpush.msra.mxu0 0.0
    %2250 = vmatpush.msra.mxu0 %v164
    %2251 = vmatpush.msra.mxu0 %v163
    %2252 = vmatmul.f32.gmra.mxu0 %v2234
    %v2253 = vpop.f32.mrf.mxu0
    %v2254 = vadd.f32 %v202, %v2253
    %2255 = vdwg.mxu0
    %2256 = vmatpush.msra.mxu0 0.0
    %2257 = vmatpush.msra.mxu0 0.0
    %2258 = vmatpush.msra.mxu0 0.0
    %2259 = vmatpush.msra.mxu0 0.0
    %2260 = vmatpush.msra.mxu0 0.0
    %2261 = vmatpush.msra.mxu0 0.0
    %2262 = vmatpush.msra.mxu0 0.0
    %2263 = vmatpush.msra.mxu0 0.0
    %2264 = vmatpush.msra.mxu0 0.0
    %2265 = vmatpush.msra.mxu0 0.0
    %2266 = vmatpush.msra.mxu0 0.0
    %2267 = vmatpush.msra.mxu0 0.0
    %2268 = vmatpush.msra.mxu0 %v172
    %2269 = vmatpush.msra.mxu0 %v171
    %2270 = vmatpush.msra.mxu0 %v170
    %2271 = vmatpush.msra.mxu0 %v169
    %2272 = vmatmul.f32.gmra.mxu0 %v2067
    %v2273 = vpop.f32.mrf.mxu0
    %v2274 = vadd.f32 %v227, %v2273
    %2275 = vdwg.mxu0
    %v2276 = vsel %vm252, %v2254, 0.0
    %2277 = vadd.xlane.f32.xlu0 %v2276
    %v2278 = vpop.xlane.xlu0 %2277
    %v2279 = vmul.f32 %v2278, %v262
    %v2280 = vsub.f32 %v2254, %v2279
    %v2281 = vmul.f32 %v2280, %v2280
    %v2282 = vsel %vm252, %v2281, 0.0
    %2283 = vadd.xlane.f32.xlu0 %v2282
    %v2284 = vpop.xlane.xlu0 %2283
    %v2285 = vmul.f32 %v2284, %v262
    %v2286 = vadd.f32 %v2285, 1e-05
    %v2287 = vrsqrt.pop %v2286
    %v2288 = vmul.f32 %v2287, %v2286
    %v2289 = vmul.f32 %v2288, %v2287
    %v2290 = vmul.f32 0.5, %v2289
    %v2291 = vsub.f32 1.5, %v2290
    %v2292 = vmul.f32 %v2287, %v2291
    %vm2293 = vweird.f32 %v2286
    %vm2294 = vweird.f32 %v2287
    %vm2295 = vmor %vm2293, %vm2294
    %v2296 = vsel %vm2295, %v2287, %v2292
    %v2297 = vmul.f32 %v2280, %v2296
    %v2298 = vmul.f32 %v2297, %v282
    %v2299 = vsel %vm252, %v2274, 0.0
    %2300 = vadd.xlane.f32.xlu0 %v2299
    %v2301 = vpop.xlane.xlu0 %2300
    %v2302 = vmul.f32 %v2301, %v262
    %v2303 = vsub.f32 %v2274, %v2302
    %v2304 = vmul.f32 %v2303, %v2303
    %v2305 = vsel %vm252, %v2304, 0.0
    %2306 = vadd.xlane.f32.xlu0 %v2305
    %v2307 = vpop.xlane.xlu0 %2306
    %v2308 = vmul.f32 %v2307, %v262
    %v2309 = vadd.f32 %v2308, 1e-05
    %v2310 = vrsqrt.pop %v2309
    %v2311 = vmul.f32 %v2310, %v2309
    %v2312 = vmul.f32 %v2311, %v2310
    %v2313 = vmul.f32 0.5, %v2312
    %v2314 = vsub.f32 1.5, %v2313
    %v2315 = vmul.f32 %v2310, %v2314
    %vm2316 = vweird.f32 %v2309
    %vm2317 = vweird.f32 %v2310
    %vm2318 = vmor %vm2316, %vm2317
    %v2319 = vsel %vm2318, %v2310, %v2315
    %v2320 = vmul.f32 %v2303, %v2319
    %v2321 = vmul.f32 %v2320, %v306
    %v2322 = vadd.f32 %v2298, %v2321
    %v2323 = vadd.f32 %v2322, %v309
    %v2324 = vxor.u32 %v2323, 2147483648
    %v2325 = vmul.f32 %v2324, 1.442695
    %v2326 = vpow.pop %v2325
    %v2327 = vadd.f32 %v2326, 1.0
    %v2328 = vrcp.pop %v2327
    %v2329 = vmul.f32 %v2327, %v2328
    %v2330 = vsub.f32 1.0, %v2329
    %v2331 = vmul.f32 %v2328, %v2330
    %v2332 = vadd.f32 %v2328, %v2331
    %vm2333 = vweird.f32 %v2327
    %vm2334 = vweird.f32 %v2328
    %vm2335 = vmor %vm2333, %vm2334
    %v2336 = vsel %vm2335, %v2328, %v2332
    %v2337 = vand.u32 2147483647, %v2327
    %vm2338 = vcmp.eq.f32.partialorder %v2337, 8.507059e+37
    %v2339 = vand.u32 %v2327, 2147483648
    %v2340 = vor.u32 1.1754944e-38, %v2339
    %v2341 = vsel %vm2338, %v2340, %v2336
    %v2342 = vmul.f32 1.0, %v2341
    %v2343 = vtanh.pop %v2323
    %v2344 = vmul.f32 %v2342, %v2025
    %2346 = vrot.lane.b32.xlu0 %v2343, 32
    %v2347 = vpop.permute.xlu0 %2346
    %v2349 = vmul.f32 %v2342, %v2347
    %2351 = vrot.lane.b32.xlu0 %v2349, 32
    %v2352 = vpop.permute.xlu0 %2351
    %v2354 = vadd.f32 %v2344, %v2352
    %2356 = vrot.lane.b32.xlu0 %v2354, 96
    %v2357 = vpop.permute.xlu0 %2356
    %v2359 = vsel %vm350, %v2357, 0.0
    %2360 = vadd.xlane.f32.xlu0 %v2359
    %v2361 = vpop.xlane.xlu0 %2360
    %v2362 = vmul.f32 %v2361, %v360
    %v2363 = vsub.f32 %v2354, %v2362
    %v2364 = vmul.f32 %v2363, %v2363
    %2366 = vrot.lane.b32.xlu0 %v2364, 96
    %v2367 = vpop.permute.xlu0 %2366
    %v2369 = vsel %vm350, %v2367, 0.0
    %2370 = vadd.xlane.f32.xlu0 %v2369
    %v2371 = vpop.xlane.xlu0 %2370
    %v2372 = vmul.f32 %v2371, %v360
    %v2373 = vadd.f32 %v2372, 1e-05
    %v2374 = vrsqrt.pop %v2373
    %v2375 = vmul.f32 %v2374, %v2373
    %v2376 = vmul.f32 %v2375, %v2374
    %v2377 = vmul.f32 0.5, %v2376
    %v2378 = vsub.f32 1.5, %v2377
    %v2379 = vmul.f32 %v2374, %v2378
    %vm2380 = vweird.f32 %v2373
    %vm2381 = vweird.f32 %v2374
    %vm2382 = vmor %vm2380, %vm2381
    %v2383 = vsel %vm2382, %v2374, %v2379
    %v2384 = vmul.f32 %v2363, %v2383
    %v2385 = vmul.f32 %v2384, %v387
    %v2386 = vadd.f32 %v2385, %v393
    %v2387 = vtanh.pop %v2386
    %2389 = vrot.lane.b32.xlu0 %v2387, 32
    %v2390 = vpop.permute.xlu0 %2389
    %v2392 = vmul.f32 %v2342, %v2390
    %2394 = vrot.lane.b32.xlu0 %v2392, 64
    %v2395 = vpop.permute.xlu0 %2394
    %v2396 = vsel %vm228, %v2395, 0
    %2398 = vmatpush.msra.mxu0 0.0
    %2399 = vmatpush.msra.mxu0 0.0
    %2400 = vmatpush.msra.mxu0 0.0
    %2401 = vmatpush.msra.mxu0 0.0
    %2402 = vmatpush.msra.mxu0 0.0
    %2403 = vmatpush.msra.mxu0 0.0
    %2404 = vmatpush.msra.mxu0 0.0
    %2405 = vmatpush.msra.mxu0 0.0
    %2406 = vmatpush.msra.mxu0 0.0
    %2407 = vmatpush.msra.mxu0 0.0
    %2408 = vmatpush.msra.mxu0 0.0
    %2409 = vmatpush.msra.mxu0 0.0
    %2410 = vmatpush.msra.mxu0 %v168
    %2411 = vmatpush.msra.mxu0 %v167
    %2412 = vmatpush.msra.mxu0 %v166
    %2413 = vmatpush.msra.mxu0 %v165
    %2414 = vmatmul.f32.gmra.mxu0 %v2396
    %v2415 = vpop.f32.mrf.mxu0
    %v2416 = vadd.f32 %v402, %v2415
    %2417 = vdwg.mxu0
    %2419 = vrot.lane.b32.xlu0 %v2230, 64
    %v2420 = vpop.permute.xlu0 %2419
    %v2421 = vsel %vm228, %v2420, 0
    %2423 = vmatpush.msra.mxu0 0.0
    %2424 = vmatpush.msra.mxu0 0.0
    %2425 = vmatpush.msra.mxu0 0.0
    %2426 = vmatpush.msra.mxu0 0.0
    %2427 = vmatpush.msra.mxu0 0.0
    %2428 = vmatpush.msra.mxu0 0.0
    %2429 = vmatpush.msra.mxu0 0.0
    %2430 = vmatpush.msra.mxu0 0.0
    %2431 = vmatpush.msra.mxu0 0.0
    %2432 = vmatpush.msra.mxu0 0.0
    %2433 = vmatpush.msra.mxu0 0.0
    %2434 = vmatpush.msra.mxu0 0.0
    %2435 = vmatpush.msra.mxu0 %v176
    %2436 = vmatpush.msra.mxu0 %v175
    %2437 = vmatpush.msra.mxu0 %v174
    %2438 = vmatpush.msra.mxu0 %v173
    %2439 = vmatmul.f32.gmra.mxu0 %v2421
    %v2440 = vpop.f32.mrf.mxu0
    %v2441 = vadd.f32 %v428, %v2440
    %2442 = vdwg.mxu0
    %v2443 = vsel %vm252, %v2416, 0.0
    %2444 = vadd.xlane.f32.xlu0 %v2443
    %v2445 = vpop.xlane.xlu0 %2444
    %v2446 = vmul.f32 %v2445, %v262
    %v2447 = vsub.f32 %v2416, %v2446
    %v2448 = vmul.f32 %v2447, %v2447
    %v2449 = vsel %vm252, %v2448, 0.0
    %2450 = vadd.xlane.f32.xlu0 %v2449
    %v2451 = vpop.xlane.xlu0 %2450
    %v2452 = vmul.f32 %v2451, %v262
    %v2453 = vadd.f32 %v2452, 1e-05
    %v2454 = vrsqrt.pop %v2453
    %v2455 = vmul.f32 %v2454, %v2453
    %v2456 = vmul.f32 %v2455, %v2454
    %v2457 = vmul.f32 0.5, %v2456
    %v2458 = vsub.f32 1.5, %v2457
    %v2459 = vmul.f32 %v2454, %v2458
    %vm2460 = vweird.f32 %v2453
    %vm2461 = vweird.f32 %v2454
    %vm2462 = vmor %vm2460, %vm2461
    %v2463 = vsel %vm2462, %v2454, %v2459
    %v2464 = vmul.f32 %v2447, %v2463
    %v2465 = vmul.f32 %v2464, %v474
    %v2466 = vsel %vm252, %v2441, 0.0
    %2467 = vadd.xlane.f32.xlu0 %v2466
    %v2468 = vpop.xlane.xlu0 %2467
    %v2469 = vmul.f32 %v2468, %v262
    %v2470 = vsub.f32 %v2441, %v2469
    %v2471 = vmul.f32 %v2470, %v2470
    %v2472 = vsel %vm252, %v2471, 0.0
    %2473 = vadd.xlane.f32.xlu0 %v2472
    %v2474 = vpop.xlane.xlu0 %2473
    %v2475 = vmul.f32 %v2474, %v262
    %v2476 = vadd.f32 %v2475, 1e-05
    %v2477 = vrsqrt.pop %v2476
    %v2478 = vmul.f32 %v2477, %v2476
    %v2479 = vmul.f32 %v2478, %v2477
    %v2480 = vmul.f32 0.5, %v2479
    %v2481 = vsub.f32 1.5, %v2480
    %v2482 = vmul.f32 %v2477, %v2481
    %vm2483 = vweird.f32 %v2476
    %vm2484 = vweird.f32 %v2477
    %vm2485 = vmor %vm2483, %vm2484
    %v2486 = vsel %vm2485, %v2477, %v2482
    %v2487 = vmul.f32 %v2470, %v2486
    %v2488 = vmul.f32 %v2487, %v498
    %v2489 = vadd.f32 %v2465, %v2488
    %v2490 = vadd.f32 %v2489, %v501
    %v2491 = vxor.u32 %v2490, 2147483648
    %v2492 = vmul.f32 %v2491, 1.442695
    %v2493 = vpow.pop %v2492
    %v2494 = vadd.f32 %v2493, 1.0
    %v2495 = vrcp.pop %v2494
    %v2496 = vmul.f32 %v2494, %v2495
    %v2497 = vsub.f32 1.0, %v2496
    %v2498 = vmul.f32 %v2495, %v2497
    %v2499 = vadd.f32 %v2495, %v2498
    %vm2500 = vweird.f32 %v2494
    %vm2501 = vweird.f32 %v2495
    %vm2502 = vmor %vm2500, %vm2501
    %v2503 = vsel %vm2502, %v2495, %v2499
    %v2504 = vand.u32 2147483647, %v2494
    %vm2505 = vcmp.eq.f32.partialorder %v2504, 8.507059e+37
    %v2506 = vand.u32 %v2494, 2147483648
    %v2507 = vor.u32 1.1754944e-38, %v2506
    %v2508 = vsel %vm2505, %v2507, %v2503
    %v2509 = vmul.f32 1.0, %v2508
    %v2510 = vtanh.pop %v2490
    %v2511 = vmul.f32 %v2509, %v2192
    %2513 = vrot.lane.b32.xlu0 %v2510, 32
    %v2514 = vpop.permute.xlu0 %2513
    %v2516 = vmul.f32 %v2509, %v2514
    %2518 = vrot.lane.b32.xlu0 %v2516, 32
    %v2519 = vpop.permute.xlu0 %2518
    %v2521 = vadd.f32 %v2511, %v2519
    %2523 = vrot.lane.b32.xlu0 %v2521, 96
    %v2524 = vpop.permute.xlu0 %2523
    %v2526 = vsel %vm350, %v2524, 0.0
    %2527 = vadd.xlane.f32.xlu0 %v2526
    %v2528 = vpop.xlane.xlu0 %2527
    %v2529 = vmul.f32 %v2528, %v360
    %v2530 = vsub.f32 %v2521, %v2529
    %v2531 = vmul.f32 %v2530, %v2530
    %2533 = vrot.lane.b32.xlu0 %v2531, 96
    %v2534 = vpop.permute.xlu0 %2533
    %v2536 = vsel %vm350, %v2534, 0.0
    %2537 = vadd.xlane.f32.xlu0 %v2536
    %v2538 = vpop.xlane.xlu0 %2537
    %v2539 = vmul.f32 %v2538, %v360
    %v2540 = vadd.f32 %v2539, 1e-05
    %v2541 = vrsqrt.pop %v2540
    %v2542 = vmul.f32 %v2541, %v2540
    %v2543 = vmul.f32 %v2542, %v2541
    %v2544 = vmul.f32 0.5, %v2543
    %v2545 = vsub.f32 1.5, %v2544
    %v2546 = vmul.f32 %v2541, %v2545
    %vm2547 = vweird.f32 %v2540
    %vm2548 = vweird.f32 %v2541
    %vm2549 = vmor %vm2547, %vm2548
    %v2550 = vsel %vm2549, %v2541, %v2546
    %v2551 = vmul.f32 %v2530, %v2550
    %v2552 = vmul.f32 %v2551, %v571
    %v2553 = vadd.f32 %v2552, %v577
    %v2554 = vtanh.pop %v2553
    %2556 = vrot.lane.b32.xlu0 %v2554, 32
    %v2557 = vpop.permute.xlu0 %2556
    %v2559 = vmul.f32 %v2509, %v2557
    %s2560 = scalar_lea.vmem [#allocation2], 14
    %v2561 = vld [vmem:[%s2560] sm:$0x3]
    %v2563 = vsel %vm203, %v2561, 0
    %2565 = vmatpush.msra.mxu0 0.0
    %2566 = vmatpush.msra.mxu0 0.0
    %2567 = vmatpush.msra.mxu0 0.0
    %2568 = vmatpush.msra.mxu0 0.0
    %2569 = vmatpush.msra.mxu0 0.0
    %2570 = vmatpush.msra.mxu0 0.0
    %2571 = vmatpush.msra.mxu0 0.0
    %2572 = vmatpush.msra.mxu0 0.0
    %2573 = vmatpush.msra.mxu0 0.0
    %2574 = vmatpush.msra.mxu0 0.0
    %2575 = vmatpush.msra.mxu0 0.0
    %2576 = vmatpush.msra.mxu0 0.0
    %2577 = vmatpush.msra.mxu0 0.0
    %2578 = vmatpush.msra.mxu0 0.0
    %2579 = vmatpush.msra.mxu0 %v164
    %2580 = vmatpush.msra.mxu0 %v163
    %2581 = vmatmul.f32.gmra.mxu0 %v2563
    %v2582 = vpop.f32.mrf.mxu0
    %v2583 = vadd.f32 %v202, %v2582
    %2584 = vdwg.mxu0
    %2585 = vmatpush.msra.mxu0 0.0
    %2586 = vmatpush.msra.mxu0 0.0
    %2587 = vmatpush.msra.mxu0 0.0
    %2588 = vmatpush.msra.mxu0 0.0
    %2589 = vmatpush.msra.mxu0 0.0
    %2590 = vmatpush.msra.mxu0 0.0
    %2591 = vmatpush.msra.mxu0 0.0
    %2592 = vmatpush.msra.mxu0 0.0
    %2593 = vmatpush.msra.mxu0 0.0
    %2594 = vmatpush.msra.mxu0 0.0
    %2595 = vmatpush.msra.mxu0 0.0
    %2596 = vmatpush.msra.mxu0 0.0
    %2597 = vmatpush.msra.mxu0 %v172
    %2598 = vmatpush.msra.mxu0 %v171
    %2599 = vmatpush.msra.mxu0 %v170
    %2600 = vmatpush.msra.mxu0 %v169
    %2601 = vmatmul.f32.gmra.mxu0 %v2396
    %v2602 = vpop.f32.mrf.mxu0
    %v2603 = vadd.f32 %v227, %v2602
    %2604 = vdwg.mxu0
    %v2605 = vsel %vm252, %v2583, 0.0
    %2606 = vadd.xlane.f32.xlu0 %v2605
    %v2607 = vpop.xlane.xlu0 %2606
    %v2608 = vmul.f32 %v2607, %v262
    %v2609 = vsub.f32 %v2583, %v2608
    %v2610 = vmul.f32 %v2609, %v2609
    %v2611 = vsel %vm252, %v2610, 0.0
    %2612 = vadd.xlane.f32.xlu0 %v2611
    %v2613 = vpop.xlane.xlu0 %2612
    %v2614 = vmul.f32 %v2613, %v262
    %v2615 = vadd.f32 %v2614, 1e-05
    %v2616 = vrsqrt.pop %v2615
    %v2617 = vmul.f32 %v2616, %v2615
    %v2618 = vmul.f32 %v2617, %v2616
    %v2619 = vmul.f32 0.5, %v2618
    %v2620 = vsub.f32 1.5, %v2619
    %v2621 = vmul.f32 %v2616, %v2620
    %vm2622 = vweird.f32 %v2615
    %vm2623 = vweird.f32 %v2616
    %vm2624 = vmor %vm2622, %vm2623
    %v2625 = vsel %vm2624, %v2616, %v2621
    %v2626 = vmul.f32 %v2609, %v2625
    %v2627 = vmul.f32 %v2626, %v282
    %v2628 = vsel %vm252, %v2603, 0.0
    %2629 = vadd.xlane.f32.xlu0 %v2628
    %v2630 = vpop.xlane.xlu0 %2629
    %v2631 = vmul.f32 %v2630, %v262
    %v2632 = vsub.f32 %v2603, %v2631
    %v2633 = vmul.f32 %v2632, %v2632
    %v2634 = vsel %vm252, %v2633, 0.0
    %2635 = vadd.xlane.f32.xlu0 %v2634
    %v2636 = vpop.xlane.xlu0 %2635
    %v2637 = vmul.f32 %v2636, %v262
    %v2638 = vadd.f32 %v2637, 1e-05
    %v2639 = vrsqrt.pop %v2638
    %v2640 = vmul.f32 %v2639, %v2638
    %v2641 = vmul.f32 %v2640, %v2639
    %v2642 = vmul.f32 0.5, %v2641
    %v2643 = vsub.f32 1.5, %v2642
    %v2644 = vmul.f32 %v2639, %v2643
    %vm2645 = vweird.f32 %v2638
    %vm2646 = vweird.f32 %v2639
    %vm2647 = vmor %vm2645, %vm2646
    %v2648 = vsel %vm2647, %v2639, %v2644
    %v2649 = vmul.f32 %v2632, %v2648
    %v2650 = vmul.f32 %v2649, %v306
    %v2651 = vadd.f32 %v2627, %v2650
    %v2652 = vadd.f32 %v2651, %v309
    %v2653 = vxor.u32 %v2652, 2147483648
    %v2654 = vmul.f32 %v2653, 1.442695
    %v2655 = vpow.pop %v2654
    %v2656 = vadd.f32 %v2655, 1.0
    %v2657 = vrcp.pop %v2656
    %v2658 = vmul.f32 %v2656, %v2657
    %v2659 = vsub.f32 1.0, %v2658
    %v2660 = vmul.f32 %v2657, %v2659
    %v2661 = vadd.f32 %v2657, %v2660
    %vm2662 = vweird.f32 %v2656
    %vm2663 = vweird.f32 %v2657
    %vm2664 = vmor %vm2662, %vm2663
    %v2665 = vsel %vm2664, %v2657, %v2661
    %v2666 = vand.u32 2147483647, %v2656
    %vm2667 = vcmp.eq.f32.partialorder %v2666, 8.507059e+37
    %v2668 = vand.u32 %v2656, 2147483648
    %v2669 = vor.u32 1.1754944e-38, %v2668
    %v2670 = vsel %vm2667, %v2669, %v2665
    %v2671 = vmul.f32 1.0, %v2670
    %v2672 = vtanh.pop %v2652
    %v2673 = vmul.f32 %v2671, %v2354
    %2675 = vrot.lane.b32.xlu0 %v2672, 32
    %v2676 = vpop.permute.xlu0 %2675
    %v2678 = vmul.f32 %v2671, %v2676
    %2680 = vrot.lane.b32.xlu0 %v2678, 32
    %v2681 = vpop.permute.xlu0 %2680
    %v2683 = vadd.f32 %v2673, %v2681
    %2685 = vrot.lane.b32.xlu0 %v2683, 96
    %v2686 = vpop.permute.xlu0 %2685
    %v2688 = vsel %vm350, %v2686, 0.0
    %2689 = vadd.xlane.f32.xlu0 %v2688
    %v2690 = vpop.xlane.xlu0 %2689
    %v2691 = vmul.f32 %v2690, %v360
    %v2692 = vsub.f32 %v2683, %v2691
    %v2693 = vmul.f32 %v2692, %v2692
    %2695 = vrot.lane.b32.xlu0 %v2693, 96
    %v2696 = vpop.permute.xlu0 %2695
    %v2698 = vsel %vm350, %v2696, 0.0
    %2699 = vadd.xlane.f32.xlu0 %v2698
    %v2700 = vpop.xlane.xlu0 %2699
    %v2701 = vmul.f32 %v2700, %v360
    %v2702 = vadd.f32 %v2701, 1e-05
    %v2703 = vrsqrt.pop %v2702
    %v2704 = vmul.f32 %v2703, %v2702
    %v2705 = vmul.f32 %v2704, %v2703
    %v2706 = vmul.f32 0.5, %v2705
    %v2707 = vsub.f32 1.5, %v2706
    %v2708 = vmul.f32 %v2703, %v2707
    %vm2709 = vweird.f32 %v2702
    %vm2710 = vweird.f32 %v2703
    %vm2711 = vmor %vm2709, %vm2710
    %v2712 = vsel %vm2711, %v2703, %v2708
    %v2713 = vmul.f32 %v2692, %v2712
    %v2714 = vmul.f32 %v2713, %v387
    %v2715 = vadd.f32 %v2714, %v393
    %v2716 = vtanh.pop %v2715
    %2718 = vrot.lane.b32.xlu0 %v2716, 32
    %v2719 = vpop.permute.xlu0 %2718
    %v2721 = vmul.f32 %v2671, %v2719
    %2723 = vrot.lane.b32.xlu0 %v2721, 64
    %v2724 = vpop.permute.xlu0 %2723
    %v2725 = vsel %vm228, %v2724, 0
    %2727 = vmatpush.msra.mxu0 0.0
    %2728 = vmatpush.msra.mxu0 0.0
    %2729 = vmatpush.msra.mxu0 0.0
    %2730 = vmatpush.msra.mxu0 0.0
    %2731 = vmatpush.msra.mxu0 0.0
    %2732 = vmatpush.msra.mxu0 0.0
    %2733 = vmatpush.msra.mxu0 0.0
    %2734 = vmatpush.msra.mxu0 0.0
    %2735 = vmatpush.msra.mxu0 0.0
    %2736 = vmatpush.msra.mxu0 0.0
    %2737 = vmatpush.msra.mxu0 0.0
    %2738 = vmatpush.msra.mxu0 0.0
    %2739 = vmatpush.msra.mxu0 %v168
    %2740 = vmatpush.msra.mxu0 %v167
    %2741 = vmatpush.msra.mxu0 %v166
    %2742 = vmatpush.msra.mxu0 %v165
    %2743 = vmatmul.f32.gmra.mxu0 %v2725
    %v2744 = vpop.f32.mrf.mxu0
    %v2745 = vadd.f32 %v402, %v2744
    %2746 = vdwg.mxu0
    %2748 = vrot.lane.b32.xlu0 %v2559, 64
    %v2749 = vpop.permute.xlu0 %2748
    %v2750 = vsel %vm228, %v2749, 0
    %2752 = vmatpush.msra.mxu0 0.0
    %2753 = vmatpush.msra.mxu0 0.0
    %2754 = vmatpush.msra.mxu0 0.0
    %2755 = vmatpush.msra.mxu0 0.0
    %2756 = vmatpush.msra.mxu0 0.0
    %2757 = vmatpush.msra.mxu0 0.0
    %2758 = vmatpush.msra.mxu0 0.0
    %2759 = vmatpush.msra.mxu0 0.0
    %2760 = vmatpush.msra.mxu0 0.0
    %2761 = vmatpush.msra.mxu0 0.0
    %2762 = vmatpush.msra.mxu0 0.0
    %2763 = vmatpush.msra.mxu0 0.0
    %2764 = vmatpush.msra.mxu0 %v176
    %2765 = vmatpush.msra.mxu0 %v175
    %2766 = vmatpush.msra.mxu0 %v174
    %2767 = vmatpush.msra.mxu0 %v173
    %2768 = vmatmul.f32.gmra.mxu0 %v2750
    %v2769 = vpop.f32.mrf.mxu0
    %v2770 = vadd.f32 %v428, %v2769
    %2771 = vdwg.mxu0
    %v2772 = vsel %vm252, %v2745, 0.0
    %2773 = vadd.xlane.f32.xlu0 %v2772
    %v2774 = vpop.xlane.xlu0 %2773
    %v2775 = vmul.f32 %v2774, %v262
    %v2776 = vsub.f32 %v2745, %v2775
    %v2777 = vmul.f32 %v2776, %v2776
    %v2778 = vsel %vm252, %v2777, 0.0
    %2779 = vadd.xlane.f32.xlu0 %v2778
    %v2780 = vpop.xlane.xlu0 %2779
    %v2781 = vmul.f32 %v2780, %v262
    %v2782 = vadd.f32 %v2781, 1e-05
    %v2783 = vrsqrt.pop %v2782
    %v2784 = vmul.f32 %v2783, %v2782
    %v2785 = vmul.f32 %v2784, %v2783
    %v2786 = vmul.f32 0.5, %v2785
    %v2787 = vsub.f32 1.5, %v2786
    %v2788 = vmul.f32 %v2783, %v2787
    %vm2789 = vweird.f32 %v2782
    %vm2790 = vweird.f32 %v2783
    %vm2791 = vmor %vm2789, %vm2790
    %v2792 = vsel %vm2791, %v2783, %v2788
    %v2793 = vmul.f32 %v2776, %v2792
    %v2794 = vmul.f32 %v2793, %v474
    %v2795 = vsel %vm252, %v2770, 0.0
    %2796 = vadd.xlane.f32.xlu0 %v2795
    %v2797 = vpop.xlane.xlu0 %2796
    %v2798 = vmul.f32 %v2797, %v262
    %v2799 = vsub.f32 %v2770, %v2798
    %v2800 = vmul.f32 %v2799, %v2799
    %v2801 = vsel %vm252, %v2800, 0.0
    %2802 = vadd.xlane.f32.xlu0 %v2801
    %v2803 = vpop.xlane.xlu0 %2802
    %v2804 = vmul.f32 %v2803, %v262
    %v2805 = vadd.f32 %v2804, 1e-05
    %v2806 = vrsqrt.pop %v2805
    %v2807 = vmul.f32 %v2806, %v2805
    %v2808 = vmul.f32 %v2807, %v2806
    %v2809 = vmul.f32 0.5, %v2808
    %v2810 = vsub.f32 1.5, %v2809
    %v2811 = vmul.f32 %v2806, %v2810
    %vm2812 = vweird.f32 %v2805
    %vm2813 = vweird.f32 %v2806
    %vm2814 = vmor %vm2812, %vm2813
    %v2815 = vsel %vm2814, %v2806, %v2811
    %v2816 = vmul.f32 %v2799, %v2815
    %v2817 = vmul.f32 %v2816, %v498
    %v2818 = vadd.f32 %v2794, %v2817
    %v2819 = vadd.f32 %v2818, %v501
    %v2820 = vxor.u32 %v2819, 2147483648
    %v2821 = vmul.f32 %v2820, 1.442695
    %v2822 = vpow.pop %v2821
    %v2823 = vadd.f32 %v2822, 1.0
    %v2824 = vrcp.pop %v2823
    %v2825 = vmul.f32 %v2823, %v2824
    %v2826 = vsub.f32 1.0, %v2825
    %v2827 = vmul.f32 %v2824, %v2826
    %v2828 = vadd.f32 %v2824, %v2827
    %vm2829 = vweird.f32 %v2823
    %vm2830 = vweird.f32 %v2824
    %vm2831 = vmor %vm2829, %vm2830
    %v2832 = vsel %vm2831, %v2824, %v2828
    %v2833 = vand.u32 2147483647, %v2823
    %vm2834 = vcmp.eq.f32.partialorder %v2833, 8.507059e+37
    %v2835 = vand.u32 %v2823, 2147483648
    %v2836 = vor.u32 1.1754944e-38, %v2835
    %v2837 = vsel %vm2834, %v2836, %v2832
    %v2838 = vmul.f32 1.0, %v2837
    %v2839 = vtanh.pop %v2819
    %v2840 = vmul.f32 %v2838, %v2521
    %2842 = vrot.lane.b32.xlu0 %v2839, 32
    %v2843 = vpop.permute.xlu0 %2842
    %v2845 = vmul.f32 %v2838, %v2843
    %2847 = vrot.lane.b32.xlu0 %v2845, 32
    %v2848 = vpop.permute.xlu0 %2847
    %v2850 = vadd.f32 %v2840, %v2848
    %2852 = vrot.lane.b32.xlu0 %v2850, 96
    %v2853 = vpop.permute.xlu0 %2852
    %v2855 = vsel %vm350, %v2853, 0.0
    %2856 = vadd.xlane.f32.xlu0 %v2855
    %v2857 = vpop.xlane.xlu0 %2856
    %v2858 = vmul.f32 %v2857, %v360
    %v2859 = vsub.f32 %v2850, %v2858
    %v2860 = vmul.f32 %v2859, %v2859
    %2862 = vrot.lane.b32.xlu0 %v2860, 96
    %v2863 = vpop.permute.xlu0 %2862
    %v2865 = vsel %vm350, %v2863, 0.0
    %2866 = vadd.xlane.f32.xlu0 %v2865
    %v2867 = vpop.xlane.xlu0 %2866
    %v2868 = vmul.f32 %v2867, %v360
    %v2869 = vadd.f32 %v2868, 1e-05
    %v2870 = vrsqrt.pop %v2869
    %v2871 = vmul.f32 %v2870, %v2869
    %v2872 = vmul.f32 %v2871, %v2870
    %v2873 = vmul.f32 0.5, %v2872
    %v2874 = vsub.f32 1.5, %v2873
    %v2875 = vmul.f32 %v2870, %v2874
    %vm2876 = vweird.f32 %v2869
    %vm2877 = vweird.f32 %v2870
    %vm2878 = vmor %vm2876, %vm2877
    %v2879 = vsel %vm2878, %v2870, %v2875
    %v2880 = vmul.f32 %v2859, %v2879
    %v2881 = vmul.f32 %v2880, %v571
    %v2882 = vadd.f32 %v2881, %v577
    %v2883 = vtanh.pop %v2882
    %2885 = vrot.lane.b32.xlu0 %v2883, 32
    %v2886 = vpop.permute.xlu0 %2885
    %v2888 = vmul.f32 %v2838, %v2886
    %2890 = vst.msk [vmem:[%s9] sm:$0x3] %vm350, %v2724
    %2891 = vst.msk [vmem:[#allocation16] sm:$0x3] %vm350, %v2686
    %2893 = vrot.lane.b32.xlu0 %v2888, 64
    %v2894 = vpop.permute.xlu0 %2893
    %2896 = vst.msk [vmem:[%s196] sm:$0x3] %vm350, %v2894
    %2897 = vst.msk [vmem:[%s199] sm:$0x3] %vm350, %v2853
    // Predicated region
    $region74: #{layer_norm_lstm_forward.1} parent=1 // pred_check
      _
    $region75: #{layer_norm_lstm_forward.1} parent=1 // pred_check_branch
      %2899 = sbr.rel (0) target = $region77
    $region76: #{layer_norm_lstm_forward.1} parent=1 // pred_region
      _
    $region77: #{layer_norm_lstm_forward.1} parent=1 // pred_fallthru
      _
    // Predicated region
    $region78: #{layer_norm_lstm_forward.1} parent=1 // pred_check
      _
    $region79: #{layer_norm_lstm_forward.1} parent=1 // pred_check_branch
      %2901 = sbr.rel (0) target = $region81
    $region80: #{layer_norm_lstm_forward.1} parent=1 // pred_region
      %2903 = vsyncadd [#allocation4], 0
      %s2904 = sshll.u32 [#allocation16], 4
      %s2905 = int_to_ptr.vmem [resolvable:$true] %s2904
      %s2906 = sshll.u32 %s10, 4
      %s2907 = int_to_ptr.hbm [resolvable:$true] %s2906
      %2912 = dma.vmem_to_hbm [thread:$0]  %s2905, 64, %s2907, [#allocation4], 32, 32, 2
    $region81: #{layer_norm_lstm_forward.1} parent=1 // pred_fallthru
      _
    // Predicated region
    $region82: #{layer_norm_lstm_forward.1} parent=1 // pred_check
      _
    $region83: #{layer_norm_lstm_forward.1} parent=1 // pred_check_branch
      %2914 = sbr.rel (0) target = $region85
    $region84: #{layer_norm_lstm_forward.1} parent=1 // pred_region
      _
    $region85: #{layer_norm_lstm_forward.1} parent=1 // pred_fallthru
      _
    // Predicated region
    $region86: #{layer_norm_lstm_forward.1} parent=1 // pred_check
      _
    $region87: #{layer_norm_lstm_forward.1} parent=1 // pred_check_branch
      %2916 = sbr.rel (0) target = $region89
    $region88: #{layer_norm_lstm_forward.1} parent=1 // pred_region
      %2918 = dma.done [#allocation4], 64
    $region89: #{layer_norm_lstm_forward.1} parent=1 // pred_fallthru
      _
    %2919 = vsyncpa [#allocation3], 1
    %2920 = vsyncpa [#allocation6], 1
    %2921 = vsyncpa [#allocation9], 1
    %2922 = vsyncpa [#allocation12], 1
    %2923 = vsyncpa [#allocation15], 1
    %2924 = vsyncpa [#allocation4], 1

</llo_original>
